<compile_context>
chip_gen: v6e
topology: v6e:2x2x1
jax: 0.10.0
libtpu: 0.0.40
codegen_flags: <defaults>
</compile_context>

<pallas_src>
import functools

import jax
import jax.numpy as jnp
from jax.experimental import pallas as pl
from jax.experimental.pallas import tpu as pltpu


def _conv_prelu_kernel(x_ref, w_ref, b_ref, alpha_ref, o_ref, *, wp_pad, tm, cm):
    """3x3 conv (9 shifted matmuls) + bias + scalar PReLU for one row tile.

    x_ref:     (1, 3, R, CIN) bf16   kj-shifted replicas of the flattened,
                                     zero-padded NHWC image (R = Hp*Wp_pad)
    w_ref:     (9, CIN, COUT) bf16   weight for tap t = ki*3 + kj
    b_ref:     (1, COUT)      f32    bias
    alpha_ref: (1, 1)         f32    PReLU slope (SMEM scalar)
    o_ref:     (1, tm, COUT)  bf16   tm output rows (junk wp-columns included)
    """
    j = pl.program_id(1)
    row0 = j * tm                        # first output row of this tile (mult of 8)
    alpha = alpha_ref[0, 0]
    bias = b_ref[...]                    # (1, COUT) f32, broadcasts over rows

    # Register-resident accumulation per cm-row chunk; single store per chunk.
    for c in range(tm // cm):
        acc = None
        for ki in range(3):
            for kj in range(3):
                start = pl.multiple_of(row0 + c * cm + ki * wp_pad, 8)
                patch = x_ref[0, kj, pl.ds(start, cm), :]          # (cm, CIN) bf16
                d = jnp.dot(patch, w_ref[ki * 3 + kj],
                            preferred_element_type=jnp.float32)
                acc = d if acc is None else acc + d
        acc = acc + bias                                           # f32 bias
        out = jnp.where(acc > 0, acc, alpha * acc)                 # f32 PReLU
        o_ref[0, pl.ds(c * cm, cm), :] = out.astype(o_ref.dtype)   # one bf16 store


def _conv_prelu_pallas(xs, w_taps, b_row, alpha, *, wp_pad, m, tm, cm):
    n, _, r_rep, cin = xs.shape
    _, _, cout = w_taps.shape
    num_tiles = m // tm
    kernel = functools.partial(_conv_prelu_kernel, wp_pad=wp_pad, tm=tm, cm=cm)
    cost = pl.CostEstimate(
        flops=2 * n * m * cin * cout * 9,
        transcendentals=0,
        bytes_accessed=(xs.size * 2 + w_taps.size * 2 + b_row.size * 4
                        + n * m * cout * 2),
    )
    return pl.pallas_call(
        kernel,
        out_shape=jax.ShapeDtypeStruct((n, m, cout), jnp.bfloat16),
        grid_spec=pltpu.PrefetchScalarGridSpec(
            num_scalar_prefetch=0,
            grid=(n, num_tiles),
            in_specs=[
                pl.BlockSpec((1, 3, r_rep, cin), lambda i, j: (i, 0, 0, 0)),
                pl.BlockSpec((9, cin, cout), lambda i, j: (0, 0, 0)),   # constant
                pl.BlockSpec((1, cout), lambda i, j: (0, 0)),           # constant
                pl.BlockSpec(memory_space=pltpu.SMEM),                  # alpha
            ],
            out_specs=pl.BlockSpec((1, tm, cout), lambda i, j: (i, j, 0)),
        ),
        compiler_params=pltpu.CompilerParams(
            dimension_semantics=("parallel", "parallel"),
            vmem_limit_bytes=32 * 1024 * 1024),
        cost_estimate=cost,
    )(xs, w_taps, b_row, alpha)


def prepare_params(weight, bias, prelu_alpha):
    """One-time parameter prep (hoisted out of the jitted hot path)."""
    cout, cin, kh, kw = weight.shape
    w_taps = jnp.transpose(weight, (2, 3, 1, 0)).reshape(kh * kw, cin, cout)
    w_taps = w_taps.astype(jnp.bfloat16)
    b_row = bias.reshape(1, cout).astype(jnp.float32)
    alpha = jnp.reshape(prelu_alpha, (1, 1)).astype(jnp.float32)
    return w_taps, b_row, alpha


@jax.jit
def upsample_forward(x_nchw, w_taps, b_row, alpha):
    """x_nchw: (N, 64, H, W) f32 -> (N, 64, 2H, 2W) f32 (PyTorch Upsample)."""
    n, cin, h, w = x_nchw.shape
    cout = w_taps.shape[2]              # 256
    r = 2
    c_ps = cout // (r * r)              # 64
    hp = h + 2
    wp_pad = ((w + 2 + 7) // 8) * 8     # padded row width, multiple of 8 (18 -> 24)
    m = h * wp_pad                      # output rows per image (junk cols included)

    num_tiles = 2                       # two row tiles -> both v7x TCs even at N=1
    assert m % num_tiles == 0
    tm = m // num_tiles
    cm = 64 if tm % 64 == 0 else tm     # register-accumulated chunk size
    assert tm % 8 == 0 and tm % cm == 0

    # NCHW -> NHWC, zero-pad (conv padding=1 + right pad to wp_pad), flatten the
    # spatial dims row-major, then build 3 kj-shifted replicas so every tap
    # window read in the kernel starts on an 8-row (sublane) boundary.
    x = jnp.transpose(x_nchw, (0, 2, 3, 1))
    xp = jnp.pad(x, ((0, 0), (1, 1), (1, wp_pad - w - 1), (0, 0)))
    xf = xp.reshape(n, hp * wp_pad, cin).astype(jnp.bfloat16)
    xf = jnp.pad(xf, ((0, 0), (0, 8), (0, 0)))          # room for kj = 1, 2 shifts
    xs = jnp.stack([xf[:, kj:kj + hp * wp_pad, :] for kj in range(3)], axis=1)

    # Hot path: conv + bias + PReLU fused; f32 accumulation, bf16 output.
    y = _conv_prelu_pallas(xs, w_taps, b_row, alpha,
                           wp_pad=wp_pad, m=m, tm=tm, cm=cm)   # (N, m, COUT) bf16

    # Drop horizontal junk columns, PixelShuffle(2) (done on bf16), emit NCHW f32.
    # PixelShuffle: out[n, c, 2h+i, 2w+j] = conv[n, c*4 + i*2 + j, h, w]; the
    # *scalar* PReLU (nn.PReLU() default, 1 parameter) commutes with this
    # permutation, so applying it pre-shuffle inside the kernel is exact.
    y = y.reshape(n, h, wp_pad, c_ps, r, r)[:, :, :w]    # (N, H, W, c, i, j)
    y = jnp.transpose(y, (0, 3, 1, 4, 2, 5))             # (N, c, H, i, W, j)
    return y.reshape(n, c_ps, h * r, w * r).astype(jnp.float32)


def _reference_forward(x, weight, bias, prelu_alpha):
    """Pure-JAX f32 reference (conv -> pixel shuffle -> PReLU)."""
    y = jax.lax.conv_general_dilated(
        x, weight, window_strides=(1, 1), padding=((1, 1), (1, 1)),
        dimension_numbers=("NCHW", "OIHW", "NCHW"))
    y = y + bias.reshape(1, -1, 1, 1)
    n, c, h, w = y.shape
    r = 2
    y = y.reshape(n, c // (r * r), r, r, h, w)
    y = jnp.transpose(y, (0, 1, 4, 2, 5, 3))
    y = y.reshape(n, c // (r * r), h * r, w * r)
    return jnp.where(y > 0, y, prelu_alpha * y)


if __name__ == "__main__":
    key = jax.random.PRNGKey(0)
    k_x, k_w, k_b = jax.random.split(key, 3)

    # Module-implied shapes: Conv2d(64, 256, 3, 1, 1) -> CIN fixed at 64.
    n, cin, h, w = 2, 64, 16, 16
    cout = 256

    x = jax.random.normal(k_x, (n, cin, h, w), dtype=jnp.float32)
    weight = jax.random.normal(k_w, (cout, cin, 3, 3), dtype=jnp.float32) * 0.05
    bias = jax.random.normal(k_b, (cout,), dtype=jnp.float32) * 0.05
    prelu_alpha = jnp.array(0.25, dtype=jnp.float32)   # nn.PReLU() default init

    w_taps, b_row, alpha = prepare_params(weight, bias, prelu_alpha)
    out = jax.block_until_ready(upsample_forward(x, w_taps, b_row, alpha))

    assert out.shape == (n, cin, 2 * h, 2 * w), out.shape
    assert out.dtype == jnp.float32

    # bf16 operands + bf16 output + f32 accumulation -> small deviation vs f32.
    ref = jax.block_until_ready(_reference_forward(x, weight, bias, prelu_alpha))
    max_err = float(jnp.max(jnp.abs(out - ref)))
    assert max_err < 0.2, f"max abs error {max_err}"

    print("KERNEL_OK")
</pallas_src>

<mosaic_0001>
module attributes {stable_mosaic.version = 11 : i64} {
  func.func @_conv_prelu_kernel(%arg0: i32, %arg1: i32, %arg2: memref<1x3x432x64xbf16, #tpu.memory_space<vmem>>, %arg3: memref<9x64x256xbf16, #tpu.memory_space<vmem>>, %arg4: memref<1x256xf32, #tpu.memory_space<vmem>>, %arg5: memref<1x1xf32, #tpu.memory_space<smem>>, %arg6: memref<1x192x256xbf16, #tpu.memory_space<vmem>>) attributes {dimension_semantics = [#tpu.dimension_semantics<parallel>, #tpu.dimension_semantics<parallel>], iteration_bounds = array<i64: 2, 2>, scalar_prefetch = 0 : i64, scratch_operands = 0 : i64, tpu.core_type = #tpu.core_type<tc>, window_params = [{transform_indices = @transform_0, window_bounds = array<i64: 1, 3, 432, 64>}, {pipeline_mode = #tpu.pipeline_mode<synchronous>, transform_indices = @transform_1, window_bounds = array<i64: 9, 64, 256>}, {pipeline_mode = #tpu.pipeline_mode<synchronous>, transform_indices = @transform_2, window_bounds = array<i64: 1, 256>}, {transform_indices = @transform_3, window_bounds = array<i64: 1, 1>}, {transform_indices = @transform_4, window_bounds = array<i64: 1, 192, 256>}]} {
    %c192_i32 = arith.constant 192 : i32
    %0 = arith.muli %arg1, %c192_i32 : i32
    %c0 = arith.constant 0 : index
    %c0_0 = arith.constant 0 : index
    %1 = memref.load %arg5[%c0, %c0_0] : memref<1x1xf32, #tpu.memory_space<smem>>
    %c0_1 = arith.constant 0 : index
    %c0_2 = arith.constant 0 : index
    %2 = vector.load %arg4[%c0_1, %c0_2] : memref<1x256xf32, #tpu.memory_space<vmem>>, vector<1x256xf32>
    %c0_i32 = arith.constant 0 : i32
    %3 = arith.addi %0, %c0_i32 : i32
    %c0_i32_3 = arith.constant 0 : i32
    %4 = arith.addi %3, %c0_i32_3 : i32
    %5 = tpu.assume_multiple %4, 8 : i32
    %c0_4 = arith.constant 0 : index
    %c0_5 = arith.constant 0 : index
    %6 = arith.index_cast %5 : i32 to index
    %c0_6 = arith.constant 0 : index
    %7 = vector.load %arg2[%c0_4, %c0_5, %6, %c0_6] : memref<1x3x432x64xbf16, #tpu.memory_space<vmem>>, vector<1x1x64x64xbf16>
    %8 = vector.shape_cast %7 : vector<1x1x64x64xbf16> to vector<64x64xbf16>
    %c0_7 = arith.constant 0 : index
    %c0_8 = arith.constant 0 : index
    %c0_9 = arith.constant 0 : index
    %9 = vector.load %arg3[%c0_7, %c0_8, %c0_9] : memref<9x64x256xbf16, #tpu.memory_space<vmem>>, vector<1x64x256xbf16>
    %10 = vector.shape_cast %9 : vector<1x64x256xbf16> to vector<64x256xbf16>
    %cst = arith.constant dense<0.000000e+00> : vector<64x256xf32>
    %11 = tpu.matmul %8, %10, %cst {dimension_numbers = #tpu.dot_dimension_numbers<[1], [0], [0], [1], [0, 0, 1, 1], [], []>} : vector<64x64xbf16>, vector<64x256xbf16>, vector<64x256xf32> -> vector<64x256xf32>
    %c0_i32_10 = arith.constant 0 : i32
    %12 = arith.addi %0, %c0_i32_10 : i32
    %c0_i32_11 = arith.constant 0 : i32
    %13 = arith.addi %12, %c0_i32_11 : i32
    %14 = tpu.assume_multiple %13, 8 : i32
    %c0_12 = arith.constant 0 : index
    %c1 = arith.constant 1 : index
    %15 = arith.index_cast %14 : i32 to index
    %c0_13 = arith.constant 0 : index
    %16 = vector.load %arg2[%c0_12, %c1, %15, %c0_13] : memref<1x3x432x64xbf16, #tpu.memory_space<vmem>>, vector<1x1x64x64xbf16>
    %17 = vector.shape_cast %16 : vector<1x1x64x64xbf16> to vector<64x64xbf16>
    %c1_14 = arith.constant 1 : index
    %c0_15 = arith.constant 0 : index
    %c0_16 = arith.constant 0 : index
    %18 = vector.load %arg3[%c1_14, %c0_15, %c0_16] : memref<9x64x256xbf16, #tpu.memory_space<vmem>>, vector<1x64x256xbf16>
    %19 = vector.shape_cast %18 : vector<1x64x256xbf16> to vector<64x256xbf16>
    %cst_17 = arith.constant dense<0.000000e+00> : vector<64x256xf32>
    %20 = tpu.matmul %17, %19, %cst_17 {dimension_numbers = #tpu.dot_dimension_numbers<[1], [0], [0], [1], [0, 0, 1, 1], [], []>} : vector<64x64xbf16>, vector<64x256xbf16>, vector<64x256xf32> -> vector<64x256xf32>
    %21 = arith.addf %11, %20 : vector<64x256xf32>
    %c0_i32_18 = arith.constant 0 : i32
    %22 = arith.addi %0, %c0_i32_18 : i32
    %c0_i32_19 = arith.constant 0 : i32
    %23 = arith.addi %22, %c0_i32_19 : i32
    %24 = tpu.assume_multiple %23, 8 : i32
    %c0_20 = arith.constant 0 : index
    %c2 = arith.constant 2 : index
    %25 = arith.index_cast %24 : i32 to index
    %c0_21 = arith.constant 0 : index
    %26 = vector.load %arg2[%c0_20, %c2, %25, %c0_21] : memref<1x3x432x64xbf16, #tpu.memory_space<vmem>>, vector<1x1x64x64xbf16>
    %27 = vector.shape_cast %26 : vector<1x1x64x64xbf16> to vector<64x64xbf16>
    %c2_22 = arith.constant 2 : index
    %c0_23 = arith.constant 0 : index
    %c0_24 = arith.constant 0 : index
    %28 = vector.load %arg3[%c2_22, %c0_23, %c0_24] : memref<9x64x256xbf16, #tpu.memory_space<vmem>>, vector<1x64x256xbf16>
    %29 = vector.shape_cast %28 : vector<1x64x256xbf16> to vector<64x256xbf16>
    %cst_25 = arith.constant dense<0.000000e+00> : vector<64x256xf32>
    %30 = tpu.matmul %27, %29, %cst_25 {dimension_numbers = #tpu.dot_dimension_numbers<[1], [0], [0], [1], [0, 0, 1, 1], [], []>} : vector<64x64xbf16>, vector<64x256xbf16>, vector<64x256xf32> -> vector<64x256xf32>
    %31 = arith.addf %21, %30 : vector<64x256xf32>
    %c0_i32_26 = arith.constant 0 : i32
    %32 = arith.addi %0, %c0_i32_26 : i32
    %c24_i32 = arith.constant 24 : i32
    %33 = arith.addi %32, %c24_i32 : i32
    %34 = tpu.assume_multiple %33, 8 : i32
    %c0_27 = arith.constant 0 : index
    %c0_28 = arith.constant 0 : index
    %35 = arith.index_cast %34 : i32 to index
    %c0_29 = arith.constant 0 : index
    %36 = vector.load %arg2[%c0_27, %c0_28, %35, %c0_29] : memref<1x3x432x64xbf16, #tpu.memory_space<vmem>>, vector<1x1x64x64xbf16>
    %37 = vector.shape_cast %36 : vector<1x1x64x64xbf16> to vector<64x64xbf16>
    %c3 = arith.constant 3 : index
    %c0_30 = arith.constant 0 : index
    %c0_31 = arith.constant 0 : index
    %38 = vector.load %arg3[%c3, %c0_30, %c0_31] : memref<9x64x256xbf16, #tpu.memory_space<vmem>>, vector<1x64x256xbf16>
    %39 = vector.shape_cast %38 : vector<1x64x256xbf16> to vector<64x256xbf16>
    %cst_32 = arith.constant dense<0.000000e+00> : vector<64x256xf32>
    %40 = tpu.matmul %37, %39, %cst_32 {dimension_numbers = #tpu.dot_dimension_numbers<[1], [0], [0], [1], [0, 0, 1, 1], [], []>} : vector<64x64xbf16>, vector<64x256xbf16>, vector<64x256xf32> -> vector<64x256xf32>
    %41 = arith.addf %31, %40 : vector<64x256xf32>
    %c0_i32_33 = arith.constant 0 : i32
    %42 = arith.addi %0, %c0_i32_33 : i32
    %c24_i32_34 = arith.constant 24 : i32
    %43 = arith.addi %42, %c24_i32_34 : i32
    %44 = tpu.assume_multiple %43, 8 : i32
    %c0_35 = arith.constant 0 : index
    %c1_36 = arith.constant 1 : index
    %45 = arith.index_cast %44 : i32 to index
    %c0_37 = arith.constant 0 : index
    %46 = vector.load %arg2[%c0_35, %c1_36, %45, %c0_37] : memref<1x3x432x64xbf16, #tpu.memory_space<vmem>>, vector<1x1x64x64xbf16>
    %47 = vector.shape_cast %46 : vector<1x1x64x64xbf16> to vector<64x64xbf16>
    %c4 = arith.constant 4 : index
    %c0_38 = arith.constant 0 : index
    %c0_39 = arith.constant 0 : index
    %48 = vector.load %arg3[%c4, %c0_38, %c0_39] : memref<9x64x256xbf16, #tpu.memory_space<vmem>>, vector<1x64x256xbf16>
    %49 = vector.shape_cast %48 : vector<1x64x256xbf16> to vector<64x256xbf16>
    %cst_40 = arith.constant dense<0.000000e+00> : vector<64x256xf32>
    %50 = tpu.matmul %47, %49, %cst_40 {dimension_numbers = #tpu.dot_dimension_numbers<[1], [0], [0], [1], [0, 0, 1, 1], [], []>} : vector<64x64xbf16>, vector<64x256xbf16>, vector<64x256xf32> -> vector<64x256xf32>
    %51 = arith.addf %41, %50 : vector<64x256xf32>
    %c0_i32_41 = arith.constant 0 : i32
    %52 = arith.addi %0, %c0_i32_41 : i32
    %c24_i32_42 = arith.constant 24 : i32
    %53 = arith.addi %52, %c24_i32_42 : i32
    %54 = tpu.assume_multiple %53, 8 : i32
    %c0_43 = arith.constant 0 : index
    %c2_44 = arith.constant 2 : index
    %55 = arith.index_cast %54 : i32 to index
    %c0_45 = arith.constant 0 : index
    %56 = vector.load %arg2[%c0_43, %c2_44, %55, %c0_45] : memref<1x3x432x64xbf16, #tpu.memory_space<vmem>>, vector<1x1x64x64xbf16>
    %57 = vector.shape_cast %56 : vector<1x1x64x64xbf16> to vector<64x64xbf16>
    %c5 = arith.constant 5 : index
    %c0_46 = arith.constant 0 : index
    %c0_47 = arith.constant 0 : index
    %58 = vector.load %arg3[%c5, %c0_46, %c0_47] : memref<9x64x256xbf16, #tpu.memory_space<vmem>>, vector<1x64x256xbf16>
    %59 = vector.shape_cast %58 : vector<1x64x256xbf16> to vector<64x256xbf16>
    %cst_48 = arith.constant dense<0.000000e+00> : vector<64x256xf32>
    %60 = tpu.matmul %57, %59, %cst_48 {dimension_numbers = #tpu.dot_dimension_numbers<[1], [0], [0], [1], [0, 0, 1, 1], [], []>} : vector<64x64xbf16>, vector<64x256xbf16>, vector<64x256xf32> -> vector<64x256xf32>
    %61 = arith.addf %51, %60 : vector<64x256xf32>
    %c0_i32_49 = arith.constant 0 : i32
    %62 = arith.addi %0, %c0_i32_49 : i32
    %c48_i32 = arith.constant 48 : i32
    %63 = arith.addi %62, %c48_i32 : i32
    %64 = tpu.assume_multiple %63, 8 : i32
    %c0_50 = arith.constant 0 : index
    %c0_51 = arith.constant 0 : index
    %65 = arith.index_cast %64 : i32 to index
    %c0_52 = arith.constant 0 : index
    %66 = vector.load %arg2[%c0_50, %c0_51, %65, %c0_52] : memref<1x3x432x64xbf16, #tpu.memory_space<vmem>>, vector<1x1x64x64xbf16>
    %67 = vector.shape_cast %66 : vector<1x1x64x64xbf16> to vector<64x64xbf16>
    %c6 = arith.constant 6 : index
    %c0_53 = arith.constant 0 : index
    %c0_54 = arith.constant 0 : index
    %68 = vector.load %arg3[%c6, %c0_53, %c0_54] : memref<9x64x256xbf16, #tpu.memory_space<vmem>>, vector<1x64x256xbf16>
    %69 = vector.shape_cast %68 : vector<1x64x256xbf16> to vector<64x256xbf16>
    %cst_55 = arith.constant dense<0.000000e+00> : vector<64x256xf32>
    %70 = tpu.matmul %67, %69, %cst_55 {dimension_numbers = #tpu.dot_dimension_numbers<[1], [0], [0], [1], [0, 0, 1, 1], [], []>} : vector<64x64xbf16>, vector<64x256xbf16>, vector<64x256xf32> -> vector<64x256xf32>
    %71 = arith.addf %61, %70 : vector<64x256xf32>
    %c0_i32_56 = arith.constant 0 : i32
    %72 = arith.addi %0, %c0_i32_56 : i32
    %c48_i32_57 = arith.constant 48 : i32
    %73 = arith.addi %72, %c48_i32_57 : i32
    %74 = tpu.assume_multiple %73, 8 : i32
    %c0_58 = arith.constant 0 : index
    %c1_59 = arith.constant 1 : index
    %75 = arith.index_cast %74 : i32 to index
    %c0_60 = arith.constant 0 : index
    %76 = vector.load %arg2[%c0_58, %c1_59, %75, %c0_60] : memref<1x3x432x64xbf16, #tpu.memory_space<vmem>>, vector<1x1x64x64xbf16>
    %77 = vector.shape_cast %76 : vector<1x1x64x64xbf16> to vector<64x64xbf16>
    %c7 = arith.constant 7 : index
    %c0_61 = arith.constant 0 : index
    %c0_62 = arith.constant 0 : index
    %78 = vector.load %arg3[%c7, %c0_61, %c0_62] : memref<9x64x256xbf16, #tpu.memory_space<vmem>>, vector<1x64x256xbf16>
    %79 = vector.shape_cast %78 : vector<1x64x256xbf16> to vector<64x256xbf16>
    %cst_63 = arith.constant dense<0.000000e+00> : vector<64x256xf32>
    %80 = tpu.matmul %77, %79, %cst_63 {dimension_numbers = #tpu.dot_dimension_numbers<[1], [0], [0], [1], [0, 0, 1, 1], [], []>} : vector<64x64xbf16>, vector<64x256xbf16>, vector<64x256xf32> -> vector<64x256xf32>
    %81 = arith.addf %71, %80 : vector<64x256xf32>
    %c0_i32_64 = arith.constant 0 : i32
    %82 = arith.addi %0, %c0_i32_64 : i32
    %c48_i32_65 = arith.constant 48 : i32
    %83 = arith.addi %82, %c48_i32_65 : i32
    %84 = tpu.assume_multiple %83, 8 : i32
    %c0_66 = arith.constant 0 : index
    %c2_67 = arith.constant 2 : index
    %85 = arith.index_cast %84 : i32 to index
    %c0_68 = arith.constant 0 : index
    %86 = vector.load %arg2[%c0_66, %c2_67, %85, %c0_68] : memref<1x3x432x64xbf16, #tpu.memory_space<vmem>>, vector<1x1x64x64xbf16>
    %87 = vector.shape_cast %86 : vector<1x1x64x64xbf16> to vector<64x64xbf16>
    %c8 = arith.constant 8 : index
    %c0_69 = arith.constant 0 : index
    %c0_70 = arith.constant 0 : index
    %88 = vector.load %arg3[%c8, %c0_69, %c0_70] : memref<9x64x256xbf16, #tpu.memory_space<vmem>>, vector<1x64x256xbf16>
    %89 = vector.shape_cast %88 : vector<1x64x256xbf16> to vector<64x256xbf16>
    %cst_71 = arith.constant dense<0.000000e+00> : vector<64x256xf32>
    %90 = tpu.matmul %87, %89, %cst_71 {dimension_numbers = #tpu.dot_dimension_numbers<[1], [0], [0], [1], [0, 0, 1, 1], [], []>} : vector<64x64xbf16>, vector<64x256xbf16>, vector<64x256xf32> -> vector<64x256xf32>
    %91 = arith.addf %81, %90 : vector<64x256xf32>
    %92 = vector.broadcast %2 : vector<1x256xf32> to vector<64x256xf32>
    %93 = arith.addf %91, %92 : vector<64x256xf32>
    %cst_72 = arith.constant 0.000000e+00 : f32
    %94 = vector.broadcast %cst_72 : f32 to vector<64x256xf32>
    %95 = arith.cmpf ogt, %93, %94 : vector<64x256xf32>
    %96 = vector.broadcast %1 : f32 to vector<64x256xf32>
    %97 = arith.mulf %96, %93 : vector<64x256xf32>
    %98 = arith.select %95, %93, %97 : vector<64x256xi1>, vector<64x256xf32>
    %99 = arith.truncf %98 : vector<64x256xf32> to vector<64x256xbf16>
    %c0_73 = arith.constant 0 : index
    %c0_74 = arith.constant 0 : index
    %c0_75 = arith.constant 0 : index
    %100 = vector.load %arg6[%c0_73, %c0_74, %c0_75] : memref<1x192x256xbf16, #tpu.memory_space<vmem>>, vector<1x64x256xbf16>
    %101 = vector.shape_cast %100 : vector<1x64x256xbf16> to vector<64x256xbf16>
    %102 = vector.shape_cast %99 : vector<64x256xbf16> to vector<1x64x256xbf16>
    tpu.vector_store %arg6[%c0_73, %c0_74, %c0_75], %102 {strides = array<i32>} : memref<1x192x256xbf16, #tpu.memory_space<vmem>>, vector<1x64x256xbf16>,
    %c64_i32 = arith.constant 64 : i32
    %103 = arith.addi %0, %c64_i32 : i32
    %c0_i32_76 = arith.constant 0 : i32
    %104 = arith.addi %103, %c0_i32_76 : i32
    %105 = tpu.assume_multiple %104, 8 : i32
    %c0_77 = arith.constant 0 : index
    %c0_78 = arith.constant 0 : index
    %106 = arith.index_cast %105 : i32 to index
    %c0_79 = arith.constant 0 : index
    %107 = vector.load %arg2[%c0_77, %c0_78, %106, %c0_79] : memref<1x3x432x64xbf16, #tpu.memory_space<vmem>>, vector<1x1x64x64xbf16>
    %108 = vector.shape_cast %107 : vector<1x1x64x64xbf16> to vector<64x64xbf16>
    %c0_80 = arith.constant 0 : index
    %c0_81 = arith.constant 0 : index
    %c0_82 = arith.constant 0 : index
    %109 = vector.load %arg3[%c0_80, %c0_81, %c0_82] : memref<9x64x256xbf16, #tpu.memory_space<vmem>>, vector<1x64x256xbf16>
    %110 = vector.shape_cast %109 : vector<1x64x256xbf16> to vector<64x256xbf16>
    %cst_83 = arith.constant dense<0.000000e+00> : vector<64x256xf32>
    %111 = tpu.matmul %108, %110, %cst_83 {dimension_numbers = #tpu.dot_dimension_numbers<[1], [0], [0], [1], [0, 0, 1, 1], [], []>} : vector<64x64xbf16>, vector<64x256xbf16>, vector<64x256xf32> -> vector<64x256xf32>
    %c64_i32_84 = arith.constant 64 : i32
    %112 = arith.addi %0, %c64_i32_84 : i32
    %c0_i32_85 = arith.constant 0 : i32
    %113 = arith.addi %112, %c0_i32_85 : i32
    %114 = tpu.assume_multiple %113, 8 : i32
    %c0_86 = arith.constant 0 : index
    %c1_87 = arith.constant 1 : index
    %115 = arith.index_cast %114 : i32 to index
    %c0_88 = arith.constant 0 : index
    %116 = vector.load %arg2[%c0_86, %c1_87, %115, %c0_88] : memref<1x3x432x64xbf16, #tpu.memory_space<vmem>>, vector<1x1x64x64xbf16>
    %117 = vector.shape_cast %116 : vector<1x1x64x64xbf16> to vector<64x64xbf16>
    %c1_89 = arith.constant 1 : index
    %c0_90 = arith.constant 0 : index
    %c0_91 = arith.constant 0 : index
    %118 = vector.load %arg3[%c1_89, %c0_90, %c0_91] : memref<9x64x256xbf16, #tpu.memory_space<vmem>>, vector<1x64x256xbf16>
    %119 = vector.shape_cast %118 : vector<1x64x256xbf16> to vector<64x256xbf16>
    %cst_92 = arith.constant dense<0.000000e+00> : vector<64x256xf32>
    %120 = tpu.matmul %117, %119, %cst_92 {dimension_numbers = #tpu.dot_dimension_numbers<[1], [0], [0], [1], [0, 0, 1, 1], [], []>} : vector<64x64xbf16>, vector<64x256xbf16>, vector<64x256xf32> -> vector<64x256xf32>
    %121 = arith.addf %111, %120 : vector<64x256xf32>
    %c64_i32_93 = arith.constant 64 : i32
    %122 = arith.addi %0, %c64_i32_93 : i32
    %c0_i32_94 = arith.constant 0 : i32
    %123 = arith.addi %122, %c0_i32_94 : i32
    %124 = tpu.assume_multiple %123, 8 : i32
    %c0_95 = arith.constant 0 : index
    %c2_96 = arith.constant 2 : index
    %125 = arith.index_cast %124 : i32 to index
    %c0_97 = arith.constant 0 : index
    %126 = vector.load %arg2[%c0_95, %c2_96, %125, %c0_97] : memref<1x3x432x64xbf16, #tpu.memory_space<vmem>>, vector<1x1x64x64xbf16>
    %127 = vector.shape_cast %126 : vector<1x1x64x64xbf16> to vector<64x64xbf16>
    %c2_98 = arith.constant 2 : index
    %c0_99 = arith.constant 0 : index
    %c0_100 = arith.constant 0 : index
    %128 = vector.load %arg3[%c2_98, %c0_99, %c0_100] : memref<9x64x256xbf16, #tpu.memory_space<vmem>>, vector<1x64x256xbf16>
    %129 = vector.shape_cast %128 : vector<1x64x256xbf16> to vector<64x256xbf16>
    %cst_101 = arith.constant dense<0.000000e+00> : vector<64x256xf32>
    %130 = tpu.matmul %127, %129, %cst_101 {dimension_numbers = #tpu.dot_dimension_numbers<[1], [0], [0], [1], [0, 0, 1, 1], [], []>} : vector<64x64xbf16>, vector<64x256xbf16>, vector<64x256xf32> -> vector<64x256xf32>
    %131 = arith.addf %121, %130 : vector<64x256xf32>
    %c64_i32_102 = arith.constant 64 : i32
    %132 = arith.addi %0, %c64_i32_102 : i32
    %c24_i32_103 = arith.constant 24 : i32
    %133 = arith.addi %132, %c24_i32_103 : i32
    %134 = tpu.assume_multiple %133, 8 : i32
    %c0_104 = arith.constant 0 : index
    %c0_105 = arith.constant 0 : index
    %135 = arith.index_cast %134 : i32 to index
    %c0_106 = arith.constant 0 : index
    %136 = vector.load %arg2[%c0_104, %c0_105, %135, %c0_106] : memref<1x3x432x64xbf16, #tpu.memory_space<vmem>>, vector<1x1x64x64xbf16>
    %137 = vector.shape_cast %136 : vector<1x1x64x64xbf16> to vector<64x64xbf16>
    %c3_107 = arith.constant 3 : index
    %c0_108 = arith.constant 0 : index
    %c0_109 = arith.constant 0 : index
    %138 = vector.load %arg3[%c3_107, %c0_108, %c0_109] : memref<9x64x256xbf16, #tpu.memory_space<vmem>>, vector<1x64x256xbf16>
    %139 = vector.shape_cast %138 : vector<1x64x256xbf16> to vector<64x256xbf16>
    %cst_110 = arith.constant dense<0.000000e+00> : vector<64x256xf32>
    %140 = tpu.matmul %137, %139, %cst_110 {dimension_numbers = #tpu.dot_dimension_numbers<[1], [0], [0], [1], [0, 0, 1, 1], [], []>} : vector<64x64xbf16>, vector<64x256xbf16>, vector<64x256xf32> -> vector<64x256xf32>
    %141 = arith.addf %131, %140 : vector<64x256xf32>
    %c64_i32_111 = arith.constant 64 : i32
    %142 = arith.addi %0, %c64_i32_111 : i32
    %c24_i32_112 = arith.constant 24 : i32
    %143 = arith.addi %142, %c24_i32_112 : i32
    %144 = tpu.assume_multiple %143, 8 : i32
    %c0_113 = arith.constant 0 : index
    %c1_114 = arith.constant 1 : index
    %145 = arith.index_cast %144 : i32 to index
    %c0_115 = arith.constant 0 : index
    %146 = vector.load %arg2[%c0_113, %c1_114, %145, %c0_115] : memref<1x3x432x64xbf16, #tpu.memory_space<vmem>>, vector<1x1x64x64xbf16>
    %147 = vector.shape_cast %146 : vector<1x1x64x64xbf16> to vector<64x64xbf16>
    %c4_116 = arith.constant 4 : index
    %c0_117 = arith.constant 0 : index
    %c0_118 = arith.constant 0 : index
    %148 = vector.load %arg3[%c4_116, %c0_117, %c0_118] : memref<9x64x256xbf16, #tpu.memory_space<vmem>>, vector<1x64x256xbf16>
    %149 = vector.shape_cast %148 : vector<1x64x256xbf16> to vector<64x256xbf16>
    %cst_119 = arith.constant dense<0.000000e+00> : vector<64x256xf32>
    %150 = tpu.matmul %147, %149, %cst_119 {dimension_numbers = #tpu.dot_dimension_numbers<[1], [0], [0], [1], [0, 0, 1, 1], [], []>} : vector<64x64xbf16>, vector<64x256xbf16>, vector<64x256xf32> -> vector<64x256xf32>
    %151 = arith.addf %141, %150 : vector<64x256xf32>
    %c64_i32_120 = arith.constant 64 : i32
    %152 = arith.addi %0, %c64_i32_120 : i32
    %c24_i32_121 = arith.constant 24 : i32
    %153 = arith.addi %152, %c24_i32_121 : i32
    %154 = tpu.assume_multiple %153, 8 : i32
    %c0_122 = arith.constant 0 : index
    %c2_123 = arith.constant 2 : index
    %155 = arith.index_cast %154 : i32 to index
    %c0_124 = arith.constant 0 : index
    %156 = vector.load %arg2[%c0_122, %c2_123, %155, %c0_124] : memref<1x3x432x64xbf16, #tpu.memory_space<vmem>>, vector<1x1x64x64xbf16>
    %157 = vector.shape_cast %156 : vector<1x1x64x64xbf16> to vector<64x64xbf16>
    %c5_125 = arith.constant 5 : index
    %c0_126 = arith.constant 0 : index
    %c0_127 = arith.constant 0 : index
    %158 = vector.load %arg3[%c5_125, %c0_126, %c0_127] : memref<9x64x256xbf16, #tpu.memory_space<vmem>>, vector<1x64x256xbf16>
    %159 = vector.shape_cast %158 : vector<1x64x256xbf16> to vector<64x256xbf16>
    %cst_128 = arith.constant dense<0.000000e+00> : vector<64x256xf32>
    %160 = tpu.matmul %157, %159, %cst_128 {dimension_numbers = #tpu.dot_dimension_numbers<[1], [0], [0], [1], [0, 0, 1, 1], [], []>} : vector<64x64xbf16>, vector<64x256xbf16>, vector<64x256xf32> -> vector<64x256xf32>
    %161 = arith.addf %151, %160 : vector<64x256xf32>
    %c64_i32_129 = arith.constant 64 : i32
    %162 = arith.addi %0, %c64_i32_129 : i32
    %c48_i32_130 = arith.constant 48 : i32
    %163 = arith.addi %162, %c48_i32_130 : i32
    %164 = tpu.assume_multiple %163, 8 : i32
    %c0_131 = arith.constant 0 : index
    %c0_132 = arith.constant 0 : index
    %165 = arith.index_cast %164 : i32 to index
    %c0_133 = arith.constant 0 : index
    %166 = vector.load %arg2[%c0_131, %c0_132, %165, %c0_133] : memref<1x3x432x64xbf16, #tpu.memory_space<vmem>>, vector<1x1x64x64xbf16>
    %167 = vector.shape_cast %166 : vector<1x1x64x64xbf16> to vector<64x64xbf16>
    %c6_134 = arith.constant 6 : index
    %c0_135 = arith.constant 0 : index
    %c0_136 = arith.constant 0 : index
    %168 = vector.load %arg3[%c6_134, %c0_135, %c0_136] : memref<9x64x256xbf16, #tpu.memory_space<vmem>>, vector<1x64x256xbf16>
    %169 = vector.shape_cast %168 : vector<1x64x256xbf16> to vector<64x256xbf16>
    %cst_137 = arith.constant dense<0.000000e+00> : vector<64x256xf32>
    %170 = tpu.matmul %167, %169, %cst_137 {dimension_numbers = #tpu.dot_dimension_numbers<[1], [0], [0], [1], [0, 0, 1, 1], [], []>} : vector<64x64xbf16>, vector<64x256xbf16>, vector<64x256xf32> -> vector<64x256xf32>
    %171 = arith.addf %161, %170 : vector<64x256xf32>
    %c64_i32_138 = arith.constant 64 : i32
    %172 = arith.addi %0, %c64_i32_138 : i32
    %c48_i32_139 = arith.constant 48 : i32
    %173 = arith.addi %172, %c48_i32_139 : i32
    %174 = tpu.assume_multiple %173, 8 : i32
    %c0_140 = arith.constant 0 : index
    %c1_141 = arith.constant 1 : index
    %175 = arith.index_cast %174 : i32 to index
    %c0_142 = arith.constant 0 : index
    %176 = vector.load %arg2[%c0_140, %c1_141, %175, %c0_142] : memref<1x3x432x64xbf16, #tpu.memory_space<vmem>>, vector<1x1x64x64xbf16>
    %177 = vector.shape_cast %176 : vector<1x1x64x64xbf16> to vector<64x64xbf16>
    %c7_143 = arith.constant 7 : index
    %c0_144 = arith.constant 0 : index
    %c0_145 = arith.constant 0 : index
    %178 = vector.load %arg3[%c7_143, %c0_144, %c0_145] : memref<9x64x256xbf16, #tpu.memory_space<vmem>>, vector<1x64x256xbf16>
    %179 = vector.shape_cast %178 : vector<1x64x256xbf16> to vector<64x256xbf16>
    %cst_146 = arith.constant dense<0.000000e+00> : vector<64x256xf32>
    %180 = tpu.matmul %177, %179, %cst_146 {dimension_numbers = #tpu.dot_dimension_numbers<[1], [0], [0], [1], [0, 0, 1, 1], [], []>} : vector<64x64xbf16>, vector<64x256xbf16>, vector<64x256xf32> -> vector<64x256xf32>
    %181 = arith.addf %171, %180 : vector<64x256xf32>
    %c64_i32_147 = arith.constant 64 : i32
    %182 = arith.addi %0, %c64_i32_147 : i32
    %c48_i32_148 = arith.constant 48 : i32
    %183 = arith.addi %182, %c48_i32_148 : i32
    %184 = tpu.assume_multiple %183, 8 : i32
    %c0_149 = arith.constant 0 : index
    %c2_150 = arith.constant 2 : index
    %185 = arith.index_cast %184 : i32 to index
    %c0_151 = arith.constant 0 : index
    %186 = vector.load %arg2[%c0_149, %c2_150, %185, %c0_151] : memref<1x3x432x64xbf16, #tpu.memory_space<vmem>>, vector<1x1x64x64xbf16>
    %187 = vector.shape_cast %186 : vector<1x1x64x64xbf16> to vector<64x64xbf16>
    %c8_152 = arith.constant 8 : index
    %c0_153 = arith.constant 0 : index
    %c0_154 = arith.constant 0 : index
    %188 = vector.load %arg3[%c8_152, %c0_153, %c0_154] : memref<9x64x256xbf16, #tpu.memory_space<vmem>>, vector<1x64x256xbf16>
    %189 = vector.shape_cast %188 : vector<1x64x256xbf16> to vector<64x256xbf16>
    %cst_155 = arith.constant dense<0.000000e+00> : vector<64x256xf32>
    %190 = tpu.matmul %187, %189, %cst_155 {dimension_numbers = #tpu.dot_dimension_numbers<[1], [0], [0], [1], [0, 0, 1, 1], [], []>} : vector<64x64xbf16>, vector<64x256xbf16>, vector<64x256xf32> -> vector<64x256xf32>
    %191 = arith.addf %181, %190 : vector<64x256xf32>
    %192 = vector.broadcast %2 : vector<1x256xf32> to vector<64x256xf32>
    %193 = arith.addf %191, %192 : vector<64x256xf32>
    %cst_156 = arith.constant 0.000000e+00 : f32
    %194 = vector.broadcast %cst_156 : f32 to vector<64x256xf32>
    %195 = arith.cmpf ogt, %193, %194 : vector<64x256xf32>
    %196 = vector.broadcast %1 : f32 to vector<64x256xf32>
    %197 = arith.mulf %196, %193 : vector<64x256xf32>
    %198 = arith.select %195, %193, %197 : vector<64x256xi1>, vector<64x256xf32>
    %199 = arith.truncf %198 : vector<64x256xf32> to vector<64x256xbf16>
    %c0_157 = arith.constant 0 : index
    %c64 = arith.constant 64 : index
    %c0_158 = arith.constant 0 : index
    %200 = vector.load %arg6[%c0_157, %c64, %c0_158] : memref<1x192x256xbf16, #tpu.memory_space<vmem>>, vector<1x64x256xbf16>
    %201 = vector.shape_cast %200 : vector<1x64x256xbf16> to vector<64x256xbf16>
    %202 = vector.shape_cast %199 : vector<64x256xbf16> to vector<1x64x256xbf16>
    tpu.vector_store %arg6[%c0_157, %c64, %c0_158], %202 {strides = array<i32>} : memref<1x192x256xbf16, #tpu.memory_space<vmem>>, vector<1x64x256xbf16>,
    %c128_i32 = arith.constant 128 : i32
    %203 = arith.addi %0, %c128_i32 : i32
    %c0_i32_159 = arith.constant 0 : i32
    %204 = arith.addi %203, %c0_i32_159 : i32
    %205 = tpu.assume_multiple %204, 8 : i32
    %c0_160 = arith.constant 0 : index
    %c0_161 = arith.constant 0 : index
    %206 = arith.index_cast %205 : i32 to index
    %c0_162 = arith.constant 0 : index
    %207 = vector.load %arg2[%c0_160, %c0_161, %206, %c0_162] : memref<1x3x432x64xbf16, #tpu.memory_space<vmem>>, vector<1x1x64x64xbf16>
    %208 = vector.shape_cast %207 : vector<1x1x64x64xbf16> to vector<64x64xbf16>
    %c0_163 = arith.constant 0 : index
    %c0_164 = arith.constant 0 : index
    %c0_165 = arith.constant 0 : index
    %209 = vector.load %arg3[%c0_163, %c0_164, %c0_165] : memref<9x64x256xbf16, #tpu.memory_space<vmem>>, vector<1x64x256xbf16>
    %210 = vector.shape_cast %209 : vector<1x64x256xbf16> to vector<64x256xbf16>
    %cst_166 = arith.constant dense<0.000000e+00> : vector<64x256xf32>
    %211 = tpu.matmul %208, %210, %cst_166 {dimension_numbers = #tpu.dot_dimension_numbers<[1], [0], [0], [1], [0, 0, 1, 1], [], []>} : vector<64x64xbf16>, vector<64x256xbf16>, vector<64x256xf32> -> vector<64x256xf32>
    %c128_i32_167 = arith.constant 128 : i32
    %212 = arith.addi %0, %c128_i32_167 : i32
    %c0_i32_168 = arith.constant 0 : i32
    %213 = arith.addi %212, %c0_i32_168 : i32
    %214 = tpu.assume_multiple %213, 8 : i32
    %c0_169 = arith.constant 0 : index
    %c1_170 = arith.constant 1 : index
    %215 = arith.index_cast %214 : i32 to index
    %c0_171 = arith.constant 0 : index
    %216 = vector.load %arg2[%c0_169, %c1_170, %215, %c0_171] : memref<1x3x432x64xbf16, #tpu.memory_space<vmem>>, vector<1x1x64x64xbf16>
    %217 = vector.shape_cast %216 : vector<1x1x64x64xbf16> to vector<64x64xbf16>
    %c1_172 = arith.constant 1 : index
    %c0_173 = arith.constant 0 : index
    %c0_174 = arith.constant 0 : index
    %218 = vector.load %arg3[%c1_172, %c0_173, %c0_174] : memref<9x64x256xbf16, #tpu.memory_space<vmem>>, vector<1x64x256xbf16>
    %219 = vector.shape_cast %218 : vector<1x64x256xbf16> to vector<64x256xbf16>
    %cst_175 = arith.constant dense<0.000000e+00> : vector<64x256xf32>
    %220 = tpu.matmul %217, %219, %cst_175 {dimension_numbers = #tpu.dot_dimension_numbers<[1], [0], [0], [1], [0, 0, 1, 1], [], []>} : vector<64x64xbf16>, vector<64x256xbf16>, vector<64x256xf32> -> vector<64x256xf32>
    %221 = arith.addf %211, %220 : vector<64x256xf32>
    %c128_i32_176 = arith.constant 128 : i32
    %222 = arith.addi %0, %c128_i32_176 : i32
    %c0_i32_177 = arith.constant 0 : i32
    %223 = arith.addi %222, %c0_i32_177 : i32
    %224 = tpu.assume_multiple %223, 8 : i32
    %c0_178 = arith.constant 0 : index
    %c2_179 = arith.constant 2 : index
    %225 = arith.index_cast %224 : i32 to index
    %c0_180 = arith.constant 0 : index
    %226 = vector.load %arg2[%c0_178, %c2_179, %225, %c0_180] : memref<1x3x432x64xbf16, #tpu.memory_space<vmem>>, vector<1x1x64x64xbf16>
    %227 = vector.shape_cast %226 : vector<1x1x64x64xbf16> to vector<64x64xbf16>
    %c2_181 = arith.constant 2 : index
    %c0_182 = arith.constant 0 : index
    %c0_183 = arith.constant 0 : index
    %228 = vector.load %arg3[%c2_181, %c0_182, %c0_183] : memref<9x64x256xbf16, #tpu.memory_space<vmem>>, vector<1x64x256xbf16>
    %229 = vector.shape_cast %228 : vector<1x64x256xbf16> to vector<64x256xbf16>
    %cst_184 = arith.constant dense<0.000000e+00> : vector<64x256xf32>
    %230 = tpu.matmul %227, %229, %cst_184 {dimension_numbers = #tpu.dot_dimension_numbers<[1], [0], [0], [1], [0, 0, 1, 1], [], []>} : vector<64x64xbf16>, vector<64x256xbf16>, vector<64x256xf32> -> vector<64x256xf32>
    %231 = arith.addf %221, %230 : vector<64x256xf32>
    %c128_i32_185 = arith.constant 128 : i32
    %232 = arith.addi %0, %c128_i32_185 : i32
    %c24_i32_186 = arith.constant 24 : i32
    %233 = arith.addi %232, %c24_i32_186 : i32
    %234 = tpu.assume_multiple %233, 8 : i32
    %c0_187 = arith.constant 0 : index
    %c0_188 = arith.constant 0 : index
    %235 = arith.index_cast %234 : i32 to index
    %c0_189 = arith.constant 0 : index
    %236 = vector.load %arg2[%c0_187, %c0_188, %235, %c0_189] : memref<1x3x432x64xbf16, #tpu.memory_space<vmem>>, vector<1x1x64x64xbf16>
    %237 = vector.shape_cast %236 : vector<1x1x64x64xbf16> to vector<64x64xbf16>
    %c3_190 = arith.constant 3 : index
    %c0_191 = arith.constant 0 : index
    %c0_192 = arith.constant 0 : index
    %238 = vector.load %arg3[%c3_190, %c0_191, %c0_192] : memref<9x64x256xbf16, #tpu.memory_space<vmem>>, vector<1x64x256xbf16>
    %239 = vector.shape_cast %238 : vector<1x64x256xbf16> to vector<64x256xbf16>
    %cst_193 = arith.constant dense<0.000000e+00> : vector<64x256xf32>
    %240 = tpu.matmul %237, %239, %cst_193 {dimension_numbers = #tpu.dot_dimension_numbers<[1], [0], [0], [1], [0, 0, 1, 1], [], []>} : vector<64x64xbf16>, vector<64x256xbf16>, vector<64x256xf32> -> vector<64x256xf32>
    %241 = arith.addf %231, %240 : vector<64x256xf32>
    %c128_i32_194 = arith.constant 128 : i32
    %242 = arith.addi %0, %c128_i32_194 : i32
    %c24_i32_195 = arith.constant 24 : i32
    %243 = arith.addi %242, %c24_i32_195 : i32
    %244 = tpu.assume_multiple %243, 8 : i32
    %c0_196 = arith.constant 0 : index
    %c1_197 = arith.constant 1 : index
    %245 = arith.index_cast %244 : i32 to index
    %c0_198 = arith.constant 0 : index
    %246 = vector.load %arg2[%c0_196, %c1_197, %245, %c0_198] : memref<1x3x432x64xbf16, #tpu.memory_space<vmem>>, vector<1x1x64x64xbf16>
    %247 = vector.shape_cast %246 : vector<1x1x64x64xbf16> to vector<64x64xbf16>
    %c4_199 = arith.constant 4 : index
    %c0_200 = arith.constant 0 : index
    %c0_201 = arith.constant 0 : index
    %248 = vector.load %arg3[%c4_199, %c0_200, %c0_201] : memref<9x64x256xbf16, #tpu.memory_space<vmem>>, vector<1x64x256xbf16>
    %249 = vector.shape_cast %248 : vector<1x64x256xbf16> to vector<64x256xbf16>
    %cst_202 = arith.constant dense<0.000000e+00> : vector<64x256xf32>
    %250 = tpu.matmul %247, %249, %cst_202 {dimension_numbers = #tpu.dot_dimension_numbers<[1], [0], [0], [1], [0, 0, 1, 1], [], []>} : vector<64x64xbf16>, vector<64x256xbf16>, vector<64x256xf32> -> vector<64x256xf32>
    %251 = arith.addf %241, %250 : vector<64x256xf32>
    %c128_i32_203 = arith.constant 128 : i32
    %252 = arith.addi %0, %c128_i32_203 : i32
    %c24_i32_204 = arith.constant 24 : i32
    %253 = arith.addi %252, %c24_i32_204 : i32
    %254 = tpu.assume_multiple %253, 8 : i32
    %c0_205 = arith.constant 0 : index
    %c2_206 = arith.constant 2 : index
    %255 = arith.index_cast %254 : i32 to index
    %c0_207 = arith.constant 0 : index
    %256 = vector.load %arg2[%c0_205, %c2_206, %255, %c0_207] : memref<1x3x432x64xbf16, #tpu.memory_space<vmem>>, vector<1x1x64x64xbf16>
    %257 = vector.shape_cast %256 : vector<1x1x64x64xbf16> to vector<64x64xbf16>
    %c5_208 = arith.constant 5 : index
    %c0_209 = arith.constant 0 : index
    %c0_210 = arith.constant 0 : index
    %258 = vector.load %arg3[%c5_208, %c0_209, %c0_210] : memref<9x64x256xbf16, #tpu.memory_space<vmem>>, vector<1x64x256xbf16>
    %259 = vector.shape_cast %258 : vector<1x64x256xbf16> to vector<64x256xbf16>
    %cst_211 = arith.constant dense<0.000000e+00> : vector<64x256xf32>
    %260 = tpu.matmul %257, %259, %cst_211 {dimension_numbers = #tpu.dot_dimension_numbers<[1], [0], [0], [1], [0, 0, 1, 1], [], []>} : vector<64x64xbf16>, vector<64x256xbf16>, vector<64x256xf32> -> vector<64x256xf32>
    %261 = arith.addf %251, %260 : vector<64x256xf32>
    %c128_i32_212 = arith.constant 128 : i32
    %262 = arith.addi %0, %c128_i32_212 : i32
    %c48_i32_213 = arith.constant 48 : i32
    %263 = arith.addi %262, %c48_i32_213 : i32
    %264 = tpu.assume_multiple %263, 8 : i32
    %c0_214 = arith.constant 0 : index
    %c0_215 = arith.constant 0 : index
    %265 = arith.index_cast %264 : i32 to index
    %c0_216 = arith.constant 0 : index
    %266 = vector.load %arg2[%c0_214, %c0_215, %265, %c0_216] : memref<1x3x432x64xbf16, #tpu.memory_space<vmem>>, vector<1x1x64x64xbf16>
    %267 = vector.shape_cast %266 : vector<1x1x64x64xbf16> to vector<64x64xbf16>
    %c6_217 = arith.constant 6 : index
    %c0_218 = arith.constant 0 : index
    %c0_219 = arith.constant 0 : index
    %268 = vector.load %arg3[%c6_217, %c0_218, %c0_219] : memref<9x64x256xbf16, #tpu.memory_space<vmem>>, vector<1x64x256xbf16>
    %269 = vector.shape_cast %268 : vector<1x64x256xbf16> to vector<64x256xbf16>
    %cst_220 = arith.constant dense<0.000000e+00> : vector<64x256xf32>
    %270 = tpu.matmul %267, %269, %cst_220 {dimension_numbers = #tpu.dot_dimension_numbers<[1], [0], [0], [1], [0, 0, 1, 1], [], []>} : vector<64x64xbf16>, vector<64x256xbf16>, vector<64x256xf32> -> vector<64x256xf32>
    %271 = arith.addf %261, %270 : vector<64x256xf32>
    %c128_i32_221 = arith.constant 128 : i32
    %272 = arith.addi %0, %c128_i32_221 : i32
    %c48_i32_222 = arith.constant 48 : i32
    %273 = arith.addi %272, %c48_i32_222 : i32
    %274 = tpu.assume_multiple %273, 8 : i32
    %c0_223 = arith.constant 0 : index
    %c1_224 = arith.constant 1 : index
    %275 = arith.index_cast %274 : i32 to index
    %c0_225 = arith.constant 0 : index
    %276 = vector.load %arg2[%c0_223, %c1_224, %275, %c0_225] : memref<1x3x432x64xbf16, #tpu.memory_space<vmem>>, vector<1x1x64x64xbf16>
    %277 = vector.shape_cast %276 : vector<1x1x64x64xbf16> to vector<64x64xbf16>
    %c7_226 = arith.constant 7 : index
    %c0_227 = arith.constant 0 : index
    %c0_228 = arith.constant 0 : index
    %278 = vector.load %arg3[%c7_226, %c0_227, %c0_228] : memref<9x64x256xbf16, #tpu.memory_space<vmem>>, vector<1x64x256xbf16>
    %279 = vector.shape_cast %278 : vector<1x64x256xbf16> to vector<64x256xbf16>
    %cst_229 = arith.constant dense<0.000000e+00> : vector<64x256xf32>
    %280 = tpu.matmul %277, %279, %cst_229 {dimension_numbers = #tpu.dot_dimension_numbers<[1], [0], [0], [1], [0, 0, 1, 1], [], []>} : vector<64x64xbf16>, vector<64x256xbf16>, vector<64x256xf32> -> vector<64x256xf32>
    %281 = arith.addf %271, %280 : vector<64x256xf32>
    %c128_i32_230 = arith.constant 128 : i32
    %282 = arith.addi %0, %c128_i32_230 : i32
    %c48_i32_231 = arith.constant 48 : i32
    %283 = arith.addi %282, %c48_i32_231 : i32
    %284 = tpu.assume_multiple %283, 8 : i32
    %c0_232 = arith.constant 0 : index
    %c2_233 = arith.constant 2 : index
    %285 = arith.index_cast %284 : i32 to index
    %c0_234 = arith.constant 0 : index
    %286 = vector.load %arg2[%c0_232, %c2_233, %285, %c0_234] : memref<1x3x432x64xbf16, #tpu.memory_space<vmem>>, vector<1x1x64x64xbf16>
    %287 = vector.shape_cast %286 : vector<1x1x64x64xbf16> to vector<64x64xbf16>
    %c8_235 = arith.constant 8 : index
    %c0_236 = arith.constant 0 : index
    %c0_237 = arith.constant 0 : index
    %288 = vector.load %arg3[%c8_235, %c0_236, %c0_237] : memref<9x64x256xbf16, #tpu.memory_space<vmem>>, vector<1x64x256xbf16>
    %289 = vector.shape_cast %288 : vector<1x64x256xbf16> to vector<64x256xbf16>
    %cst_238 = arith.constant dense<0.000000e+00> : vector<64x256xf32>
    %290 = tpu.matmul %287, %289, %cst_238 {dimension_numbers = #tpu.dot_dimension_numbers<[1], [0], [0], [1], [0, 0, 1, 1], [], []>} : vector<64x64xbf16>, vector<64x256xbf16>, vector<64x256xf32> -> vector<64x256xf32>
    %291 = arith.addf %281, %290 : vector<64x256xf32>
    %292 = vector.broadcast %2 : vector<1x256xf32> to vector<64x256xf32>
    %293 = arith.addf %291, %292 : vector<64x256xf32>
    %cst_239 = arith.constant 0.000000e+00 : f32
    %294 = vector.broadcast %cst_239 : f32 to vector<64x256xf32>
    %295 = arith.cmpf ogt, %293, %294 : vector<64x256xf32>
    %296 = vector.broadcast %1 : f32 to vector<64x256xf32>
    %297 = arith.mulf %296, %293 : vector<64x256xf32>
    %298 = arith.select %295, %293, %297 : vector<64x256xi1>, vector<64x256xf32>
    %299 = arith.truncf %298 : vector<64x256xf32> to vector<64x256xbf16>
    %c0_240 = arith.constant 0 : index
    %c128 = arith.constant 128 : index
    %c0_241 = arith.constant 0 : index
    %300 = vector.load %arg6[%c0_240, %c128, %c0_241] : memref<1x192x256xbf16, #tpu.memory_space<vmem>>, vector<1x64x256xbf16>
    %301 = vector.shape_cast %300 : vector<1x64x256xbf16> to vector<64x256xbf16>
    %302 = vector.shape_cast %299 : vector<64x256xbf16> to vector<1x64x256xbf16>
    tpu.vector_store %arg6[%c0_240, %c128, %c0_241], %302 {strides = array<i32>} : memref<1x192x256xbf16, #tpu.memory_space<vmem>>, vector<1x64x256xbf16>,
    return
  }
  func.func @transform_0(%arg0: i32, %arg1: i32) -> (i32, i32, i32, i32) {
    %c0_i32 = arith.constant 0 : i32
    %c0_i32_0 = arith.constant 0 : i32
    %c0_i32_1 = arith.constant 0 : i32
    %c0_i32_2 = arith.constant 0 : i32
    return %arg0, %c0_i32, %c0_i32_0, %c0_i32_1 : i32, i32, i32, i32
  }
  func.func @transform_1(%arg0: i32, %arg1: i32) -> (i32, i32, i32) {
    %c0_i32 = arith.constant 0 : i32
    %c0_i32_0 = arith.constant 0 : i32
    %c0_i32_1 = arith.constant 0 : i32
    %c0_i32_2 = arith.constant 0 : i32
    return %c0_i32, %c0_i32_0, %c0_i32_1 : i32, i32, i32
  }
  func.func @transform_2(%arg0: i32, %arg1: i32) -> (i32, i32) {
    %c0_i32 = arith.constant 0 : i32
    %c0_i32_0 = arith.constant 0 : i32
    %c0_i32_1 = arith.constant 0 : i32
    return %c0_i32, %c0_i32_0 : i32, i32
  }
  func.func @transform_3(%arg0: i32, %arg1: i32) -> (i32, i32) {
    %c0_i32 = arith.constant 0 : i32
    %c0_i32_0 = arith.constant 0 : i32
    %c0_i32_1 = arith.constant 0 : i32
    return %c0_i32, %c0_i32_0 : i32, i32
  }
  func.func @transform_4(%arg0: i32, %arg1: i32) -> (i32, i32, i32) {
    %c0_i32 = arith.constant 0 : i32
    %c0_i32_0 = arith.constant 0 : i32
    return %arg0, %arg1, %c0_i32 : i32, i32, i32
  }
}

</mosaic_0001>

<llo_original>
// kernel: upsample_forward.1
$region0: #{upsample_forward.1}
  #allocation0 [shape = 'u32[]', space=smem, size = 0x4, offset = 0x4, fixed_abs, tag = 'smem constant byte address 0x4 - core index']
  #allocation1 [shape = 'u32[144,128]{1,0:T(1,128)}', space=vmem, size = 0x12000, scoped, tag = 'internal scratch']
  #allocation2 [shape = 'f32[1,1]{1,0:T(1,128)S(6)}', space=smem, size = 0x200, scoped, tag = 'scoped memory for upsample_forward.1']
  %s0 = inlined_call_operand.vmem [shape: bf16[2,3,432,64], index: 0, kind: input, shape index: {}]
  %s1 = inlined_call_operand.vmem [shape: bf16[9,64,256], index: 1, kind: input, shape index: {}]
  %s2 = inlined_call_operand.vmem [shape: f32[1,256], index: 2, kind: input, shape index: {}]
  %s3 = inlined_call_operand.<no memory space> [shape: f32[1,1], index: 3, kind: input, shape index: {}]
  %s4 = inlined_call_operand.vmem [shape: bf16[2,384,256], index: 4, kind: output, shape index: {}]
  %s5 = sld [smem:[#allocation0]]
  $region49: #{upsample_forward.1} parent=0
    _
  %s7 = ssub.s32 1, %s5
  %s8 = scalar_select 0, %s7, %s5
  %9 = sst [smem:[#allocation2]] %s3
  loop: start=0, step=1, limit=6
  $region2: #{upsample_forward.1} parent=0 // loop_pre_header
    _
  $region3: #{upsample_forward.1} parent=0 // loop_header
    %s11 = sphi 0, %s15
    %p12 = scmp.ge.s32.totalorder %s11, 6
    %s18 = sphi 0, %s30
    %s19 = sphi 0, %s26
    %s20 = sphi 0, %s18
    %s21 = sphi 0, %s19
    %s22 = sphi 0, %s20
    %s23 = sphi 0, %s21
    %s33 = sphi 0, %s35
    %s36 = sphi 0, %s33
    %s37 = sphi 0, %s36
    %s53 = sphi 0, %s37
    %s57 = sphi 0, %s57
    %s59 = sphi 0, %s57
    %s60 = sphi 0, %s59
    %s74 = sphi 0, %s60
    %s78 = sphi 0, %s78
    %s80 = sphi 0, %s78
    %s81 = sphi 0, %s80
    %s95 = sphi 0, %s81
    %s99 = sphi 0, %s99
    %s101 = sphi 0, %s99
    %s102 = sphi 0, %s101
    %s116 = sphi 0, %s102
    %s124 = sphi 0, %s126
    %s127 = sphi 0, %s124
    %s128 = sphi 0, %s127
    %s144 = sphi 0, %s128
  $region4: #{upsample_forward.1} parent=0 // loop_header_branch
    %14 = sbr.rel (%p12) target = $region8
  $region5: #{upsample_forward.1} parent=0 // loop_body
    %s16 = ssub.s32 %s11, 1
    %s17 = ssub.s32 %s11, 2
    %s24 = sadd.s32 1, %s19
    %p25 = scmp.ge.s32.totalorder %s24, 2
    %s26 = scalar_select %p25, 0, %s24
    %s27 = sadd.s32 1, %s18
    %s28 = scalar_select %p25, %s27, %s18
    %p29 = scmp.ge.s32.totalorder %s28, 2
    %s30 = scalar_select %p29, 0, %s28
    %s31 = ssub.s32 %s18, %s30
    %p32 = scmp.eq.s32.totalorder %s31, 0
    %s34 = sadd.s32 %s33, 1
    %s35 = scalar_select %p32, %s33, %s34
    %p38 = pneg %p32
    %p39 = scmp.eq.s32.totalorder %s11, 3
    %p40 = por %p38, %p39
    %p41 = scmp.ne.s32.totalorder %s33, %s36
    %p42 = scmp.eq.s32.totalorder %s11, 0
    %p43 = por %p41, %p42
    %p44 = scmp.ne.s32.totalorder %s33, %s36
    %p45 = scmp.eq.s32.totalorder %s16, 3
    %p46 = por %p44, %p45
    %p47 = scmp.ne.s32.totalorder %s36, %s37
    %p48 = scmp.eq.s32.totalorder %s16, 0
    %p49 = por %p47, %p48
    %p50 = scmp.ne.s32.totalorder %s36, %s37
    %p51 = scmp.eq.s32.totalorder %s17, 3
    %p52 = por %p50, %p51
    %p54 = scmp.ne.s32.totalorder %s37, %s53
    %p55 = scmp.eq.s32.totalorder %s17, 0
    %p56 = por %p54, %p55
    %s58 = sadd.s32 %s57, 1
    %p61 = scmp.eq.s32.totalorder %s11, 3
    %p62 = scmp.ne.s32.totalorder %s57, %s59
    %p63 = scmp.eq.s32.totalorder %s11, 0
    %p64 = por %p62, %p63
    %p65 = scmp.ne.s32.totalorder %s57, %s59
    %p66 = scmp.eq.s32.totalorder %s16, 3
    %p67 = por %p65, %p66
    %p68 = scmp.ne.s32.totalorder %s59, %s60
    %p69 = scmp.eq.s32.totalorder %s16, 0
    %p70 = por %p68, %p69
    %p71 = scmp.ne.s32.totalorder %s59, %s60
    %p72 = scmp.eq.s32.totalorder %s17, 3
    %p73 = por %p71, %p72
    %p75 = scmp.ne.s32.totalorder %s60, %s74
    %p76 = scmp.eq.s32.totalorder %s17, 0
    %p77 = por %p75, %p76
    %s79 = sadd.s32 %s78, 1
    %p82 = scmp.eq.s32.totalorder %s11, 3
    %p83 = scmp.ne.s32.totalorder %s78, %s80
    %p84 = scmp.eq.s32.totalorder %s11, 0
    %p85 = por %p83, %p84
    %p86 = scmp.ne.s32.totalorder %s78, %s80
    %p87 = scmp.eq.s32.totalorder %s16, 3
    %p88 = por %p86, %p87
    %p89 = scmp.ne.s32.totalorder %s80, %s81
    %p90 = scmp.eq.s32.totalorder %s16, 0
    %p91 = por %p89, %p90
    %p92 = scmp.ne.s32.totalorder %s80, %s81
    %p93 = scmp.eq.s32.totalorder %s17, 3
    %p94 = por %p92, %p93
    %p96 = scmp.ne.s32.totalorder %s81, %s95
    %p97 = scmp.eq.s32.totalorder %s17, 0
    %p98 = por %p96, %p97
    %s100 = sadd.s32 %s99, 1
    %p103 = scmp.eq.s32.totalorder %s11, 3
    %p104 = scmp.ne.s32.totalorder %s99, %s101
    %p105 = scmp.eq.s32.totalorder %s11, 0
    %p106 = por %p104, %p105
    %p107 = scmp.ne.s32.totalorder %s99, %s101
    %p108 = scmp.eq.s32.totalorder %s16, 3
    %p109 = por %p107, %p108
    %p110 = scmp.ne.s32.totalorder %s101, %s102
    %p111 = scmp.eq.s32.totalorder %s16, 0
    %p112 = por %p110, %p111
    %p113 = scmp.ne.s32.totalorder %s101, %s102
    %p114 = scmp.eq.s32.totalorder %s17, 3
    %p115 = por %p113, %p114
    %p117 = scmp.ne.s32.totalorder %s102, %s116
    %p118 = scmp.eq.s32.totalorder %s17, 0
    %p119 = por %p117, %p118
    %s120 = ssub.s32 %s18, %s30
    %s121 = ssub.s32 %s19, %s26
    %s122 = sor.u32 %s120, %s121
    %p123 = scmp.eq.s32.totalorder %s122, 0
    %s125 = sadd.s32 %s124, 1
    %s126 = scalar_select %p123, %s124, %s125
    %p129 = pneg %p123
    %p130 = scmp.eq.s32.totalorder %s11, 3
    %p131 = por %p129, %p130
    %p132 = scmp.ne.s32.totalorder %s124, %s127
    %p133 = scmp.eq.s32.totalorder %s11, 0
    %p134 = por %p132, %p133
    %p135 = scmp.ne.s32.totalorder %s124, %s127
    %p136 = scmp.eq.s32.totalorder %s16, 3
    %p137 = por %p135, %p136
    %p138 = scmp.ne.s32.totalorder %s127, %s128
    %p139 = scmp.eq.s32.totalorder %s16, 0
    %p140 = por %p138, %p139
    %p141 = scmp.ne.s32.totalorder %s127, %s128
    %p142 = scmp.eq.s32.totalorder %s17, 3
    %p143 = por %p141, %p142
    %p145 = scmp.ne.s32.totalorder %s128, %s144
    %p146 = scmp.eq.s32.totalorder %s17, 0
    %p147 = por %p145, %p146
    %p148 = scmp.le.s32.totalorder 1, %s11
    %p149 = scmp.lt.s32.totalorder %s11, 5
    %p150 = pnand %p148, %p149
    %p151 = pneg %p150
    // Predicated region
    $region9: #{upsample_forward.1} parent=5 // pred_check
      _
    $region10: #{upsample_forward.1} parent=5 // pred_check_branch
      %153 = sbr.rel (%p150) target = $region12
    $region11: #{upsample_forward.1} parent=5 // pred_region
      %s154 = ssub.s32 %s11, 1
      // Predicated region
      $region13: #{upsample_forward.1} parent=11 // pred_check
        %p155 = pneg %p70
      $region14: #{upsample_forward.1} parent=11 // pred_check_branch
        %157 = sbr.rel (%p155) target = $region16
      $region15: #{upsample_forward.1} parent=11 // pred_region
        _
      $region16: #{upsample_forward.1} parent=11 // pred_fallthru
        _
      // Predicated region
      $region17: #{upsample_forward.1} parent=11 // pred_check
        %p158 = pneg %p91
      $region18: #{upsample_forward.1} parent=11 // pred_check_branch
        %160 = sbr.rel (%p158) target = $region20
      $region19: #{upsample_forward.1} parent=11 // pred_region
        _
      $region20: #{upsample_forward.1} parent=11 // pred_fallthru
        _
      // Predicated region
      $region21: #{upsample_forward.1} parent=11 // pred_check
        %p161 = pneg %p112
      $region22: #{upsample_forward.1} parent=11 // pred_check_branch
        %163 = sbr.rel (%p161) target = $region24
      $region23: #{upsample_forward.1} parent=11 // pred_region
        _
      $region24: #{upsample_forward.1} parent=11 // pred_fallthru
        _
    $region12: #{upsample_forward.1} parent=5 // pred_fallthru
      _
    %p164 = scmp.lt.s32.totalorder %s11, 4
    // Predicated region
    $region25: #{upsample_forward.1} parent=5 // pred_check
      %p165 = pneg %p164
    $region26: #{upsample_forward.1} parent=5 // pred_check_branch
      %167 = sbr.rel (%p165) target = $region28
    $region27: #{upsample_forward.1} parent=5 // pred_region
      // Predicated region
      $region29: #{upsample_forward.1} parent=27 // pred_check
        %p168 = pneg %p43
      $region30: #{upsample_forward.1} parent=27 // pred_check_branch
        %170 = sbr.rel (%p168) target = $region32
      $region31: #{upsample_forward.1} parent=27 // pred_region
        %p171 = scmp.lt.s32.totalorder %s18, 1
        %s172 = scalar_select %p171, %s18, 1
        %s173 = smul.addr %s172, 162
        %s174 = smul.addr %s173, 4
        %s175 = scalar_lea.vmem %s0, %s174
      $region32: #{upsample_forward.1} parent=27 // pred_fallthru
        _
    $region28: #{upsample_forward.1} parent=5 // pred_fallthru
      _
    %p176 = scmp.le.s32.totalorder 1, %s11
    %p177 = scmp.lt.s32.totalorder %s11, 5
    %p178 = pnand %p176, %p177
    %p179 = pneg %p178
    // Predicated region
    $region33: #{upsample_forward.1} parent=5 // pred_check
      _
    $region34: #{upsample_forward.1} parent=5 // pred_check_branch
      %181 = sbr.rel (%p178) target = $region36
    $region35: #{upsample_forward.1} parent=5 // pred_region
      %s182 = ssub.s32 %s11, 1
      %p183 = scmp.lt.s32.totalorder %s20, 1
      %s184 = scalar_select %p183, %s20, 1
      %s185 = smul.addr %s184, 162
      %s186 = smul.addr %s185, 4
      %s187 = scalar_lea.vmem %s0, %s186
      %p188 = pneg %p49
      %p189 = pneg %p46
      %p190 = pneg %p70
      %p191 = pneg %p67
      %p192 = pneg %p91
      %p193 = pneg %p88
      %p194 = pneg %p112
      %p195 = pneg %p109
      %p196 = pneg %p140
      %p197 = pneg %p137
      %s198 = smul.u32 24, %s21
      %p199 = scmp.lt.s32.totalorder %s20, 1
      %s200 = scalar_select %p199, %s20, 1
      %p201 = scmp.lt.s32.totalorder %s198, 47
      %s202 = scalar_select %p201, %s198, 47
      %s203 = smul.addr %s202, 2
      %s204 = smul.addr %s200, 96
      %s205 = sadd.s32 %s203, %s204
      %s206 = smul.addr %s205, 4
      %s207 = scalar_lea.vmem %s4, %s206
      %p208 = scmp.lt.s32.totalorder %s20, 1
      %s209 = scalar_select %p208, %s20, 1
      %s210 = smul.addr %s209, 162
      %s211 = smul.addr %s210, 4
      %s212 = scalar_lea.vmem %s0, %s211
      %s213 = smul.u32 24, %s21
      %p214 = scmp.lt.s32.totalorder %s20, 1
      %s215 = scalar_select %p214, %s20, 1
      %p216 = scmp.lt.s32.totalorder %s213, 47
      %s217 = scalar_select %p216, %s213, 47
      %s218 = smul.addr %s217, 2
      %s219 = smul.addr %s215, 96
      %s220 = sadd.s32 %s218, %s219
      %s221 = smul.addr %s220, 4
      %s222 = scalar_lea.vmem %s4, %s221
      %s223 = smul.u32 24, %s21
      %s225 = smul.u32 %s21, 192
      %s226 = sld [smem:[#allocation2]]
      %v227 = vld [vmem:[%s2] sm:$0x3]
      %s228 = sshra.s32 %s225, 3
      %s229 = sand.u32 %s225, 7
      %s230 = smul.addr %s228, 4
      %s231 = scalar_lea.vmem %s212, %s230
      %v232 = vld [vmem:[%s231] sm:$0xf]
      %v233 = vld [vmem:[%s231 + $0x4] sm:$0xf]
      %v234 = vld [vmem:[%s231 + $0x8] sm:$0xf]
      %v235 = vld [vmem:[%s231 + $0xc] sm:$0xf]
      %v236 = vld [vmem:[%s231 + $0x10] sm:$0xf]
      %v237 = vld [vmem:[%s231 + $0x14] sm:$0xf]
      %v238 = vld [vmem:[%s231 + $0x18] sm:$0xf]
      %v239 = vld [vmem:[%s231 + $0x1c] sm:$0xf]
      %v240 = vld [vmem:[%s1] sm:$0xff]
      %v241 = vld [vmem:[%s1 + $0x8] sm:$0xff]
      %v242 = vld [vmem:[%s1 + $0x10] sm:$0xff]
      %v243 = vld [vmem:[%s1 + $0x18] sm:$0xff]
      %v244 = vld [vmem:[%s1 + $0x20] sm:$0xff]
      %v245 = vld [vmem:[%s1 + $0x28] sm:$0xff]
      %v246 = vld [vmem:[%s1 + $0x30] sm:$0xff]
      %v247 = vld [vmem:[%s1 + $0x38] sm:$0xff]
      %s248 = sadd.s32 %s228, 54
      %s249 = smul.addr %s248, 4
      %s250 = scalar_lea.vmem %s212, %s249
      %v251 = vld [vmem:[%s250] sm:$0xf]
      %v252 = vld [vmem:[%s250 + $0x4] sm:$0xf]
      %v253 = vld [vmem:[%s250 + $0x8] sm:$0xf]
      %v254 = vld [vmem:[%s250 + $0xc] sm:$0xf]
      %v255 = vld [vmem:[%s250 + $0x10] sm:$0xf]
      %v256 = vld [vmem:[%s250 + $0x14] sm:$0xf]
      %v257 = vld [vmem:[%s250 + $0x18] sm:$0xf]
      %v258 = vld [vmem:[%s250 + $0x1c] sm:$0xf]
      %s259 = scalar_lea.vmem %s1, 64
      %v260 = vld [vmem:[%s259] sm:$0xff]
      %v261 = vld [vmem:[%s259 + $0x8] sm:$0xff]
      %v262 = vld [vmem:[%s259 + $0x10] sm:$0xff]
      %v263 = vld [vmem:[%s259 + $0x18] sm:$0xff]
      %v264 = vld [vmem:[%s259 + $0x20] sm:$0xff]
      %v265 = vld [vmem:[%s259 + $0x28] sm:$0xff]
      %v266 = vld [vmem:[%s259 + $0x30] sm:$0xff]
      %v267 = vld [vmem:[%s259 + $0x38] sm:$0xff]
      %v276 = vunpack.c.l.b16 %v251
      %v277 = vunpack.c.l.b16 %v252
      %v278 = vunpack.c.l.b16 %v253
      %v279 = vunpack.c.l.b16 %v254
      %v280 = vunpack.c.l.b16 %v255
      %v281 = vunpack.c.l.b16 %v256
      %v282 = vunpack.c.l.b16 %v257
      %v283 = vunpack.c.l.b16 %v258
      %v284 = vpack.c.b16 %v277, %v276
      %v285 = vpack.c.b16 %v279, %v278
      %v286 = vpack.c.b16 %v281, %v280
      %v287 = vpack.c.b16 %v283, %v282
      %v296 = vunpack.c.l.b16 %v260
      %v297 = vunpack.c.h.b16 %v260
      %v298 = vunpack.c.l.b16 %v261
      %v299 = vunpack.c.h.b16 %v261
      %v300 = vunpack.c.l.b16 %v262
      %v301 = vunpack.c.h.b16 %v262
      %v302 = vunpack.c.l.b16 %v263
      %v303 = vunpack.c.h.b16 %v263
      %v304 = vunpack.c.l.b16 %v264
      %v305 = vunpack.c.h.b16 %v264
      %v306 = vunpack.c.l.b16 %v265
      %v307 = vunpack.c.h.b16 %v265
      %v308 = vunpack.c.l.b16 %v266
      %v309 = vunpack.c.h.b16 %v266
      %v310 = vunpack.c.l.b16 %v267
      %v311 = vunpack.c.h.b16 %v267
      %v312 = vpack.c.b16 %v298, %v296
      %v313 = vpack.c.b16 %v299, %v297
      %v314 = vpack.c.b16 %v302, %v300
      %v315 = vpack.c.b16 %v303, %v301
      %v316 = vpack.c.b16 %v306, %v304
      %v317 = vpack.c.b16 %v307, %v305
      %v318 = vpack.c.b16 %v310, %v308
      %v319 = vpack.c.b16 %v311, %v309
      %vm328 = vcmask 523264
      %v330 = vsel %vm328, %v284, 0
      %v333 = vsel %vm328, %v285, 0
      %v336 = vsel %vm328, %v286, 0
      %v339 = vsel %vm328, %v287, 0
      %341 = vmatprep.subr.bf16.mxu0 0
      %342 = vmatpush1.bf16.msra.mxu0 0
      %343 = vmatprep.subr.bf16.mxu0 0
      %344 = vmatpush1.bf16.msra.mxu0 0
      %345 = vmatprep.subr.bf16.mxu0 0
      %346 = vmatpush1.bf16.msra.mxu0 0
      %347 = vmatprep.subr.bf16.mxu0 0
      %348 = vmatpush1.bf16.msra.mxu0 0
      %349 = vmatprep.subr.bf16.mxu0 %v319
      %350 = vmatpush1.bf16.msra.mxu0 %v318
      %351 = vmatprep.subr.bf16.mxu0 %v317
      %352 = vmatpush1.bf16.msra.mxu0 %v316
      %353 = vmatprep.subr.bf16.mxu0 %v315
      %354 = vmatpush1.bf16.msra.mxu0 %v314
      %355 = vmatprep.subr.bf16.mxu0 %v313
      %356 = vmatpush1.bf16.msra.mxu0 %v312
      %357 = vmatprep.subr.bf16.mxu0 0
      %358 = vmatpush2.bf16.msra.mxu0 0
      %359 = vmatprep.subr.bf16.mxu0 0
      %360 = vmatpush2.bf16.msra.mxu0 0
      %361 = vmatprep.subr.bf16.mxu0 0
      %362 = vmatpush2.bf16.msra.mxu0 0
      %363 = vmatprep.subr.bf16.mxu0 0
      %364 = vmatpush2.bf16.msra.mxu0 0
      %365 = vmatprep.subr.bf16.mxu0 0
      %366 = vmatpush2.bf16.msra.mxu0 0
      %367 = vmatprep.subr.bf16.mxu0 0
      %368 = vmatpush2.bf16.msra.mxu0 0
      %369 = vmatprep.subr.bf16.mxu0 0
      %370 = vmatpush2.bf16.msra.mxu0 0
      %371 = vmatprep.subr.bf16.mxu0 0
      %372 = vmatpush2.bf16.msra.mxu0 0
      %373 = vmatprep.mubr.bf16.mxu0 0
      %374 = vmatmul.mubr.bf16.gmra.mxu0 %v330
      %v375 = vpop.f32.mrf.mxu0
      %v376 = vadd.f32 0.0, %v375
      %v377 = vpop.f32.mrf.mxu0
      %v378 = vadd.f32 0.0, %v377
      %v379 = vpop.f32.mrf.mxu0
      %v380 = vadd.f32 0.0, %v379
      %v381 = vpop.f32.mrf.mxu0
      %v382 = vadd.f32 0.0, %v381
      %383 = vmatprep.mubr.bf16.mxu0 0
      %384 = vmatmul.mubr.bf16.gmra.mxu0 %v333
      %v385 = vpop.f32.mrf.mxu0
      %v386 = vadd.f32 0.0, %v385
      %v387 = vpop.f32.mrf.mxu0
      %v388 = vadd.f32 0.0, %v387
      %v389 = vpop.f32.mrf.mxu0
      %v390 = vadd.f32 0.0, %v389
      %v391 = vpop.f32.mrf.mxu0
      %v392 = vadd.f32 0.0, %v391
      %393 = vmatprep.mubr.bf16.mxu0 0
      %394 = vmatmul.mubr.bf16.gmra.mxu0 %v336
      %v395 = vpop.f32.mrf.mxu0
      %v396 = vadd.f32 0.0, %v395
      %v397 = vpop.f32.mrf.mxu0
      %v398 = vadd.f32 0.0, %v397
      %v399 = vpop.f32.mrf.mxu0
      %v400 = vadd.f32 0.0, %v399
      %v401 = vpop.f32.mrf.mxu0
      %v402 = vadd.f32 0.0, %v401
      %403 = vmatprep.mubr.bf16.mxu0 0
      %404 = vmatmul.mubr.bf16.gmra.mxu0 %v339
      %v405 = vpop.f32.mrf.mxu0
      %v406 = vadd.f32 0.0, %v405
      %v407 = vpop.f32.mrf.mxu0
      %v408 = vadd.f32 0.0, %v407
      %v409 = vpop.f32.mrf.mxu0
      %v410 = vadd.f32 0.0, %v409
      %v411 = vpop.f32.mrf.mxu0
      %v412 = vadd.f32 0.0, %v411
      %413 = vdwg.mxu0
      %v422 = vunpack.c.l.b16 %v232
      %v423 = vunpack.c.l.b16 %v233
      %v424 = vunpack.c.l.b16 %v234
      %v425 = vunpack.c.l.b16 %v235
      %v426 = vunpack.c.l.b16 %v236
      %v427 = vunpack.c.l.b16 %v237
      %v428 = vunpack.c.l.b16 %v238
      %v429 = vunpack.c.l.b16 %v239
      %v430 = vpack.c.b16 %v423, %v422
      %v431 = vpack.c.b16 %v425, %v424
      %v432 = vpack.c.b16 %v427, %v426
      %v433 = vpack.c.b16 %v429, %v428
      %v442 = vunpack.c.l.b16 %v240
      %v443 = vunpack.c.h.b16 %v240
      %v444 = vunpack.c.l.b16 %v241
      %v445 = vunpack.c.h.b16 %v241
      %v446 = vunpack.c.l.b16 %v242
      %v447 = vunpack.c.h.b16 %v242
      %v448 = vunpack.c.l.b16 %v243
      %v449 = vunpack.c.h.b16 %v243
      %v450 = vunpack.c.l.b16 %v244
      %v451 = vunpack.c.h.b16 %v244
      %v452 = vunpack.c.l.b16 %v245
      %v453 = vunpack.c.h.b16 %v245
      %v454 = vunpack.c.l.b16 %v246
      %v455 = vunpack.c.h.b16 %v246
      %v456 = vunpack.c.l.b16 %v247
      %v457 = vunpack.c.h.b16 %v247
      %v458 = vpack.c.b16 %v444, %v442
      %v459 = vpack.c.b16 %v445, %v443
      %v460 = vpack.c.b16 %v448, %v446
      %v461 = vpack.c.b16 %v449, %v447
      %v462 = vpack.c.b16 %v452, %v450
      %v463 = vpack.c.b16 %v453, %v451
      %v464 = vpack.c.b16 %v456, %v454
      %v465 = vpack.c.b16 %v457, %v455
      %v475 = vsel %vm328, %v430, 0
      %v478 = vsel %vm328, %v431, 0
      %v481 = vsel %vm328, %v432, 0
      %v484 = vsel %vm328, %v433, 0
      %486 = vmatprep.subr.bf16.mxu0 0
      %487 = vmatpush1.bf16.msra.mxu0 0
      %488 = vmatprep.subr.bf16.mxu0 0
      %489 = vmatpush1.bf16.msra.mxu0 0
      %490 = vmatprep.subr.bf16.mxu0 0
      %491 = vmatpush1.bf16.msra.mxu0 0
      %492 = vmatprep.subr.bf16.mxu0 0
      %493 = vmatpush1.bf16.msra.mxu0 0
      %494 = vmatprep.subr.bf16.mxu0 %v465
      %495 = vmatpush1.bf16.msra.mxu0 %v464
      %496 = vmatprep.subr.bf16.mxu0 %v463
      %497 = vmatpush1.bf16.msra.mxu0 %v462
      %498 = vmatprep.subr.bf16.mxu0 %v461
      %499 = vmatpush1.bf16.msra.mxu0 %v460
      %500 = vmatprep.subr.bf16.mxu0 %v459
      %501 = vmatpush1.bf16.msra.mxu0 %v458
      %502 = vmatprep.subr.bf16.mxu0 0
      %503 = vmatpush2.bf16.msra.mxu0 0
      %504 = vmatprep.subr.bf16.mxu0 0
      %505 = vmatpush2.bf16.msra.mxu0 0
      %506 = vmatprep.subr.bf16.mxu0 0
      %507 = vmatpush2.bf16.msra.mxu0 0
      %508 = vmatprep.subr.bf16.mxu0 0
      %509 = vmatpush2.bf16.msra.mxu0 0
      %510 = vmatprep.subr.bf16.mxu0 0
      %511 = vmatpush2.bf16.msra.mxu0 0
      %512 = vmatprep.subr.bf16.mxu0 0
      %513 = vmatpush2.bf16.msra.mxu0 0
      %514 = vmatprep.subr.bf16.mxu0 0
      %515 = vmatpush2.bf16.msra.mxu0 0
      %516 = vmatprep.subr.bf16.mxu0 0
      %517 = vmatpush2.bf16.msra.mxu0 0
      %518 = vmatprep.mubr.bf16.mxu0 0
      %519 = vmatmul.mubr.bf16.gmra.mxu0 %v475
      %v520 = vpop.f32.mrf.mxu0
      %v521 = vadd.f32 %v376, %v520
      %v522 = vpop.f32.mrf.mxu0
      %v523 = vadd.f32 %v378, %v522
      %v524 = vpop.f32.mrf.mxu0
      %v525 = vadd.f32 %v380, %v524
      %v526 = vpop.f32.mrf.mxu0
      %v527 = vadd.f32 %v382, %v526
      %528 = vmatprep.mubr.bf16.mxu0 0
      %529 = vmatmul.mubr.bf16.gmra.mxu0 %v478
      %v530 = vpop.f32.mrf.mxu0
      %v531 = vadd.f32 %v386, %v530
      %v532 = vpop.f32.mrf.mxu0
      %v533 = vadd.f32 %v388, %v532
      %v534 = vpop.f32.mrf.mxu0
      %v535 = vadd.f32 %v390, %v534
      %v536 = vpop.f32.mrf.mxu0
      %v537 = vadd.f32 %v392, %v536
      %538 = vmatprep.mubr.bf16.mxu0 0
      %539 = vmatmul.mubr.bf16.gmra.mxu0 %v481
      %v540 = vpop.f32.mrf.mxu0
      %v541 = vadd.f32 %v396, %v540
      %v542 = vpop.f32.mrf.mxu0
      %v543 = vadd.f32 %v398, %v542
      %v544 = vpop.f32.mrf.mxu0
      %v545 = vadd.f32 %v400, %v544
      %v546 = vpop.f32.mrf.mxu0
      %v547 = vadd.f32 %v402, %v546
      %548 = vmatprep.mubr.bf16.mxu0 0
      %549 = vmatmul.mubr.bf16.gmra.mxu0 %v484
      %v550 = vpop.f32.mrf.mxu0
      %v551 = vadd.f32 %v406, %v550
      %v552 = vpop.f32.mrf.mxu0
      %v553 = vadd.f32 %v408, %v552
      %v554 = vpop.f32.mrf.mxu0
      %v555 = vadd.f32 %v410, %v554
      %v556 = vpop.f32.mrf.mxu0
      %v557 = vadd.f32 %v412, %v556
      %558 = vdwg.mxu0
      %s559 = sadd.s32 %s228, 108
      %s560 = smul.addr %s559, 4
      %s561 = scalar_lea.vmem %s212, %s560
      %v562 = vld [vmem:[%s561] sm:$0xf]
      %v563 = vld [vmem:[%s561 + $0x4] sm:$0xf]
      %v564 = vld [vmem:[%s561 + $0x8] sm:$0xf]
      %v565 = vld [vmem:[%s561 + $0xc] sm:$0xf]
      %v566 = vld [vmem:[%s561 + $0x10] sm:$0xf]
      %v567 = vld [vmem:[%s561 + $0x14] sm:$0xf]
      %v568 = vld [vmem:[%s561 + $0x18] sm:$0xf]
      %v569 = vld [vmem:[%s561 + $0x1c] sm:$0xf]
      %s570 = scalar_lea.vmem %s1, 128
      %v571 = vld [vmem:[%s570] sm:$0xff]
      %v572 = vld [vmem:[%s570 + $0x8] sm:$0xff]
      %v573 = vld [vmem:[%s570 + $0x10] sm:$0xff]
      %v574 = vld [vmem:[%s570 + $0x18] sm:$0xff]
      %v575 = vld [vmem:[%s570 + $0x20] sm:$0xff]
      %v576 = vld [vmem:[%s570 + $0x28] sm:$0xff]
      %v577 = vld [vmem:[%s570 + $0x30] sm:$0xff]
      %v578 = vld [vmem:[%s570 + $0x38] sm:$0xff]
      %v587 = vunpack.c.l.b16 %v562
      %v588 = vunpack.c.l.b16 %v563
      %v589 = vunpack.c.l.b16 %v564
      %v590 = vunpack.c.l.b16 %v565
      %v591 = vunpack.c.l.b16 %v566
      %v592 = vunpack.c.l.b16 %v567
      %v593 = vunpack.c.l.b16 %v568
      %v594 = vunpack.c.l.b16 %v569
      %v595 = vpack.c.b16 %v588, %v587
      %v596 = vpack.c.b16 %v590, %v589
      %v597 = vpack.c.b16 %v592, %v591
      %v598 = vpack.c.b16 %v594, %v593
      %v607 = vunpack.c.l.b16 %v571
      %v608 = vunpack.c.h.b16 %v571
      %v609 = vunpack.c.l.b16 %v572
      %v610 = vunpack.c.h.b16 %v572
      %v611 = vunpack.c.l.b16 %v573
      %v612 = vunpack.c.h.b16 %v573
      %v613 = vunpack.c.l.b16 %v574
      %v614 = vunpack.c.h.b16 %v574
      %v615 = vunpack.c.l.b16 %v575
      %v616 = vunpack.c.h.b16 %v575
      %v617 = vunpack.c.l.b16 %v576
      %v618 = vunpack.c.h.b16 %v576
      %v619 = vunpack.c.l.b16 %v577
      %v620 = vunpack.c.h.b16 %v577
      %v621 = vunpack.c.l.b16 %v578
      %v622 = vunpack.c.h.b16 %v578
      %v623 = vpack.c.b16 %v609, %v607
      %v624 = vpack.c.b16 %v610, %v608
      %v625 = vpack.c.b16 %v613, %v611
      %v626 = vpack.c.b16 %v614, %v612
      %v627 = vpack.c.b16 %v617, %v615
      %v628 = vpack.c.b16 %v618, %v616
      %v629 = vpack.c.b16 %v621, %v619
      %v630 = vpack.c.b16 %v622, %v620
      %v640 = vsel %vm328, %v595, 0
      %v643 = vsel %vm328, %v596, 0
      %v646 = vsel %vm328, %v597, 0
      %v649 = vsel %vm328, %v598, 0
      %651 = vmatprep.subr.bf16.mxu0 0
      %652 = vmatpush1.bf16.msra.mxu0 0
      %653 = vmatprep.subr.bf16.mxu0 0
      %654 = vmatpush1.bf16.msra.mxu0 0
      %655 = vmatprep.subr.bf16.mxu0 0
      %656 = vmatpush1.bf16.msra.mxu0 0
      %657 = vmatprep.subr.bf16.mxu0 0
      %658 = vmatpush1.bf16.msra.mxu0 0
      %659 = vmatprep.subr.bf16.mxu0 %v630
      %660 = vmatpush1.bf16.msra.mxu0 %v629
      %661 = vmatprep.subr.bf16.mxu0 %v628
      %662 = vmatpush1.bf16.msra.mxu0 %v627
      %663 = vmatprep.subr.bf16.mxu0 %v626
      %664 = vmatpush1.bf16.msra.mxu0 %v625
      %665 = vmatprep.subr.bf16.mxu0 %v624
      %666 = vmatpush1.bf16.msra.mxu0 %v623
      %667 = vmatprep.subr.bf16.mxu0 0
      %668 = vmatpush2.bf16.msra.mxu0 0
      %669 = vmatprep.subr.bf16.mxu0 0
      %670 = vmatpush2.bf16.msra.mxu0 0
      %671 = vmatprep.subr.bf16.mxu0 0
      %672 = vmatpush2.bf16.msra.mxu0 0
      %673 = vmatprep.subr.bf16.mxu0 0
      %674 = vmatpush2.bf16.msra.mxu0 0
      %675 = vmatprep.subr.bf16.mxu0 0
      %676 = vmatpush2.bf16.msra.mxu0 0
      %677 = vmatprep.subr.bf16.mxu0 0
      %678 = vmatpush2.bf16.msra.mxu0 0
      %679 = vmatprep.subr.bf16.mxu0 0
      %680 = vmatpush2.bf16.msra.mxu0 0
      %681 = vmatprep.subr.bf16.mxu0 0
      %682 = vmatpush2.bf16.msra.mxu0 0
      %683 = vmatprep.mubr.bf16.mxu0 0
      %684 = vmatmul.mubr.bf16.gmra.mxu0 %v640
      %v685 = vpop.f32.mrf.mxu0
      %v686 = vadd.f32 0.0, %v685
      %v687 = vpop.f32.mrf.mxu0
      %v688 = vadd.f32 0.0, %v687
      %v689 = vpop.f32.mrf.mxu0
      %v690 = vadd.f32 0.0, %v689
      %v691 = vpop.f32.mrf.mxu0
      %v692 = vadd.f32 0.0, %v691
      %693 = vmatprep.mubr.bf16.mxu0 0
      %694 = vmatmul.mubr.bf16.gmra.mxu0 %v643
      %v695 = vpop.f32.mrf.mxu0
      %v696 = vadd.f32 0.0, %v695
      %v697 = vpop.f32.mrf.mxu0
      %v698 = vadd.f32 0.0, %v697
      %v699 = vpop.f32.mrf.mxu0
      %v700 = vadd.f32 0.0, %v699
      %v701 = vpop.f32.mrf.mxu0
      %v702 = vadd.f32 0.0, %v701
      %703 = vmatprep.mubr.bf16.mxu0 0
      %704 = vmatmul.mubr.bf16.gmra.mxu0 %v646
      %v705 = vpop.f32.mrf.mxu0
      %v706 = vadd.f32 0.0, %v705
      %v707 = vpop.f32.mrf.mxu0
      %v708 = vadd.f32 0.0, %v707
      %v709 = vpop.f32.mrf.mxu0
      %v710 = vadd.f32 0.0, %v709
      %v711 = vpop.f32.mrf.mxu0
      %v712 = vadd.f32 0.0, %v711
      %713 = vmatprep.mubr.bf16.mxu0 0
      %714 = vmatmul.mubr.bf16.gmra.mxu0 %v649
      %v715 = vpop.f32.mrf.mxu0
      %v716 = vadd.f32 0.0, %v715
      %v717 = vpop.f32.mrf.mxu0
      %v718 = vadd.f32 0.0, %v717
      %v719 = vpop.f32.mrf.mxu0
      %v720 = vadd.f32 0.0, %v719
      %v721 = vpop.f32.mrf.mxu0
      %v722 = vadd.f32 0.0, %v721
      %723 = vdwg.mxu0
      %v724 = vadd.f32 %v521, %v686
      %v725 = vadd.f32 %v523, %v688
      %v726 = vadd.f32 %v525, %v690
      %v727 = vadd.f32 %v527, %v692
      %v728 = vadd.f32 %v531, %v696
      %v729 = vadd.f32 %v533, %v698
      %v730 = vadd.f32 %v535, %v700
      %v731 = vadd.f32 %v537, %v702
      %v732 = vadd.f32 %v541, %v706
      %v733 = vadd.f32 %v543, %v708
      %v734 = vadd.f32 %v545, %v710
      %v735 = vadd.f32 %v547, %v712
      %v736 = vadd.f32 %v551, %v716
      %v737 = vadd.f32 %v553, %v718
      %v738 = vadd.f32 %v555, %v720
      %v739 = vadd.f32 %v557, %v722
      %s740 = sadd.s32 %s225, 24
      %s741 = sshra.s32 %s740, 3
      %s742 = sand.u32 %s740, 7
      %s743 = smul.addr %s741, 4
      %s744 = scalar_lea.vmem %s212, %s743
      %v745 = vld [vmem:[%s744] sm:$0xf]
      %v746 = vld [vmem:[%s744 + $0x4] sm:$0xf]
      %v747 = vld [vmem:[%s744 + $0x8] sm:$0xf]
      %v748 = vld [vmem:[%s744 + $0xc] sm:$0xf]
      %v749 = vld [vmem:[%s744 + $0x10] sm:$0xf]
      %v750 = vld [vmem:[%s744 + $0x14] sm:$0xf]
      %v751 = vld [vmem:[%s744 + $0x18] sm:$0xf]
      %v752 = vld [vmem:[%s744 + $0x1c] sm:$0xf]
      %s753 = scalar_lea.vmem %s1, 192
      %v754 = vld [vmem:[%s753] sm:$0xff]
      %v755 = vld [vmem:[%s753 + $0x8] sm:$0xff]
      %v756 = vld [vmem:[%s753 + $0x10] sm:$0xff]
      %v757 = vld [vmem:[%s753 + $0x18] sm:$0xff]
      %v758 = vld [vmem:[%s753 + $0x20] sm:$0xff]
      %v759 = vld [vmem:[%s753 + $0x28] sm:$0xff]
      %v760 = vld [vmem:[%s753 + $0x30] sm:$0xff]
      %v761 = vld [vmem:[%s753 + $0x38] sm:$0xff]
      %v770 = vunpack.c.l.b16 %v745
      %v771 = vunpack.c.l.b16 %v746
      %v772 = vunpack.c.l.b16 %v747
      %v773 = vunpack.c.l.b16 %v748
      %v774 = vunpack.c.l.b16 %v749
      %v775 = vunpack.c.l.b16 %v750
      %v776 = vunpack.c.l.b16 %v751
      %v777 = vunpack.c.l.b16 %v752
      %v778 = vpack.c.b16 %v771, %v770
      %v779 = vpack.c.b16 %v773, %v772
      %v780 = vpack.c.b16 %v775, %v774
      %v781 = vpack.c.b16 %v777, %v776
      %v790 = vunpack.c.l.b16 %v754
      %v791 = vunpack.c.h.b16 %v754
      %v792 = vunpack.c.l.b16 %v755
      %v793 = vunpack.c.h.b16 %v755
      %v794 = vunpack.c.l.b16 %v756
      %v795 = vunpack.c.h.b16 %v756
      %v796 = vunpack.c.l.b16 %v757
      %v797 = vunpack.c.h.b16 %v757
      %v798 = vunpack.c.l.b16 %v758
      %v799 = vunpack.c.h.b16 %v758
      %v800 = vunpack.c.l.b16 %v759
      %v801 = vunpack.c.h.b16 %v759
      %v802 = vunpack.c.l.b16 %v760
      %v803 = vunpack.c.h.b16 %v760
      %v804 = vunpack.c.l.b16 %v761
      %v805 = vunpack.c.h.b16 %v761
      %v806 = vpack.c.b16 %v792, %v790
      %v807 = vpack.c.b16 %v793, %v791
      %v808 = vpack.c.b16 %v796, %v794
      %v809 = vpack.c.b16 %v797, %v795
      %v810 = vpack.c.b16 %v800, %v798
      %v811 = vpack.c.b16 %v801, %v799
      %v812 = vpack.c.b16 %v804, %v802
      %v813 = vpack.c.b16 %v805, %v803
      %v823 = vsel %vm328, %v778, 0
      %v826 = vsel %vm328, %v779, 0
      %v829 = vsel %vm328, %v780, 0
      %v832 = vsel %vm328, %v781, 0
      %834 = vmatprep.subr.bf16.mxu0 0
      %835 = vmatpush1.bf16.msra.mxu0 0
      %836 = vmatprep.subr.bf16.mxu0 0
      %837 = vmatpush1.bf16.msra.mxu0 0
      %838 = vmatprep.subr.bf16.mxu0 0
      %839 = vmatpush1.bf16.msra.mxu0 0
      %840 = vmatprep.subr.bf16.mxu0 0
      %841 = vmatpush1.bf16.msra.mxu0 0
      %842 = vmatprep.subr.bf16.mxu0 %v813
      %843 = vmatpush1.bf16.msra.mxu0 %v812
      %844 = vmatprep.subr.bf16.mxu0 %v811
      %845 = vmatpush1.bf16.msra.mxu0 %v810
      %846 = vmatprep.subr.bf16.mxu0 %v809
      %847 = vmatpush1.bf16.msra.mxu0 %v808
      %848 = vmatprep.subr.bf16.mxu0 %v807
      %849 = vmatpush1.bf16.msra.mxu0 %v806
      %850 = vmatprep.subr.bf16.mxu0 0
      %851 = vmatpush2.bf16.msra.mxu0 0
      %852 = vmatprep.subr.bf16.mxu0 0
      %853 = vmatpush2.bf16.msra.mxu0 0
      %854 = vmatprep.subr.bf16.mxu0 0
      %855 = vmatpush2.bf16.msra.mxu0 0
      %856 = vmatprep.subr.bf16.mxu0 0
      %857 = vmatpush2.bf16.msra.mxu0 0
      %858 = vmatprep.subr.bf16.mxu0 0
      %859 = vmatpush2.bf16.msra.mxu0 0
      %860 = vmatprep.subr.bf16.mxu0 0
      %861 = vmatpush2.bf16.msra.mxu0 0
      %862 = vmatprep.subr.bf16.mxu0 0
      %863 = vmatpush2.bf16.msra.mxu0 0
      %864 = vmatprep.subr.bf16.mxu0 0
      %865 = vmatpush2.bf16.msra.mxu0 0
      %866 = vmatprep.mubr.bf16.mxu0 0
      %867 = vmatmul.mubr.bf16.gmra.mxu0 %v823
      %v868 = vpop.f32.mrf.mxu0
      %v869 = vadd.f32 0.0, %v868
      %v870 = vpop.f32.mrf.mxu0
      %v871 = vadd.f32 0.0, %v870
      %v872 = vpop.f32.mrf.mxu0
      %v873 = vadd.f32 0.0, %v872
      %v874 = vpop.f32.mrf.mxu0
      %v875 = vadd.f32 0.0, %v874
      %876 = vmatprep.mubr.bf16.mxu0 0
      %877 = vmatmul.mubr.bf16.gmra.mxu0 %v826
      %v878 = vpop.f32.mrf.mxu0
      %v879 = vadd.f32 0.0, %v878
      %v880 = vpop.f32.mrf.mxu0
      %v881 = vadd.f32 0.0, %v880
      %v882 = vpop.f32.mrf.mxu0
      %v883 = vadd.f32 0.0, %v882
      %v884 = vpop.f32.mrf.mxu0
      %v885 = vadd.f32 0.0, %v884
      %886 = vmatprep.mubr.bf16.mxu0 0
      %887 = vmatmul.mubr.bf16.gmra.mxu0 %v829
      %v888 = vpop.f32.mrf.mxu0
      %v889 = vadd.f32 0.0, %v888
      %v890 = vpop.f32.mrf.mxu0
      %v891 = vadd.f32 0.0, %v890
      %v892 = vpop.f32.mrf.mxu0
      %v893 = vadd.f32 0.0, %v892
      %v894 = vpop.f32.mrf.mxu0
      %v895 = vadd.f32 0.0, %v894
      %896 = vmatprep.mubr.bf16.mxu0 0
      %897 = vmatmul.mubr.bf16.gmra.mxu0 %v832
      %v898 = vpop.f32.mrf.mxu0
      %v899 = vadd.f32 0.0, %v898
      %v900 = vpop.f32.mrf.mxu0
      %v901 = vadd.f32 0.0, %v900
      %v902 = vpop.f32.mrf.mxu0
      %v903 = vadd.f32 0.0, %v902
      %v904 = vpop.f32.mrf.mxu0
      %v905 = vadd.f32 0.0, %v904
      %906 = vdwg.mxu0
      %v907 = vadd.f32 %v724, %v869
      %v908 = vadd.f32 %v725, %v871
      %v909 = vadd.f32 %v726, %v873
      %v910 = vadd.f32 %v727, %v875
      %v911 = vadd.f32 %v728, %v879
      %v912 = vadd.f32 %v729, %v881
      %v913 = vadd.f32 %v730, %v883
      %v914 = vadd.f32 %v731, %v885
      %v915 = vadd.f32 %v732, %v889
      %v916 = vadd.f32 %v733, %v891
      %v917 = vadd.f32 %v734, %v893
      %v918 = vadd.f32 %v735, %v895
      %v919 = vadd.f32 %v736, %v899
      %v920 = vadd.f32 %v737, %v901
      %v921 = vadd.f32 %v738, %v903
      %v922 = vadd.f32 %v739, %v905
      %s923 = sadd.s32 %s741, 54
      %s924 = smul.addr %s923, 4
      %s925 = scalar_lea.vmem %s212, %s924
      %v926 = vld [vmem:[%s925] sm:$0xf]
      %v927 = vld [vmem:[%s925 + $0x4] sm:$0xf]
      %v928 = vld [vmem:[%s925 + $0x8] sm:$0xf]
      %v929 = vld [vmem:[%s925 + $0xc] sm:$0xf]
      %v930 = vld [vmem:[%s925 + $0x10] sm:$0xf]
      %v931 = vld [vmem:[%s925 + $0x14] sm:$0xf]
      %v932 = vld [vmem:[%s925 + $0x18] sm:$0xf]
      %v933 = vld [vmem:[%s925 + $0x1c] sm:$0xf]
      %s934 = scalar_lea.vmem %s1, 256
      %v935 = vld [vmem:[%s934] sm:$0xff]
      %v936 = vld [vmem:[%s934 + $0x8] sm:$0xff]
      %v937 = vld [vmem:[%s934 + $0x10] sm:$0xff]
      %v938 = vld [vmem:[%s934 + $0x18] sm:$0xff]
      %v939 = vld [vmem:[%s934 + $0x20] sm:$0xff]
      %v940 = vld [vmem:[%s934 + $0x28] sm:$0xff]
      %v941 = vld [vmem:[%s934 + $0x30] sm:$0xff]
      %v942 = vld [vmem:[%s934 + $0x38] sm:$0xff]
      %v951 = vunpack.c.l.b16 %v926
      %v952 = vunpack.c.l.b16 %v927
      %v953 = vunpack.c.l.b16 %v928
      %v954 = vunpack.c.l.b16 %v929
      %v955 = vunpack.c.l.b16 %v930
      %v956 = vunpack.c.l.b16 %v931
      %v957 = vunpack.c.l.b16 %v932
      %v958 = vunpack.c.l.b16 %v933
      %v959 = vpack.c.b16 %v952, %v951
      %v960 = vpack.c.b16 %v954, %v953
      %v961 = vpack.c.b16 %v956, %v955
      %v962 = vpack.c.b16 %v958, %v957
      %v971 = vunpack.c.l.b16 %v935
      %v972 = vunpack.c.h.b16 %v935
      %v973 = vunpack.c.l.b16 %v936
      %v974 = vunpack.c.h.b16 %v936
      %v975 = vunpack.c.l.b16 %v937
      %v976 = vunpack.c.h.b16 %v937
      %v977 = vunpack.c.l.b16 %v938
      %v978 = vunpack.c.h.b16 %v938
      %v979 = vunpack.c.l.b16 %v939
      %v980 = vunpack.c.h.b16 %v939
      %v981 = vunpack.c.l.b16 %v940
      %v982 = vunpack.c.h.b16 %v940
      %v983 = vunpack.c.l.b16 %v941
      %v984 = vunpack.c.h.b16 %v941
      %v985 = vunpack.c.l.b16 %v942
      %v986 = vunpack.c.h.b16 %v942
      %v987 = vpack.c.b16 %v973, %v971
      %v988 = vpack.c.b16 %v974, %v972
      %v989 = vpack.c.b16 %v977, %v975
      %v990 = vpack.c.b16 %v978, %v976
      %v991 = vpack.c.b16 %v981, %v979
      %v992 = vpack.c.b16 %v982, %v980
      %v993 = vpack.c.b16 %v985, %v983
      %v994 = vpack.c.b16 %v986, %v984
      %v1004 = vsel %vm328, %v959, 0
      %v1007 = vsel %vm328, %v960, 0
      %v1010 = vsel %vm328, %v961, 0
      %v1013 = vsel %vm328, %v962, 0
      %1015 = vmatprep.subr.bf16.mxu0 0
      %1016 = vmatpush1.bf16.msra.mxu0 0
      %1017 = vmatprep.subr.bf16.mxu0 0
      %1018 = vmatpush1.bf16.msra.mxu0 0
      %1019 = vmatprep.subr.bf16.mxu0 0
      %1020 = vmatpush1.bf16.msra.mxu0 0
      %1021 = vmatprep.subr.bf16.mxu0 0
      %1022 = vmatpush1.bf16.msra.mxu0 0
      %1023 = vmatprep.subr.bf16.mxu0 %v994
      %1024 = vmatpush1.bf16.msra.mxu0 %v993
      %1025 = vmatprep.subr.bf16.mxu0 %v992
      %1026 = vmatpush1.bf16.msra.mxu0 %v991
      %1027 = vmatprep.subr.bf16.mxu0 %v990
      %1028 = vmatpush1.bf16.msra.mxu0 %v989
      %1029 = vmatprep.subr.bf16.mxu0 %v988
      %1030 = vmatpush1.bf16.msra.mxu0 %v987
      %1031 = vmatprep.subr.bf16.mxu0 0
      %1032 = vmatpush2.bf16.msra.mxu0 0
      %1033 = vmatprep.subr.bf16.mxu0 0
      %1034 = vmatpush2.bf16.msra.mxu0 0
      %1035 = vmatprep.subr.bf16.mxu0 0
      %1036 = vmatpush2.bf16.msra.mxu0 0
      %1037 = vmatprep.subr.bf16.mxu0 0
      %1038 = vmatpush2.bf16.msra.mxu0 0
      %1039 = vmatprep.subr.bf16.mxu0 0
      %1040 = vmatpush2.bf16.msra.mxu0 0
      %1041 = vmatprep.subr.bf16.mxu0 0
      %1042 = vmatpush2.bf16.msra.mxu0 0
      %1043 = vmatprep.subr.bf16.mxu0 0
      %1044 = vmatpush2.bf16.msra.mxu0 0
      %1045 = vmatprep.subr.bf16.mxu0 0
      %1046 = vmatpush2.bf16.msra.mxu0 0
      %1047 = vmatprep.mubr.bf16.mxu0 0
      %1048 = vmatmul.mubr.bf16.gmra.mxu0 %v1004
      %v1049 = vpop.f32.mrf.mxu0
      %v1050 = vadd.f32 0.0, %v1049
      %v1051 = vpop.f32.mrf.mxu0
      %v1052 = vadd.f32 0.0, %v1051
      %v1053 = vpop.f32.mrf.mxu0
      %v1054 = vadd.f32 0.0, %v1053
      %v1055 = vpop.f32.mrf.mxu0
      %v1056 = vadd.f32 0.0, %v1055
      %1057 = vmatprep.mubr.bf16.mxu0 0
      %1058 = vmatmul.mubr.bf16.gmra.mxu0 %v1007
      %v1059 = vpop.f32.mrf.mxu0
      %v1060 = vadd.f32 0.0, %v1059
      %v1061 = vpop.f32.mrf.mxu0
      %v1062 = vadd.f32 0.0, %v1061
      %v1063 = vpop.f32.mrf.mxu0
      %v1064 = vadd.f32 0.0, %v1063
      %v1065 = vpop.f32.mrf.mxu0
      %v1066 = vadd.f32 0.0, %v1065
      %1067 = vmatprep.mubr.bf16.mxu0 0
      %1068 = vmatmul.mubr.bf16.gmra.mxu0 %v1010
      %v1069 = vpop.f32.mrf.mxu0
      %v1070 = vadd.f32 0.0, %v1069
      %v1071 = vpop.f32.mrf.mxu0
      %v1072 = vadd.f32 0.0, %v1071
      %v1073 = vpop.f32.mrf.mxu0
      %v1074 = vadd.f32 0.0, %v1073
      %v1075 = vpop.f32.mrf.mxu0
      %v1076 = vadd.f32 0.0, %v1075
      %1077 = vmatprep.mubr.bf16.mxu0 0
      %1078 = vmatmul.mubr.bf16.gmra.mxu0 %v1013
      %v1079 = vpop.f32.mrf.mxu0
      %v1080 = vadd.f32 0.0, %v1079
      %v1081 = vpop.f32.mrf.mxu0
      %v1082 = vadd.f32 0.0, %v1081
      %v1083 = vpop.f32.mrf.mxu0
      %v1084 = vadd.f32 0.0, %v1083
      %v1085 = vpop.f32.mrf.mxu0
      %v1086 = vadd.f32 0.0, %v1085
      %1087 = vdwg.mxu0
      %v1088 = vadd.f32 %v907, %v1050
      %v1089 = vadd.f32 %v908, %v1052
      %v1090 = vadd.f32 %v909, %v1054
      %v1091 = vadd.f32 %v910, %v1056
      %v1092 = vadd.f32 %v911, %v1060
      %v1093 = vadd.f32 %v912, %v1062
      %v1094 = vadd.f32 %v913, %v1064
      %v1095 = vadd.f32 %v914, %v1066
      %v1096 = vadd.f32 %v915, %v1070
      %v1097 = vadd.f32 %v916, %v1072
      %v1098 = vadd.f32 %v917, %v1074
      %v1099 = vadd.f32 %v918, %v1076
      %v1100 = vadd.f32 %v919, %v1080
      %v1101 = vadd.f32 %v920, %v1082
      %v1102 = vadd.f32 %v921, %v1084
      %v1103 = vadd.f32 %v922, %v1086
      %s1104 = sadd.s32 %s741, 108
      %s1105 = smul.addr %s1104, 4
      %s1106 = scalar_lea.vmem %s212, %s1105
      %v1107 = vld [vmem:[%s1106] sm:$0xf]
      %v1108 = vld [vmem:[%s1106 + $0x4] sm:$0xf]
      %v1109 = vld [vmem:[%s1106 + $0x8] sm:$0xf]
      %v1110 = vld [vmem:[%s1106 + $0xc] sm:$0xf]
      %v1111 = vld [vmem:[%s1106 + $0x10] sm:$0xf]
      %v1112 = vld [vmem:[%s1106 + $0x14] sm:$0xf]
      %v1113 = vld [vmem:[%s1106 + $0x18] sm:$0xf]
      %v1114 = vld [vmem:[%s1106 + $0x1c] sm:$0xf]
      %s1115 = scalar_lea.vmem %s1, 320
      %v1116 = vld [vmem:[%s1115] sm:$0xff]
      %v1117 = vld [vmem:[%s1115 + $0x8] sm:$0xff]
      %v1118 = vld [vmem:[%s1115 + $0x10] sm:$0xff]
      %v1119 = vld [vmem:[%s1115 + $0x18] sm:$0xff]
      %v1120 = vld [vmem:[%s1115 + $0x20] sm:$0xff]
      %v1121 = vld [vmem:[%s1115 + $0x28] sm:$0xff]
      %v1122 = vld [vmem:[%s1115 + $0x30] sm:$0xff]
      %v1123 = vld [vmem:[%s1115 + $0x38] sm:$0xff]
      %v1132 = vunpack.c.l.b16 %v1107
      %v1133 = vunpack.c.l.b16 %v1108
      %v1134 = vunpack.c.l.b16 %v1109
      %v1135 = vunpack.c.l.b16 %v1110
      %v1136 = vunpack.c.l.b16 %v1111
      %v1137 = vunpack.c.l.b16 %v1112
      %v1138 = vunpack.c.l.b16 %v1113
      %v1139 = vunpack.c.l.b16 %v1114
      %v1140 = vpack.c.b16 %v1133, %v1132
      %v1141 = vpack.c.b16 %v1135, %v1134
      %v1142 = vpack.c.b16 %v1137, %v1136
      %v1143 = vpack.c.b16 %v1139, %v1138
      %v1152 = vunpack.c.l.b16 %v1116
      %v1153 = vunpack.c.h.b16 %v1116
      %v1154 = vunpack.c.l.b16 %v1117
      %v1155 = vunpack.c.h.b16 %v1117
      %v1156 = vunpack.c.l.b16 %v1118
      %v1157 = vunpack.c.h.b16 %v1118
      %v1158 = vunpack.c.l.b16 %v1119
      %v1159 = vunpack.c.h.b16 %v1119
      %v1160 = vunpack.c.l.b16 %v1120
      %v1161 = vunpack.c.h.b16 %v1120
      %v1162 = vunpack.c.l.b16 %v1121
      %v1163 = vunpack.c.h.b16 %v1121
      %v1164 = vunpack.c.l.b16 %v1122
      %v1165 = vunpack.c.h.b16 %v1122
      %v1166 = vunpack.c.l.b16 %v1123
      %v1167 = vunpack.c.h.b16 %v1123
      %v1168 = vpack.c.b16 %v1154, %v1152
      %v1169 = vpack.c.b16 %v1155, %v1153
      %v1170 = vpack.c.b16 %v1158, %v1156
      %v1171 = vpack.c.b16 %v1159, %v1157
      %v1172 = vpack.c.b16 %v1162, %v1160
      %v1173 = vpack.c.b16 %v1163, %v1161
      %v1174 = vpack.c.b16 %v1166, %v1164
      %v1175 = vpack.c.b16 %v1167, %v1165
      %v1185 = vsel %vm328, %v1140, 0
      %v1188 = vsel %vm328, %v1141, 0
      %v1191 = vsel %vm328, %v1142, 0
      %v1194 = vsel %vm328, %v1143, 0
      %1196 = vmatprep.subr.bf16.mxu0 0
      %1197 = vmatpush1.bf16.msra.mxu0 0
      %1198 = vmatprep.subr.bf16.mxu0 0
      %1199 = vmatpush1.bf16.msra.mxu0 0
      %1200 = vmatprep.subr.bf16.mxu0 0
      %1201 = vmatpush1.bf16.msra.mxu0 0
      %1202 = vmatprep.subr.bf16.mxu0 0
      %1203 = vmatpush1.bf16.msra.mxu0 0
      %1204 = vmatprep.subr.bf16.mxu0 %v1175
      %1205 = vmatpush1.bf16.msra.mxu0 %v1174
      %1206 = vmatprep.subr.bf16.mxu0 %v1173
      %1207 = vmatpush1.bf16.msra.mxu0 %v1172
      %1208 = vmatprep.subr.bf16.mxu0 %v1171
      %1209 = vmatpush1.bf16.msra.mxu0 %v1170
      %1210 = vmatprep.subr.bf16.mxu0 %v1169
      %1211 = vmatpush1.bf16.msra.mxu0 %v1168
      %1212 = vmatprep.subr.bf16.mxu0 0
      %1213 = vmatpush2.bf16.msra.mxu0 0
      %1214 = vmatprep.subr.bf16.mxu0 0
      %1215 = vmatpush2.bf16.msra.mxu0 0
      %1216 = vmatprep.subr.bf16.mxu0 0
      %1217 = vmatpush2.bf16.msra.mxu0 0
      %1218 = vmatprep.subr.bf16.mxu0 0
      %1219 = vmatpush2.bf16.msra.mxu0 0
      %1220 = vmatprep.subr.bf16.mxu0 0
      %1221 = vmatpush2.bf16.msra.mxu0 0
      %1222 = vmatprep.subr.bf16.mxu0 0
      %1223 = vmatpush2.bf16.msra.mxu0 0
      %1224 = vmatprep.subr.bf16.mxu0 0
      %1225 = vmatpush2.bf16.msra.mxu0 0
      %1226 = vmatprep.subr.bf16.mxu0 0
      %1227 = vmatpush2.bf16.msra.mxu0 0
      %1228 = vmatprep.mubr.bf16.mxu0 0
      %1229 = vmatmul.mubr.bf16.gmra.mxu0 %v1185
      %v1230 = vpop.f32.mrf.mxu0
      %v1231 = vadd.f32 0.0, %v1230
      %v1232 = vpop.f32.mrf.mxu0
      %v1233 = vadd.f32 0.0, %v1232
      %v1234 = vpop.f32.mrf.mxu0
      %v1235 = vadd.f32 0.0, %v1234
      %v1236 = vpop.f32.mrf.mxu0
      %v1237 = vadd.f32 0.0, %v1236
      %1238 = vmatprep.mubr.bf16.mxu0 0
      %1239 = vmatmul.mubr.bf16.gmra.mxu0 %v1188
      %v1240 = vpop.f32.mrf.mxu0
      %v1241 = vadd.f32 0.0, %v1240
      %v1242 = vpop.f32.mrf.mxu0
      %v1243 = vadd.f32 0.0, %v1242
      %v1244 = vpop.f32.mrf.mxu0
      %v1245 = vadd.f32 0.0, %v1244
      %v1246 = vpop.f32.mrf.mxu0
      %v1247 = vadd.f32 0.0, %v1246
      %1248 = vmatprep.mubr.bf16.mxu0 0
      %1249 = vmatmul.mubr.bf16.gmra.mxu0 %v1191
      %v1250 = vpop.f32.mrf.mxu0
      %v1251 = vadd.f32 0.0, %v1250
      %v1252 = vpop.f32.mrf.mxu0
      %v1253 = vadd.f32 0.0, %v1252
      %v1254 = vpop.f32.mrf.mxu0
      %v1255 = vadd.f32 0.0, %v1254
      %v1256 = vpop.f32.mrf.mxu0
      %v1257 = vadd.f32 0.0, %v1256
      %1258 = vmatprep.mubr.bf16.mxu0 0
      %1259 = vmatmul.mubr.bf16.gmra.mxu0 %v1194
      %v1260 = vpop.f32.mrf.mxu0
      %v1261 = vadd.f32 0.0, %v1260
      %v1262 = vpop.f32.mrf.mxu0
      %v1263 = vadd.f32 0.0, %v1262
      %v1264 = vpop.f32.mrf.mxu0
      %v1265 = vadd.f32 0.0, %v1264
      %v1266 = vpop.f32.mrf.mxu0
      %v1267 = vadd.f32 0.0, %v1266
      %1268 = vdwg.mxu0
      %v1269 = vadd.f32 %v1088, %v1231
      %v1270 = vadd.f32 %v1089, %v1233
      %v1271 = vadd.f32 %v1090, %v1235
      %v1272 = vadd.f32 %v1091, %v1237
      %v1273 = vadd.f32 %v1092, %v1241
      %v1274 = vadd.f32 %v1093, %v1243
      %v1275 = vadd.f32 %v1094, %v1245
      %v1276 = vadd.f32 %v1095, %v1247
      %v1277 = vadd.f32 %v1096, %v1251
      %v1278 = vadd.f32 %v1097, %v1253
      %v1279 = vadd.f32 %v1098, %v1255
      %v1280 = vadd.f32 %v1099, %v1257
      %v1281 = vadd.f32 %v1100, %v1261
      %v1282 = vadd.f32 %v1101, %v1263
      %v1283 = vadd.f32 %v1102, %v1265
      %v1284 = vadd.f32 %v1103, %v1267
      %s1285 = sadd.s32 %s225, 48
      %s1286 = sshra.s32 %s1285, 3
      %s1287 = sand.u32 %s1285, 7
      %s1288 = smul.addr %s1286, 4
      %s1289 = scalar_lea.vmem %s212, %s1288
      %v1290 = vld [vmem:[%s1289] sm:$0xf]
      %v1291 = vld [vmem:[%s1289 + $0x4] sm:$0xf]
      %v1292 = vld [vmem:[%s1289 + $0x8] sm:$0xf]
      %v1293 = vld [vmem:[%s1289 + $0xc] sm:$0xf]
      %v1294 = vld [vmem:[%s1289 + $0x10] sm:$0xf]
      %v1295 = vld [vmem:[%s1289 + $0x14] sm:$0xf]
      %v1296 = vld [vmem:[%s1289 + $0x18] sm:$0xf]
      %v1297 = vld [vmem:[%s1289 + $0x1c] sm:$0xf]
      %s1298 = scalar_lea.vmem %s1, 384
      %v1299 = vld [vmem:[%s1298] sm:$0xff]
      %v1300 = vld [vmem:[%s1298 + $0x8] sm:$0xff]
      %v1301 = vld [vmem:[%s1298 + $0x10] sm:$0xff]
      %v1302 = vld [vmem:[%s1298 + $0x18] sm:$0xff]
      %v1303 = vld [vmem:[%s1298 + $0x20] sm:$0xff]
      %v1304 = vld [vmem:[%s1298 + $0x28] sm:$0xff]
      %v1305 = vld [vmem:[%s1298 + $0x30] sm:$0xff]
      %v1306 = vld [vmem:[%s1298 + $0x38] sm:$0xff]
      %v1315 = vunpack.c.l.b16 %v1290
      %v1316 = vunpack.c.l.b16 %v1291
      %v1317 = vunpack.c.l.b16 %v1292
      %v1318 = vunpack.c.l.b16 %v1293
      %v1319 = vunpack.c.l.b16 %v1294
      %v1320 = vunpack.c.l.b16 %v1295
      %v1321 = vunpack.c.l.b16 %v1296
      %v1322 = vunpack.c.l.b16 %v1297
      %v1323 = vpack.c.b16 %v1316, %v1315
      %v1324 = vpack.c.b16 %v1318, %v1317
      %v1325 = vpack.c.b16 %v1320, %v1319
      %v1326 = vpack.c.b16 %v1322, %v1321
      %v1335 = vunpack.c.l.b16 %v1299
      %v1336 = vunpack.c.h.b16 %v1299
      %v1337 = vunpack.c.l.b16 %v1300
      %v1338 = vunpack.c.h.b16 %v1300
      %v1339 = vunpack.c.l.b16 %v1301
      %v1340 = vunpack.c.h.b16 %v1301
      %v1341 = vunpack.c.l.b16 %v1302
      %v1342 = vunpack.c.h.b16 %v1302
      %v1343 = vunpack.c.l.b16 %v1303
      %v1344 = vunpack.c.h.b16 %v1303
      %v1345 = vunpack.c.l.b16 %v1304
      %v1346 = vunpack.c.h.b16 %v1304
      %v1347 = vunpack.c.l.b16 %v1305
      %v1348 = vunpack.c.h.b16 %v1305
      %v1349 = vunpack.c.l.b16 %v1306
      %v1350 = vunpack.c.h.b16 %v1306
      %v1351 = vpack.c.b16 %v1337, %v1335
      %v1352 = vpack.c.b16 %v1338, %v1336
      %v1353 = vpack.c.b16 %v1341, %v1339
      %v1354 = vpack.c.b16 %v1342, %v1340
      %v1355 = vpack.c.b16 %v1345, %v1343
      %v1356 = vpack.c.b16 %v1346, %v1344
      %v1357 = vpack.c.b16 %v1349, %v1347
      %v1358 = vpack.c.b16 %v1350, %v1348
      %v1368 = vsel %vm328, %v1323, 0
      %v1371 = vsel %vm328, %v1324, 0
      %v1374 = vsel %vm328, %v1325, 0
      %v1377 = vsel %vm328, %v1326, 0
      %1379 = vmatprep.subr.bf16.mxu0 0
      %1380 = vmatpush1.bf16.msra.mxu0 0
      %1381 = vmatprep.subr.bf16.mxu0 0
      %1382 = vmatpush1.bf16.msra.mxu0 0
      %1383 = vmatprep.subr.bf16.mxu0 0
      %1384 = vmatpush1.bf16.msra.mxu0 0
      %1385 = vmatprep.subr.bf16.mxu0 0
      %1386 = vmatpush1.bf16.msra.mxu0 0
      %1387 = vmatprep.subr.bf16.mxu0 %v1358
      %1388 = vmatpush1.bf16.msra.mxu0 %v1357
      %1389 = vmatprep.subr.bf16.mxu0 %v1356
      %1390 = vmatpush1.bf16.msra.mxu0 %v1355
      %1391 = vmatprep.subr.bf16.mxu0 %v1354
      %1392 = vmatpush1.bf16.msra.mxu0 %v1353
      %1393 = vmatprep.subr.bf16.mxu0 %v1352
      %1394 = vmatpush1.bf16.msra.mxu0 %v1351
      %1395 = vmatprep.subr.bf16.mxu0 0
      %1396 = vmatpush2.bf16.msra.mxu0 0
      %1397 = vmatprep.subr.bf16.mxu0 0
      %1398 = vmatpush2.bf16.msra.mxu0 0
      %1399 = vmatprep.subr.bf16.mxu0 0
      %1400 = vmatpush2.bf16.msra.mxu0 0
      %1401 = vmatprep.subr.bf16.mxu0 0
      %1402 = vmatpush2.bf16.msra.mxu0 0
      %1403 = vmatprep.subr.bf16.mxu0 0
      %1404 = vmatpush2.bf16.msra.mxu0 0
      %1405 = vmatprep.subr.bf16.mxu0 0
      %1406 = vmatpush2.bf16.msra.mxu0 0
      %1407 = vmatprep.subr.bf16.mxu0 0
      %1408 = vmatpush2.bf16.msra.mxu0 0
      %1409 = vmatprep.subr.bf16.mxu0 0
      %1410 = vmatpush2.bf16.msra.mxu0 0
      %1411 = vmatprep.mubr.bf16.mxu0 0
      %1412 = vmatmul.mubr.bf16.gmra.mxu0 %v1368
      %v1413 = vpop.f32.mrf.mxu0
      %v1414 = vadd.f32 0.0, %v1413
      %v1415 = vpop.f32.mrf.mxu0
      %v1416 = vadd.f32 0.0, %v1415
      %v1417 = vpop.f32.mrf.mxu0
      %v1418 = vadd.f32 0.0, %v1417
      %v1419 = vpop.f32.mrf.mxu0
      %v1420 = vadd.f32 0.0, %v1419
      %1421 = vmatprep.mubr.bf16.mxu0 0
      %1422 = vmatmul.mubr.bf16.gmra.mxu0 %v1371
      %v1423 = vpop.f32.mrf.mxu0
      %v1424 = vadd.f32 0.0, %v1423
      %v1425 = vpop.f32.mrf.mxu0
      %v1426 = vadd.f32 0.0, %v1425
      %v1427 = vpop.f32.mrf.mxu0
      %v1428 = vadd.f32 0.0, %v1427
      %v1429 = vpop.f32.mrf.mxu0
      %v1430 = vadd.f32 0.0, %v1429
      %1431 = vmatprep.mubr.bf16.mxu0 0
      %1432 = vmatmul.mubr.bf16.gmra.mxu0 %v1374
      %v1433 = vpop.f32.mrf.mxu0
      %v1434 = vadd.f32 0.0, %v1433
      %v1435 = vpop.f32.mrf.mxu0
      %v1436 = vadd.f32 0.0, %v1435
      %v1437 = vpop.f32.mrf.mxu0
      %v1438 = vadd.f32 0.0, %v1437
      %v1439 = vpop.f32.mrf.mxu0
      %v1440 = vadd.f32 0.0, %v1439
      %1441 = vmatprep.mubr.bf16.mxu0 0
      %1442 = vmatmul.mubr.bf16.gmra.mxu0 %v1377
      %v1443 = vpop.f32.mrf.mxu0
      %v1444 = vadd.f32 0.0, %v1443
      %v1445 = vpop.f32.mrf.mxu0
      %v1446 = vadd.f32 0.0, %v1445
      %v1447 = vpop.f32.mrf.mxu0
      %v1448 = vadd.f32 0.0, %v1447
      %v1449 = vpop.f32.mrf.mxu0
      %v1450 = vadd.f32 0.0, %v1449
      %1451 = vdwg.mxu0
      %v1452 = vadd.f32 %v1269, %v1414
      %v1453 = vadd.f32 %v1270, %v1416
      %v1454 = vadd.f32 %v1271, %v1418
      %v1455 = vadd.f32 %v1272, %v1420
      %v1456 = vadd.f32 %v1273, %v1424
      %v1457 = vadd.f32 %v1274, %v1426
      %v1458 = vadd.f32 %v1275, %v1428
      %v1459 = vadd.f32 %v1276, %v1430
      %v1460 = vadd.f32 %v1277, %v1434
      %v1461 = vadd.f32 %v1278, %v1436
      %v1462 = vadd.f32 %v1279, %v1438
      %v1463 = vadd.f32 %v1280, %v1440
      %v1464 = vadd.f32 %v1281, %v1444
      %v1465 = vadd.f32 %v1282, %v1446
      %v1466 = vadd.f32 %v1283, %v1448
      %v1467 = vadd.f32 %v1284, %v1450
      %s1468 = sadd.s32 %s1286, 54
      %s1469 = smul.addr %s1468, 4
      %s1470 = scalar_lea.vmem %s212, %s1469
      %v1471 = vld [vmem:[%s1470] sm:$0xf]
      %v1472 = vld [vmem:[%s1470 + $0x4] sm:$0xf]
      %v1473 = vld [vmem:[%s1470 + $0x8] sm:$0xf]
      %v1474 = vld [vmem:[%s1470 + $0xc] sm:$0xf]
      %v1475 = vld [vmem:[%s1470 + $0x10] sm:$0xf]
      %v1476 = vld [vmem:[%s1470 + $0x14] sm:$0xf]
      %v1477 = vld [vmem:[%s1470 + $0x18] sm:$0xf]
      %v1478 = vld [vmem:[%s1470 + $0x1c] sm:$0xf]
      %s1479 = scalar_lea.vmem %s1, 448
      %v1480 = vld [vmem:[%s1479] sm:$0xff]
      %v1481 = vld [vmem:[%s1479 + $0x8] sm:$0xff]
      %v1482 = vld [vmem:[%s1479 + $0x10] sm:$0xff]
      %v1483 = vld [vmem:[%s1479 + $0x18] sm:$0xff]
      %v1484 = vld [vmem:[%s1479 + $0x20] sm:$0xff]
      %v1485 = vld [vmem:[%s1479 + $0x28] sm:$0xff]
      %v1486 = vld [vmem:[%s1479 + $0x30] sm:$0xff]
      %v1487 = vld [vmem:[%s1479 + $0x38] sm:$0xff]
      %v1496 = vunpack.c.l.b16 %v1471
      %v1497 = vunpack.c.l.b16 %v1472
      %v1498 = vunpack.c.l.b16 %v1473
      %v1499 = vunpack.c.l.b16 %v1474
      %v1500 = vunpack.c.l.b16 %v1475
      %v1501 = vunpack.c.l.b16 %v1476
      %v1502 = vunpack.c.l.b16 %v1477
      %v1503 = vunpack.c.l.b16 %v1478
      %v1504 = vpack.c.b16 %v1497, %v1496
      %v1505 = vpack.c.b16 %v1499, %v1498
      %v1506 = vpack.c.b16 %v1501, %v1500
      %v1507 = vpack.c.b16 %v1503, %v1502
      %v1516 = vunpack.c.l.b16 %v1480
      %v1517 = vunpack.c.h.b16 %v1480
      %v1518 = vunpack.c.l.b16 %v1481
      %v1519 = vunpack.c.h.b16 %v1481
      %v1520 = vunpack.c.l.b16 %v1482
      %v1521 = vunpack.c.h.b16 %v1482
      %v1522 = vunpack.c.l.b16 %v1483
      %v1523 = vunpack.c.h.b16 %v1483
      %v1524 = vunpack.c.l.b16 %v1484
      %v1525 = vunpack.c.h.b16 %v1484
      %v1526 = vunpack.c.l.b16 %v1485
      %v1527 = vunpack.c.h.b16 %v1485
      %v1528 = vunpack.c.l.b16 %v1486
      %v1529 = vunpack.c.h.b16 %v1486
      %v1530 = vunpack.c.l.b16 %v1487
      %v1531 = vunpack.c.h.b16 %v1487
      %v1532 = vpack.c.b16 %v1518, %v1516
      %v1533 = vpack.c.b16 %v1519, %v1517
      %v1534 = vpack.c.b16 %v1522, %v1520
      %v1535 = vpack.c.b16 %v1523, %v1521
      %v1536 = vpack.c.b16 %v1526, %v1524
      %v1537 = vpack.c.b16 %v1527, %v1525
      %v1538 = vpack.c.b16 %v1530, %v1528
      %v1539 = vpack.c.b16 %v1531, %v1529
      %v1549 = vsel %vm328, %v1504, 0
      %v1552 = vsel %vm328, %v1505, 0
      %v1555 = vsel %vm328, %v1506, 0
      %v1558 = vsel %vm328, %v1507, 0
      %1560 = vmatprep.subr.bf16.mxu0 0
      %1561 = vmatpush1.bf16.msra.mxu0 0
      %1562 = vmatprep.subr.bf16.mxu0 0
      %1563 = vmatpush1.bf16.msra.mxu0 0
      %1564 = vmatprep.subr.bf16.mxu0 0
      %1565 = vmatpush1.bf16.msra.mxu0 0
      %1566 = vmatprep.subr.bf16.mxu0 0
      %1567 = vmatpush1.bf16.msra.mxu0 0
      %1568 = vmatprep.subr.bf16.mxu0 %v1539
      %1569 = vmatpush1.bf16.msra.mxu0 %v1538
      %1570 = vmatprep.subr.bf16.mxu0 %v1537
      %1571 = vmatpush1.bf16.msra.mxu0 %v1536
      %1572 = vmatprep.subr.bf16.mxu0 %v1535
      %1573 = vmatpush1.bf16.msra.mxu0 %v1534
      %1574 = vmatprep.subr.bf16.mxu0 %v1533
      %1575 = vmatpush1.bf16.msra.mxu0 %v1532
      %1576 = vmatprep.subr.bf16.mxu0 0
      %1577 = vmatpush2.bf16.msra.mxu0 0
      %1578 = vmatprep.subr.bf16.mxu0 0
      %1579 = vmatpush2.bf16.msra.mxu0 0
      %1580 = vmatprep.subr.bf16.mxu0 0
      %1581 = vmatpush2.bf16.msra.mxu0 0
      %1582 = vmatprep.subr.bf16.mxu0 0
      %1583 = vmatpush2.bf16.msra.mxu0 0
      %1584 = vmatprep.subr.bf16.mxu0 0
      %1585 = vmatpush2.bf16.msra.mxu0 0
      %1586 = vmatprep.subr.bf16.mxu0 0
      %1587 = vmatpush2.bf16.msra.mxu0 0
      %1588 = vmatprep.subr.bf16.mxu0 0
      %1589 = vmatpush2.bf16.msra.mxu0 0
      %1590 = vmatprep.subr.bf16.mxu0 0
      %1591 = vmatpush2.bf16.msra.mxu0 0
      %1592 = vmatprep.mubr.bf16.mxu0 0
      %1593 = vmatmul.mubr.bf16.gmra.mxu0 %v1549
      %v1594 = vpop.f32.mrf.mxu0
      %v1595 = vadd.f32 0.0, %v1594
      %v1596 = vpop.f32.mrf.mxu0
      %v1597 = vadd.f32 0.0, %v1596
      %v1598 = vpop.f32.mrf.mxu0
      %v1599 = vadd.f32 0.0, %v1598
      %v1600 = vpop.f32.mrf.mxu0
      %v1601 = vadd.f32 0.0, %v1600
      %1602 = vmatprep.mubr.bf16.mxu0 0
      %1603 = vmatmul.mubr.bf16.gmra.mxu0 %v1552
      %v1604 = vpop.f32.mrf.mxu0
      %v1605 = vadd.f32 0.0, %v1604
      %v1606 = vpop.f32.mrf.mxu0
      %v1607 = vadd.f32 0.0, %v1606
      %v1608 = vpop.f32.mrf.mxu0
      %v1609 = vadd.f32 0.0, %v1608
      %v1610 = vpop.f32.mrf.mxu0
      %v1611 = vadd.f32 0.0, %v1610
      %1612 = vmatprep.mubr.bf16.mxu0 0
      %1613 = vmatmul.mubr.bf16.gmra.mxu0 %v1555
      %v1614 = vpop.f32.mrf.mxu0
      %v1615 = vadd.f32 0.0, %v1614
      %v1616 = vpop.f32.mrf.mxu0
      %v1617 = vadd.f32 0.0, %v1616
      %v1618 = vpop.f32.mrf.mxu0
      %v1619 = vadd.f32 0.0, %v1618
      %v1620 = vpop.f32.mrf.mxu0
      %v1621 = vadd.f32 0.0, %v1620
      %1622 = vmatprep.mubr.bf16.mxu0 0
      %1623 = vmatmul.mubr.bf16.gmra.mxu0 %v1558
      %v1624 = vpop.f32.mrf.mxu0
      %v1625 = vadd.f32 0.0, %v1624
      %v1626 = vpop.f32.mrf.mxu0
      %v1627 = vadd.f32 0.0, %v1626
      %v1628 = vpop.f32.mrf.mxu0
      %v1629 = vadd.f32 0.0, %v1628
      %v1630 = vpop.f32.mrf.mxu0
      %v1631 = vadd.f32 0.0, %v1630
      %1632 = vdwg.mxu0
      %v1633 = vadd.f32 %v1452, %v1595
      %v1634 = vadd.f32 %v1453, %v1597
      %v1635 = vadd.f32 %v1454, %v1599
      %v1636 = vadd.f32 %v1455, %v1601
      %v1637 = vadd.f32 %v1456, %v1605
      %v1638 = vadd.f32 %v1457, %v1607
      %v1639 = vadd.f32 %v1458, %v1609
      %v1640 = vadd.f32 %v1459, %v1611
      %v1641 = vadd.f32 %v1460, %v1615
      %v1642 = vadd.f32 %v1461, %v1617
      %v1643 = vadd.f32 %v1462, %v1619
      %v1644 = vadd.f32 %v1463, %v1621
      %v1645 = vadd.f32 %v1464, %v1625
      %v1646 = vadd.f32 %v1465, %v1627
      %v1647 = vadd.f32 %v1466, %v1629
      %v1648 = vadd.f32 %v1467, %v1631
      %s1649 = sadd.s32 %s1286, 108
      %s1650 = smul.addr %s1649, 4
      %s1651 = scalar_lea.vmem %s212, %s1650
      %v1652 = vld [vmem:[%s1651] sm:$0xf]
      %v1653 = vld [vmem:[%s1651 + $0x4] sm:$0xf]
      %v1654 = vld [vmem:[%s1651 + $0x8] sm:$0xf]
      %v1655 = vld [vmem:[%s1651 + $0xc] sm:$0xf]
      %v1656 = vld [vmem:[%s1651 + $0x10] sm:$0xf]
      %v1657 = vld [vmem:[%s1651 + $0x14] sm:$0xf]
      %v1658 = vld [vmem:[%s1651 + $0x18] sm:$0xf]
      %v1659 = vld [vmem:[%s1651 + $0x1c] sm:$0xf]
      %s1660 = scalar_lea.vmem %s1, 512
      %v1661 = vld [vmem:[%s1660] sm:$0xff]
      %v1662 = vld [vmem:[%s1660 + $0x8] sm:$0xff]
      %v1663 = vld [vmem:[%s1660 + $0x10] sm:$0xff]
      %v1664 = vld [vmem:[%s1660 + $0x18] sm:$0xff]
      %v1665 = vld [vmem:[%s1660 + $0x20] sm:$0xff]
      %v1666 = vld [vmem:[%s1660 + $0x28] sm:$0xff]
      %v1667 = vld [vmem:[%s1660 + $0x30] sm:$0xff]
      %v1668 = vld [vmem:[%s1660 + $0x38] sm:$0xff]
      %v1677 = vunpack.c.l.b16 %v1652
      %v1678 = vunpack.c.l.b16 %v1653
      %v1679 = vunpack.c.l.b16 %v1654
      %v1680 = vunpack.c.l.b16 %v1655
      %v1681 = vunpack.c.l.b16 %v1656
      %v1682 = vunpack.c.l.b16 %v1657
      %v1683 = vunpack.c.l.b16 %v1658
      %v1684 = vunpack.c.l.b16 %v1659
      %v1685 = vpack.c.b16 %v1678, %v1677
      %v1686 = vpack.c.b16 %v1680, %v1679
      %v1687 = vpack.c.b16 %v1682, %v1681
      %v1688 = vpack.c.b16 %v1684, %v1683
      %v1697 = vunpack.c.l.b16 %v1661
      %v1698 = vunpack.c.h.b16 %v1661
      %v1699 = vunpack.c.l.b16 %v1662
      %v1700 = vunpack.c.h.b16 %v1662
      %v1701 = vunpack.c.l.b16 %v1663
      %v1702 = vunpack.c.h.b16 %v1663
      %v1703 = vunpack.c.l.b16 %v1664
      %v1704 = vunpack.c.h.b16 %v1664
      %v1705 = vunpack.c.l.b16 %v1665
      %v1706 = vunpack.c.h.b16 %v1665
      %v1707 = vunpack.c.l.b16 %v1666
      %v1708 = vunpack.c.h.b16 %v1666
      %v1709 = vunpack.c.l.b16 %v1667
      %v1710 = vunpack.c.h.b16 %v1667
      %v1711 = vunpack.c.l.b16 %v1668
      %v1712 = vunpack.c.h.b16 %v1668
      %v1713 = vpack.c.b16 %v1699, %v1697
      %v1714 = vpack.c.b16 %v1700, %v1698
      %v1715 = vpack.c.b16 %v1703, %v1701
      %v1716 = vpack.c.b16 %v1704, %v1702
      %v1717 = vpack.c.b16 %v1707, %v1705
      %v1718 = vpack.c.b16 %v1708, %v1706
      %v1719 = vpack.c.b16 %v1711, %v1709
      %v1720 = vpack.c.b16 %v1712, %v1710
      %v1730 = vsel %vm328, %v1685, 0
      %v1733 = vsel %vm328, %v1686, 0
      %v1736 = vsel %vm328, %v1687, 0
      %v1739 = vsel %vm328, %v1688, 0
      %1741 = vmatprep.subr.bf16.mxu0 0
      %1742 = vmatpush1.bf16.msra.mxu0 0
      %1743 = vmatprep.subr.bf16.mxu0 0
      %1744 = vmatpush1.bf16.msra.mxu0 0
      %1745 = vmatprep.subr.bf16.mxu0 0
      %1746 = vmatpush1.bf16.msra.mxu0 0
      %1747 = vmatprep.subr.bf16.mxu0 0
      %1748 = vmatpush1.bf16.msra.mxu0 0
      %1749 = vmatprep.subr.bf16.mxu0 %v1720
      %1750 = vmatpush1.bf16.msra.mxu0 %v1719
      %1751 = vmatprep.subr.bf16.mxu0 %v1718
      %1752 = vmatpush1.bf16.msra.mxu0 %v1717
      %1753 = vmatprep.subr.bf16.mxu0 %v1716
      %1754 = vmatpush1.bf16.msra.mxu0 %v1715
      %1755 = vmatprep.subr.bf16.mxu0 %v1714
      %1756 = vmatpush1.bf16.msra.mxu0 %v1713
      %1757 = vmatprep.subr.bf16.mxu0 0
      %1758 = vmatpush2.bf16.msra.mxu0 0
      %1759 = vmatprep.subr.bf16.mxu0 0
      %1760 = vmatpush2.bf16.msra.mxu0 0
      %1761 = vmatprep.subr.bf16.mxu0 0
      %1762 = vmatpush2.bf16.msra.mxu0 0
      %1763 = vmatprep.subr.bf16.mxu0 0
      %1764 = vmatpush2.bf16.msra.mxu0 0
      %1765 = vmatprep.subr.bf16.mxu0 0
      %1766 = vmatpush2.bf16.msra.mxu0 0
      %1767 = vmatprep.subr.bf16.mxu0 0
      %1768 = vmatpush2.bf16.msra.mxu0 0
      %1769 = vmatprep.subr.bf16.mxu0 0
      %1770 = vmatpush2.bf16.msra.mxu0 0
      %1771 = vmatprep.subr.bf16.mxu0 0
      %1772 = vmatpush2.bf16.msra.mxu0 0
      %1773 = vmatprep.mubr.bf16.mxu0 0
      %1774 = vmatmul.mubr.bf16.gmra.mxu0 %v1730
      %v1775 = vpop.f32.mrf.mxu0
      %v1776 = vadd.f32 0.0, %v1775
      %v1777 = vpop.f32.mrf.mxu0
      %v1778 = vadd.f32 0.0, %v1777
      %v1779 = vpop.f32.mrf.mxu0
      %v1780 = vadd.f32 0.0, %v1779
      %v1781 = vpop.f32.mrf.mxu0
      %v1782 = vadd.f32 0.0, %v1781
      %1783 = vmatprep.mubr.bf16.mxu0 0
      %1784 = vmatmul.mubr.bf16.gmra.mxu0 %v1733
      %v1785 = vpop.f32.mrf.mxu0
      %v1786 = vadd.f32 0.0, %v1785
      %v1787 = vpop.f32.mrf.mxu0
      %v1788 = vadd.f32 0.0, %v1787
      %v1789 = vpop.f32.mrf.mxu0
      %v1790 = vadd.f32 0.0, %v1789
      %v1791 = vpop.f32.mrf.mxu0
      %v1792 = vadd.f32 0.0, %v1791
      %1793 = vmatprep.mubr.bf16.mxu0 0
      %1794 = vmatmul.mubr.bf16.gmra.mxu0 %v1736
      %v1795 = vpop.f32.mrf.mxu0
      %v1796 = vadd.f32 0.0, %v1795
      %v1797 = vpop.f32.mrf.mxu0
      %v1798 = vadd.f32 0.0, %v1797
      %v1799 = vpop.f32.mrf.mxu0
      %v1800 = vadd.f32 0.0, %v1799
      %v1801 = vpop.f32.mrf.mxu0
      %v1802 = vadd.f32 0.0, %v1801
      %1803 = vmatprep.mubr.bf16.mxu0 0
      %1804 = vmatmul.mubr.bf16.gmra.mxu0 %v1739
      %v1805 = vpop.f32.mrf.mxu0
      %v1806 = vadd.f32 0.0, %v1805
      %v1807 = vpop.f32.mrf.mxu0
      %v1808 = vadd.f32 0.0, %v1807
      %v1809 = vpop.f32.mrf.mxu0
      %v1810 = vadd.f32 0.0, %v1809
      %v1811 = vpop.f32.mrf.mxu0
      %v1812 = vadd.f32 0.0, %v1811
      %1813 = vdwg.mxu0
      %v1814 = vadd.f32 %v1633, %v1776
      %v1815 = vadd.f32 %v1634, %v1778
      %v1816 = vadd.f32 %v1635, %v1780
      %v1817 = vadd.f32 %v1636, %v1782
      %v1818 = vadd.f32 %v1637, %v1786
      %v1819 = vadd.f32 %v1638, %v1788
      %v1820 = vadd.f32 %v1639, %v1790
      %v1821 = vadd.f32 %v1640, %v1792
      %v1822 = vadd.f32 %v1641, %v1796
      %v1823 = vadd.f32 %v1642, %v1798
      %v1824 = vadd.f32 %v1643, %v1800
      %v1825 = vadd.f32 %v1644, %v1802
      %v1826 = vadd.f32 %v1645, %v1806
      %v1827 = vadd.f32 %v1646, %v1808
      %v1828 = vadd.f32 %v1647, %v1810
      %v1829 = vadd.f32 %v1648, %v1812
      %v1831 = vlaneseq
      %v1832 = vshrl.u32 %v1831, 7
      %v1833 = vsub.s32 0, %v1832
      %v1834 = vrot.slane %v227, %v1833
      %v1835 = vlaneseq
      %v1836 = vshrl.u32 %v1835, 7
      %v1837 = vsub.s32 1, %v1836
      %v1838 = vrot.slane %v227, %v1837
      %v1841 = vadd.f32 %v1814, %v1834
      %v1842 = vadd.f32 %v1815, %v1838
      %v1843 = vadd.f32 %v1816, %v1834
      %v1844 = vadd.f32 %v1817, %v1838
      %v1845 = vadd.f32 %v1818, %v1834
      %v1846 = vadd.f32 %v1819, %v1838
      %v1847 = vadd.f32 %v1820, %v1834
      %v1848 = vadd.f32 %v1821, %v1838
      %v1849 = vadd.f32 %v1822, %v1834
      %v1850 = vadd.f32 %v1823, %v1838
      %v1851 = vadd.f32 %v1824, %v1834
      %v1852 = vadd.f32 %v1825, %v1838
      %v1853 = vadd.f32 %v1826, %v1834
      %v1854 = vadd.f32 %v1827, %v1838
      %v1855 = vadd.f32 %v1828, %v1834
      %v1856 = vadd.f32 %v1829, %v1838
      %vm1857 = vcmp.gt.f32.partialorder %v1841, 0.0
      %vm1858 = vcmp.gt.f32.partialorder %v1842, 0.0
      %vm1859 = vcmp.gt.f32.partialorder %v1843, 0.0
      %vm1860 = vcmp.gt.f32.partialorder %v1844, 0.0
      %vm1861 = vcmp.gt.f32.partialorder %v1845, 0.0
      %vm1862 = vcmp.gt.f32.partialorder %v1846, 0.0
      %vm1863 = vcmp.gt.f32.partialorder %v1847, 0.0
      %vm1864 = vcmp.gt.f32.partialorder %v1848, 0.0
      %vm1865 = vcmp.gt.f32.partialorder %v1849, 0.0
      %vm1866 = vcmp.gt.f32.partialorder %v1850, 0.0
      %vm1867 = vcmp.gt.f32.partialorder %v1851, 0.0
      %vm1868 = vcmp.gt.f32.partialorder %v1852, 0.0
      %vm1869 = vcmp.gt.f32.partialorder %v1853, 0.0
      %vm1870 = vcmp.gt.f32.partialorder %v1854, 0.0
      %vm1871 = vcmp.gt.f32.partialorder %v1855, 0.0
      %vm1872 = vcmp.gt.f32.partialorder %v1856, 0.0
      %v1873 = vstv %s226
      %v1874 = vmul.f32 %v1873, %v1841
      %v1875 = vmul.f32 %v1873, %v1842
      %v1876 = vmul.f32 %v1873, %v1843
      %v1877 = vmul.f32 %v1873, %v1844
      %v1878 = vmul.f32 %v1873, %v1845
      %v1879 = vmul.f32 %v1873, %v1846
      %v1880 = vmul.f32 %v1873, %v1847
      %v1881 = vmul.f32 %v1873, %v1848
      %v1882 = vmul.f32 %v1873, %v1849
      %v1883 = vmul.f32 %v1873, %v1850
      %v1884 = vmul.f32 %v1873, %v1851
      %v1885 = vmul.f32 %v1873, %v1852
      %v1886 = vmul.f32 %v1873, %v1853
      %v1887 = vmul.f32 %v1873, %v1854
      %v1888 = vmul.f32 %v1873, %v1855
      %v1889 = vmul.f32 %v1873, %v1856
      %v1890 = vsel %vm1857, %v1841, %v1874
      %v1891 = vsel %vm1858, %v1842, %v1875
      %v1892 = vsel %vm1859, %v1843, %v1876
      %v1893 = vsel %vm1860, %v1844, %v1877
      %v1894 = vsel %vm1861, %v1845, %v1878
      %v1895 = vsel %vm1862, %v1846, %v1879
      %v1896 = vsel %vm1863, %v1847, %v1880
      %v1897 = vsel %vm1864, %v1848, %v1881
      %v1898 = vsel %vm1865, %v1849, %v1882
      %v1899 = vsel %vm1866, %v1850, %v1883
      %v1900 = vsel %vm1867, %v1851, %v1884
      %v1901 = vsel %vm1868, %v1852, %v1885
      %v1902 = vsel %vm1869, %v1853, %v1886
      %v1903 = vsel %vm1870, %v1854, %v1887
      %v1904 = vsel %vm1871, %v1855, %v1888
      %v1905 = vsel %vm1872, %v1856, %v1889
      %v1906 = vpack.c.bf16 %v1892, %v1890
      %v1907 = vpack.c.bf16 %v1893, %v1891
      %v1908 = vpack.c.bf16 %v1896, %v1894
      %v1909 = vpack.c.bf16 %v1897, %v1895
      %v1910 = vpack.c.bf16 %v1900, %v1898
      %v1911 = vpack.c.bf16 %v1901, %v1899
      %v1912 = vpack.c.bf16 %v1904, %v1902
      %v1913 = vpack.c.bf16 %v1905, %v1903
      %v1922 = vunpack.c.l.b16 %v1906
      %v1923 = vunpack.c.l.b16 %v1907
      %v1924 = vunpack.c.h.b16 %v1906
      %v1925 = vunpack.c.h.b16 %v1907
      %v1926 = vunpack.c.l.b16 %v1908
      %v1927 = vunpack.c.l.b16 %v1909
      %v1928 = vunpack.c.h.b16 %v1908
      %v1929 = vunpack.c.h.b16 %v1909
      %v1930 = vunpack.c.l.b16 %v1910
      %v1931 = vunpack.c.l.b16 %v1911
      %v1932 = vunpack.c.h.b16 %v1910
      %v1933 = vunpack.c.h.b16 %v1911
      %v1934 = vunpack.c.l.b16 %v1912
      %v1935 = vunpack.c.l.b16 %v1913
      %v1936 = vunpack.c.h.b16 %v1912
      %v1937 = vunpack.c.h.b16 %v1913
      %v1938 = vpack.c.b16 %v1923, %v1922
      %v1939 = vpack.c.b16 %v1925, %v1924
      %v1940 = vpack.c.b16 %v1927, %v1926
      %v1941 = vpack.c.b16 %v1929, %v1928
      %v1942 = vpack.c.b16 %v1931, %v1930
      %v1943 = vpack.c.b16 %v1933, %v1932
      %v1944 = vpack.c.b16 %v1935, %v1934
      %v1945 = vpack.c.b16 %v1937, %v1936
      %1954 = vst [vmem:[%s222] sm:$0xff] %v1938
      %1955 = vst [vmem:[%s222 + $0x8] sm:$0xff] %v1939
      %1956 = vst [vmem:[%s222 + $0x10] sm:$0xff] %v1940
      %1957 = vst [vmem:[%s222 + $0x18] sm:$0xff] %v1941
      %1958 = vst [vmem:[%s222 + $0x20] sm:$0xff] %v1942
      %1959 = vst [vmem:[%s222 + $0x28] sm:$0xff] %v1943
      %1960 = vst [vmem:[%s222 + $0x30] sm:$0xff] %v1944
      %1961 = vst [vmem:[%s222 + $0x38] sm:$0xff] %v1945
      %s1962 = sadd.s32 %s225, 64
      %s1963 = sshra.s32 %s1962, 3
      %s1964 = sand.u32 %s1962, 7
      %s1965 = smul.addr %s1963, 4
      %s1966 = scalar_lea.vmem %s212, %s1965
      %v1967 = vld [vmem:[%s1966] sm:$0xf]
      %v1968 = vld [vmem:[%s1966 + $0x4] sm:$0xf]
      %v1969 = vld [vmem:[%s1966 + $0x8] sm:$0xf]
      %v1970 = vld [vmem:[%s1966 + $0xc] sm:$0xf]
      %v1971 = vld [vmem:[%s1966 + $0x10] sm:$0xf]
      %v1972 = vld [vmem:[%s1966 + $0x14] sm:$0xf]
      %v1973 = vld [vmem:[%s1966 + $0x18] sm:$0xf]
      %v1974 = vld [vmem:[%s1966 + $0x1c] sm:$0xf]
      %v1975 = vld [vmem:[%s1] sm:$0xff]
      %v1976 = vld [vmem:[%s1 + $0x8] sm:$0xff]
      %v1977 = vld [vmem:[%s1 + $0x10] sm:$0xff]
      %v1978 = vld [vmem:[%s1 + $0x18] sm:$0xff]
      %v1979 = vld [vmem:[%s1 + $0x20] sm:$0xff]
      %v1980 = vld [vmem:[%s1 + $0x28] sm:$0xff]
      %v1981 = vld [vmem:[%s1 + $0x30] sm:$0xff]
      %v1982 = vld [vmem:[%s1 + $0x38] sm:$0xff]
      %s1983 = sadd.s32 %s1963, 54
      %s1984 = smul.addr %s1983, 4
      %s1985 = scalar_lea.vmem %s212, %s1984
      %v1986 = vld [vmem:[%s1985] sm:$0xf]
      %v1987 = vld [vmem:[%s1985 + $0x4] sm:$0xf]
      %v1988 = vld [vmem:[%s1985 + $0x8] sm:$0xf]
      %v1989 = vld [vmem:[%s1985 + $0xc] sm:$0xf]
      %v1990 = vld [vmem:[%s1985 + $0x10] sm:$0xf]
      %v1991 = vld [vmem:[%s1985 + $0x14] sm:$0xf]
      %v1992 = vld [vmem:[%s1985 + $0x18] sm:$0xf]
      %v1993 = vld [vmem:[%s1985 + $0x1c] sm:$0xf]
      %v1994 = vld [vmem:[%s259] sm:$0xff]
      %v1995 = vld [vmem:[%s259 + $0x8] sm:$0xff]
      %v1996 = vld [vmem:[%s259 + $0x10] sm:$0xff]
      %v1997 = vld [vmem:[%s259 + $0x18] sm:$0xff]
      %v1998 = vld [vmem:[%s259 + $0x20] sm:$0xff]
      %v1999 = vld [vmem:[%s259 + $0x28] sm:$0xff]
      %v2000 = vld [vmem:[%s259 + $0x30] sm:$0xff]
      %v2001 = vld [vmem:[%s259 + $0x38] sm:$0xff]
      %v2010 = vunpack.c.l.b16 %v1986
      %v2011 = vunpack.c.l.b16 %v1987
      %v2012 = vunpack.c.l.b16 %v1988
      %v2013 = vunpack.c.l.b16 %v1989
      %v2014 = vunpack.c.l.b16 %v1990
      %v2015 = vunpack.c.l.b16 %v1991
      %v2016 = vunpack.c.l.b16 %v1992
      %v2017 = vunpack.c.l.b16 %v1993
      %v2018 = vpack.c.b16 %v2011, %v2010
      %v2019 = vpack.c.b16 %v2013, %v2012
      %v2020 = vpack.c.b16 %v2015, %v2014
      %v2021 = vpack.c.b16 %v2017, %v2016
      %v2030 = vunpack.c.l.b16 %v1994
      %v2031 = vunpack.c.h.b16 %v1994
      %v2032 = vunpack.c.l.b16 %v1995
      %v2033 = vunpack.c.h.b16 %v1995
      %v2034 = vunpack.c.l.b16 %v1996
      %v2035 = vunpack.c.h.b16 %v1996
      %v2036 = vunpack.c.l.b16 %v1997
      %v2037 = vunpack.c.h.b16 %v1997
      %v2038 = vunpack.c.l.b16 %v1998
      %v2039 = vunpack.c.h.b16 %v1998
      %v2040 = vunpack.c.l.b16 %v1999
      %v2041 = vunpack.c.h.b16 %v1999
      %v2042 = vunpack.c.l.b16 %v2000
      %v2043 = vunpack.c.h.b16 %v2000
      %v2044 = vunpack.c.l.b16 %v2001
      %v2045 = vunpack.c.h.b16 %v2001
      %v2046 = vpack.c.b16 %v2032, %v2030
      %v2047 = vpack.c.b16 %v2033, %v2031
      %v2048 = vpack.c.b16 %v2036, %v2034
      %v2049 = vpack.c.b16 %v2037, %v2035
      %v2050 = vpack.c.b16 %v2040, %v2038
      %v2051 = vpack.c.b16 %v2041, %v2039
      %v2052 = vpack.c.b16 %v2044, %v2042
      %v2053 = vpack.c.b16 %v2045, %v2043
      %v2063 = vsel %vm328, %v2018, 0
      %v2066 = vsel %vm328, %v2019, 0
      %v2069 = vsel %vm328, %v2020, 0
      %v2072 = vsel %vm328, %v2021, 0
      %2074 = vmatprep.subr.bf16.mxu0 0
      %2075 = vmatpush1.bf16.msra.mxu0 0
      %2076 = vmatprep.subr.bf16.mxu0 0
      %2077 = vmatpush1.bf16.msra.mxu0 0
      %2078 = vmatprep.subr.bf16.mxu0 0
      %2079 = vmatpush1.bf16.msra.mxu0 0
      %2080 = vmatprep.subr.bf16.mxu0 0
      %2081 = vmatpush1.bf16.msra.mxu0 0
      %2082 = vmatprep.subr.bf16.mxu0 %v2053
      %2083 = vmatpush1.bf16.msra.mxu0 %v2052
      %2084 = vmatprep.subr.bf16.mxu0 %v2051
      %2085 = vmatpush1.bf16.msra.mxu0 %v2050
      %2086 = vmatprep.subr.bf16.mxu0 %v2049
      %2087 = vmatpush1.bf16.msra.mxu0 %v2048
      %2088 = vmatprep.subr.bf16.mxu0 %v2047
      %2089 = vmatpush1.bf16.msra.mxu0 %v2046
      %2090 = vmatprep.subr.bf16.mxu0 0
      %2091 = vmatpush2.bf16.msra.mxu0 0
      %2092 = vmatprep.subr.bf16.mxu0 0
      %2093 = vmatpush2.bf16.msra.mxu0 0
      %2094 = vmatprep.subr.bf16.mxu0 0
      %2095 = vmatpush2.bf16.msra.mxu0 0
      %2096 = vmatprep.subr.bf16.mxu0 0
      %2097 = vmatpush2.bf16.msra.mxu0 0
      %2098 = vmatprep.subr.bf16.mxu0 0
      %2099 = vmatpush2.bf16.msra.mxu0 0
      %2100 = vmatprep.subr.bf16.mxu0 0
      %2101 = vmatpush2.bf16.msra.mxu0 0
      %2102 = vmatprep.subr.bf16.mxu0 0
      %2103 = vmatpush2.bf16.msra.mxu0 0
      %2104 = vmatprep.subr.bf16.mxu0 0
      %2105 = vmatpush2.bf16.msra.mxu0 0
      %2106 = vmatprep.mubr.bf16.mxu0 0
      %2107 = vmatmul.mubr.bf16.gmra.mxu0 %v2063
      %v2108 = vpop.f32.mrf.mxu0
      %v2109 = vadd.f32 0.0, %v2108
      %v2110 = vpop.f32.mrf.mxu0
      %v2111 = vadd.f32 0.0, %v2110
      %v2112 = vpop.f32.mrf.mxu0
      %v2113 = vadd.f32 0.0, %v2112
      %v2114 = vpop.f32.mrf.mxu0
      %v2115 = vadd.f32 0.0, %v2114
      %2116 = vmatprep.mubr.bf16.mxu0 0
      %2117 = vmatmul.mubr.bf16.gmra.mxu0 %v2066
      %v2118 = vpop.f32.mrf.mxu0
      %v2119 = vadd.f32 0.0, %v2118
      %v2120 = vpop.f32.mrf.mxu0
      %v2121 = vadd.f32 0.0, %v2120
      %v2122 = vpop.f32.mrf.mxu0
      %v2123 = vadd.f32 0.0, %v2122
      %v2124 = vpop.f32.mrf.mxu0
      %v2125 = vadd.f32 0.0, %v2124
      %2126 = vmatprep.mubr.bf16.mxu0 0
      %2127 = vmatmul.mubr.bf16.gmra.mxu0 %v2069
      %v2128 = vpop.f32.mrf.mxu0
      %v2129 = vadd.f32 0.0, %v2128
      %v2130 = vpop.f32.mrf.mxu0
      %v2131 = vadd.f32 0.0, %v2130
      %v2132 = vpop.f32.mrf.mxu0
      %v2133 = vadd.f32 0.0, %v2132
      %v2134 = vpop.f32.mrf.mxu0
      %v2135 = vadd.f32 0.0, %v2134
      %2136 = vmatprep.mubr.bf16.mxu0 0
      %2137 = vmatmul.mubr.bf16.gmra.mxu0 %v2072
      %v2138 = vpop.f32.mrf.mxu0
      %v2139 = vadd.f32 0.0, %v2138
      %v2140 = vpop.f32.mrf.mxu0
      %v2141 = vadd.f32 0.0, %v2140
      %v2142 = vpop.f32.mrf.mxu0
      %v2143 = vadd.f32 0.0, %v2142
      %v2144 = vpop.f32.mrf.mxu0
      %v2145 = vadd.f32 0.0, %v2144
      %2146 = vdwg.mxu0
      %v2155 = vunpack.c.l.b16 %v1967
      %v2156 = vunpack.c.l.b16 %v1968
      %v2157 = vunpack.c.l.b16 %v1969
      %v2158 = vunpack.c.l.b16 %v1970
      %v2159 = vunpack.c.l.b16 %v1971
      %v2160 = vunpack.c.l.b16 %v1972
      %v2161 = vunpack.c.l.b16 %v1973
      %v2162 = vunpack.c.l.b16 %v1974
      %v2163 = vpack.c.b16 %v2156, %v2155
      %v2164 = vpack.c.b16 %v2158, %v2157
      %v2165 = vpack.c.b16 %v2160, %v2159
      %v2166 = vpack.c.b16 %v2162, %v2161
      %v2175 = vunpack.c.l.b16 %v1975
      %v2176 = vunpack.c.h.b16 %v1975
      %v2177 = vunpack.c.l.b16 %v1976
      %v2178 = vunpack.c.h.b16 %v1976
      %v2179 = vunpack.c.l.b16 %v1977
      %v2180 = vunpack.c.h.b16 %v1977
      %v2181 = vunpack.c.l.b16 %v1978
      %v2182 = vunpack.c.h.b16 %v1978
      %v2183 = vunpack.c.l.b16 %v1979
      %v2184 = vunpack.c.h.b16 %v1979
      %v2185 = vunpack.c.l.b16 %v1980
      %v2186 = vunpack.c.h.b16 %v1980
      %v2187 = vunpack.c.l.b16 %v1981
      %v2188 = vunpack.c.h.b16 %v1981
      %v2189 = vunpack.c.l.b16 %v1982
      %v2190 = vunpack.c.h.b16 %v1982
      %v2191 = vpack.c.b16 %v2177, %v2175
      %v2192 = vpack.c.b16 %v2178, %v2176
      %v2193 = vpack.c.b16 %v2181, %v2179
      %v2194 = vpack.c.b16 %v2182, %v2180
      %v2195 = vpack.c.b16 %v2185, %v2183
      %v2196 = vpack.c.b16 %v2186, %v2184
      %v2197 = vpack.c.b16 %v2189, %v2187
      %v2198 = vpack.c.b16 %v2190, %v2188
      %v2208 = vsel %vm328, %v2163, 0
      %v2211 = vsel %vm328, %v2164, 0
      %v2214 = vsel %vm328, %v2165, 0
      %v2217 = vsel %vm328, %v2166, 0
      %2219 = vmatprep.subr.bf16.mxu0 0
      %2220 = vmatpush1.bf16.msra.mxu0 0
      %2221 = vmatprep.subr.bf16.mxu0 0
      %2222 = vmatpush1.bf16.msra.mxu0 0
      %2223 = vmatprep.subr.bf16.mxu0 0
      %2224 = vmatpush1.bf16.msra.mxu0 0
      %2225 = vmatprep.subr.bf16.mxu0 0
      %2226 = vmatpush1.bf16.msra.mxu0 0
      %2227 = vmatprep.subr.bf16.mxu0 %v2198
      %2228 = vmatpush1.bf16.msra.mxu0 %v2197
      %2229 = vmatprep.subr.bf16.mxu0 %v2196
      %2230 = vmatpush1.bf16.msra.mxu0 %v2195
      %2231 = vmatprep.subr.bf16.mxu0 %v2194
      %2232 = vmatpush1.bf16.msra.mxu0 %v2193
      %2233 = vmatprep.subr.bf16.mxu0 %v2192
      %2234 = vmatpush1.bf16.msra.mxu0 %v2191
      %2235 = vmatprep.subr.bf16.mxu0 0
      %2236 = vmatpush2.bf16.msra.mxu0 0
      %2237 = vmatprep.subr.bf16.mxu0 0
      %2238 = vmatpush2.bf16.msra.mxu0 0
      %2239 = vmatprep.subr.bf16.mxu0 0
      %2240 = vmatpush2.bf16.msra.mxu0 0
      %2241 = vmatprep.subr.bf16.mxu0 0
      %2242 = vmatpush2.bf16.msra.mxu0 0
      %2243 = vmatprep.subr.bf16.mxu0 0
      %2244 = vmatpush2.bf16.msra.mxu0 0
      %2245 = vmatprep.subr.bf16.mxu0 0
      %2246 = vmatpush2.bf16.msra.mxu0 0
      %2247 = vmatprep.subr.bf16.mxu0 0
      %2248 = vmatpush2.bf16.msra.mxu0 0
      %2249 = vmatprep.subr.bf16.mxu0 0
      %2250 = vmatpush2.bf16.msra.mxu0 0
      %2251 = vmatprep.mubr.bf16.mxu0 0
      %2252 = vmatmul.mubr.bf16.gmra.mxu0 %v2208
      %v2253 = vpop.f32.mrf.mxu0
      %v2254 = vadd.f32 %v2109, %v2253
      %v2255 = vpop.f32.mrf.mxu0
      %v2256 = vadd.f32 %v2111, %v2255
      %v2257 = vpop.f32.mrf.mxu0
      %v2258 = vadd.f32 %v2113, %v2257
      %v2259 = vpop.f32.mrf.mxu0
      %v2260 = vadd.f32 %v2115, %v2259
      %2261 = vmatprep.mubr.bf16.mxu0 0
      %2262 = vmatmul.mubr.bf16.gmra.mxu0 %v2211
      %v2263 = vpop.f32.mrf.mxu0
      %v2264 = vadd.f32 %v2119, %v2263
      %v2265 = vpop.f32.mrf.mxu0
      %v2266 = vadd.f32 %v2121, %v2265
      %v2267 = vpop.f32.mrf.mxu0
      %v2268 = vadd.f32 %v2123, %v2267
      %v2269 = vpop.f32.mrf.mxu0
      %v2270 = vadd.f32 %v2125, %v2269
      %2271 = vmatprep.mubr.bf16.mxu0 0
      %2272 = vmatmul.mubr.bf16.gmra.mxu0 %v2214
      %v2273 = vpop.f32.mrf.mxu0
      %v2274 = vadd.f32 %v2129, %v2273
      %v2275 = vpop.f32.mrf.mxu0
      %v2276 = vadd.f32 %v2131, %v2275
      %v2277 = vpop.f32.mrf.mxu0
      %v2278 = vadd.f32 %v2133, %v2277
      %v2279 = vpop.f32.mrf.mxu0
      %v2280 = vadd.f32 %v2135, %v2279
      %2281 = vmatprep.mubr.bf16.mxu0 0
      %2282 = vmatmul.mubr.bf16.gmra.mxu0 %v2217
      %v2283 = vpop.f32.mrf.mxu0
      %v2284 = vadd.f32 %v2139, %v2283
      %v2285 = vpop.f32.mrf.mxu0
      %v2286 = vadd.f32 %v2141, %v2285
      %v2287 = vpop.f32.mrf.mxu0
      %v2288 = vadd.f32 %v2143, %v2287
      %v2289 = vpop.f32.mrf.mxu0
      %v2290 = vadd.f32 %v2145, %v2289
      %2291 = vdwg.mxu0
      %s2292 = sadd.s32 %s1963, 108
      %s2293 = smul.addr %s2292, 4
      %s2294 = scalar_lea.vmem %s212, %s2293
      %v2295 = vld [vmem:[%s2294] sm:$0xf]
      %v2296 = vld [vmem:[%s2294 + $0x4] sm:$0xf]
      %v2297 = vld [vmem:[%s2294 + $0x8] sm:$0xf]
      %v2298 = vld [vmem:[%s2294 + $0xc] sm:$0xf]
      %v2299 = vld [vmem:[%s2294 + $0x10] sm:$0xf]
      %v2300 = vld [vmem:[%s2294 + $0x14] sm:$0xf]
      %v2301 = vld [vmem:[%s2294 + $0x18] sm:$0xf]
      %v2302 = vld [vmem:[%s2294 + $0x1c] sm:$0xf]
      %v2303 = vld [vmem:[%s570] sm:$0xff]
      %v2304 = vld [vmem:[%s570 + $0x8] sm:$0xff]
      %v2305 = vld [vmem:[%s570 + $0x10] sm:$0xff]
      %v2306 = vld [vmem:[%s570 + $0x18] sm:$0xff]
      %v2307 = vld [vmem:[%s570 + $0x20] sm:$0xff]
      %v2308 = vld [vmem:[%s570 + $0x28] sm:$0xff]
      %v2309 = vld [vmem:[%s570 + $0x30] sm:$0xff]
      %v2310 = vld [vmem:[%s570 + $0x38] sm:$0xff]
      %v2319 = vunpack.c.l.b16 %v2295
      %v2320 = vunpack.c.l.b16 %v2296
      %v2321 = vunpack.c.l.b16 %v2297
      %v2322 = vunpack.c.l.b16 %v2298
      %v2323 = vunpack.c.l.b16 %v2299
      %v2324 = vunpack.c.l.b16 %v2300
      %v2325 = vunpack.c.l.b16 %v2301
      %v2326 = vunpack.c.l.b16 %v2302
      %v2327 = vpack.c.b16 %v2320, %v2319
      %v2328 = vpack.c.b16 %v2322, %v2321
      %v2329 = vpack.c.b16 %v2324, %v2323
      %v2330 = vpack.c.b16 %v2326, %v2325
      %v2339 = vunpack.c.l.b16 %v2303
      %v2340 = vunpack.c.h.b16 %v2303
      %v2341 = vunpack.c.l.b16 %v2304
      %v2342 = vunpack.c.h.b16 %v2304
      %v2343 = vunpack.c.l.b16 %v2305
      %v2344 = vunpack.c.h.b16 %v2305
      %v2345 = vunpack.c.l.b16 %v2306
      %v2346 = vunpack.c.h.b16 %v2306
      %v2347 = vunpack.c.l.b16 %v2307
      %v2348 = vunpack.c.h.b16 %v2307
      %v2349 = vunpack.c.l.b16 %v2308
      %v2350 = vunpack.c.h.b16 %v2308
      %v2351 = vunpack.c.l.b16 %v2309
      %v2352 = vunpack.c.h.b16 %v2309
      %v2353 = vunpack.c.l.b16 %v2310
      %v2354 = vunpack.c.h.b16 %v2310
      %v2355 = vpack.c.b16 %v2341, %v2339
      %v2356 = vpack.c.b16 %v2342, %v2340
      %v2357 = vpack.c.b16 %v2345, %v2343
      %v2358 = vpack.c.b16 %v2346, %v2344
      %v2359 = vpack.c.b16 %v2349, %v2347
      %v2360 = vpack.c.b16 %v2350, %v2348
      %v2361 = vpack.c.b16 %v2353, %v2351
      %v2362 = vpack.c.b16 %v2354, %v2352
      %v2372 = vsel %vm328, %v2327, 0
      %v2375 = vsel %vm328, %v2328, 0
      %v2378 = vsel %vm328, %v2329, 0
      %v2381 = vsel %vm328, %v2330, 0
      %2383 = vmatprep.subr.bf16.mxu0 0
      %2384 = vmatpush1.bf16.msra.mxu0 0
      %2385 = vmatprep.subr.bf16.mxu0 0
      %2386 = vmatpush1.bf16.msra.mxu0 0
      %2387 = vmatprep.subr.bf16.mxu0 0
      %2388 = vmatpush1.bf16.msra.mxu0 0
      %2389 = vmatprep.subr.bf16.mxu0 0
      %2390 = vmatpush1.bf16.msra.mxu0 0
      %2391 = vmatprep.subr.bf16.mxu0 %v2362
      %2392 = vmatpush1.bf16.msra.mxu0 %v2361
      %2393 = vmatprep.subr.bf16.mxu0 %v2360
      %2394 = vmatpush1.bf16.msra.mxu0 %v2359
      %2395 = vmatprep.subr.bf16.mxu0 %v2358
      %2396 = vmatpush1.bf16.msra.mxu0 %v2357
      %2397 = vmatprep.subr.bf16.mxu0 %v2356
      %2398 = vmatpush1.bf16.msra.mxu0 %v2355
      %2399 = vmatprep.subr.bf16.mxu0 0
      %2400 = vmatpush2.bf16.msra.mxu0 0
      %2401 = vmatprep.subr.bf16.mxu0 0
      %2402 = vmatpush2.bf16.msra.mxu0 0
      %2403 = vmatprep.subr.bf16.mxu0 0
      %2404 = vmatpush2.bf16.msra.mxu0 0
      %2405 = vmatprep.subr.bf16.mxu0 0
      %2406 = vmatpush2.bf16.msra.mxu0 0
      %2407 = vmatprep.subr.bf16.mxu0 0
      %2408 = vmatpush2.bf16.msra.mxu0 0
      %2409 = vmatprep.subr.bf16.mxu0 0
      %2410 = vmatpush2.bf16.msra.mxu0 0
      %2411 = vmatprep.subr.bf16.mxu0 0
      %2412 = vmatpush2.bf16.msra.mxu0 0
      %2413 = vmatprep.subr.bf16.mxu0 0
      %2414 = vmatpush2.bf16.msra.mxu0 0
      %2415 = vmatprep.mubr.bf16.mxu0 0
      %2416 = vmatmul.mubr.bf16.gmra.mxu0 %v2372
      %v2417 = vpop.f32.mrf.mxu0
      %v2418 = vadd.f32 0.0, %v2417
      %v2419 = vpop.f32.mrf.mxu0
      %v2420 = vadd.f32 0.0, %v2419
      %v2421 = vpop.f32.mrf.mxu0
      %v2422 = vadd.f32 0.0, %v2421
      %v2423 = vpop.f32.mrf.mxu0
      %v2424 = vadd.f32 0.0, %v2423
      %2425 = vmatprep.mubr.bf16.mxu0 0
      %2426 = vmatmul.mubr.bf16.gmra.mxu0 %v2375
      %v2427 = vpop.f32.mrf.mxu0
      %v2428 = vadd.f32 0.0, %v2427
      %v2429 = vpop.f32.mrf.mxu0
      %v2430 = vadd.f32 0.0, %v2429
      %v2431 = vpop.f32.mrf.mxu0
      %v2432 = vadd.f32 0.0, %v2431
      %v2433 = vpop.f32.mrf.mxu0
      %v2434 = vadd.f32 0.0, %v2433
      %2435 = vmatprep.mubr.bf16.mxu0 0
      %2436 = vmatmul.mubr.bf16.gmra.mxu0 %v2378
      %v2437 = vpop.f32.mrf.mxu0
      %v2438 = vadd.f32 0.0, %v2437
      %v2439 = vpop.f32.mrf.mxu0
      %v2440 = vadd.f32 0.0, %v2439
      %v2441 = vpop.f32.mrf.mxu0
      %v2442 = vadd.f32 0.0, %v2441
      %v2443 = vpop.f32.mrf.mxu0
      %v2444 = vadd.f32 0.0, %v2443
      %2445 = vmatprep.mubr.bf16.mxu0 0
      %2446 = vmatmul.mubr.bf16.gmra.mxu0 %v2381
      %v2447 = vpop.f32.mrf.mxu0
      %v2448 = vadd.f32 0.0, %v2447
      %v2449 = vpop.f32.mrf.mxu0
      %v2450 = vadd.f32 0.0, %v2449
      %v2451 = vpop.f32.mrf.mxu0
      %v2452 = vadd.f32 0.0, %v2451
      %v2453 = vpop.f32.mrf.mxu0
      %v2454 = vadd.f32 0.0, %v2453
      %2455 = vdwg.mxu0
      %v2456 = vadd.f32 %v2254, %v2418
      %v2457 = vadd.f32 %v2256, %v2420
      %v2458 = vadd.f32 %v2258, %v2422
      %v2459 = vadd.f32 %v2260, %v2424
      %v2460 = vadd.f32 %v2264, %v2428
      %v2461 = vadd.f32 %v2266, %v2430
      %v2462 = vadd.f32 %v2268, %v2432
      %v2463 = vadd.f32 %v2270, %v2434
      %v2464 = vadd.f32 %v2274, %v2438
      %v2465 = vadd.f32 %v2276, %v2440
      %v2466 = vadd.f32 %v2278, %v2442
      %v2467 = vadd.f32 %v2280, %v2444
      %v2468 = vadd.f32 %v2284, %v2448
      %v2469 = vadd.f32 %v2286, %v2450
      %v2470 = vadd.f32 %v2288, %v2452
      %v2471 = vadd.f32 %v2290, %v2454
      %s2472 = sadd.s32 %s225, 88
      %s2473 = sshra.s32 %s2472, 3
      %s2474 = sand.u32 %s2472, 7
      %s2475 = smul.addr %s2473, 4
      %s2476 = scalar_lea.vmem %s212, %s2475
      %v2477 = vld [vmem:[%s2476] sm:$0xf]
      %v2478 = vld [vmem:[%s2476 + $0x4] sm:$0xf]
      %v2479 = vld [vmem:[%s2476 + $0x8] sm:$0xf]
      %v2480 = vld [vmem:[%s2476 + $0xc] sm:$0xf]
      %v2481 = vld [vmem:[%s2476 + $0x10] sm:$0xf]
      %v2482 = vld [vmem:[%s2476 + $0x14] sm:$0xf]
      %v2483 = vld [vmem:[%s2476 + $0x18] sm:$0xf]
      %v2484 = vld [vmem:[%s2476 + $0x1c] sm:$0xf]
      %v2485 = vld [vmem:[%s753] sm:$0xff]
      %v2486 = vld [vmem:[%s753 + $0x8] sm:$0xff]
      %v2487 = vld [vmem:[%s753 + $0x10] sm:$0xff]
      %v2488 = vld [vmem:[%s753 + $0x18] sm:$0xff]
      %v2489 = vld [vmem:[%s753 + $0x20] sm:$0xff]
      %v2490 = vld [vmem:[%s753 + $0x28] sm:$0xff]
      %v2491 = vld [vmem:[%s753 + $0x30] sm:$0xff]
      %v2492 = vld [vmem:[%s753 + $0x38] sm:$0xff]
      %v2501 = vunpack.c.l.b16 %v2477
      %v2502 = vunpack.c.l.b16 %v2478
      %v2503 = vunpack.c.l.b16 %v2479
      %v2504 = vunpack.c.l.b16 %v2480
      %v2505 = vunpack.c.l.b16 %v2481
      %v2506 = vunpack.c.l.b16 %v2482
      %v2507 = vunpack.c.l.b16 %v2483
      %v2508 = vunpack.c.l.b16 %v2484
      %v2509 = vpack.c.b16 %v2502, %v2501
      %v2510 = vpack.c.b16 %v2504, %v2503
      %v2511 = vpack.c.b16 %v2506, %v2505
      %v2512 = vpack.c.b16 %v2508, %v2507
      %v2521 = vunpack.c.l.b16 %v2485
      %v2522 = vunpack.c.h.b16 %v2485
      %v2523 = vunpack.c.l.b16 %v2486
      %v2524 = vunpack.c.h.b16 %v2486
      %v2525 = vunpack.c.l.b16 %v2487
      %v2526 = vunpack.c.h.b16 %v2487
      %v2527 = vunpack.c.l.b16 %v2488
      %v2528 = vunpack.c.h.b16 %v2488
      %v2529 = vunpack.c.l.b16 %v2489
      %v2530 = vunpack.c.h.b16 %v2489
      %v2531 = vunpack.c.l.b16 %v2490
      %v2532 = vunpack.c.h.b16 %v2490
      %v2533 = vunpack.c.l.b16 %v2491
      %v2534 = vunpack.c.h.b16 %v2491
      %v2535 = vunpack.c.l.b16 %v2492
      %v2536 = vunpack.c.h.b16 %v2492
      %v2537 = vpack.c.b16 %v2523, %v2521
      %v2538 = vpack.c.b16 %v2524, %v2522
      %v2539 = vpack.c.b16 %v2527, %v2525
      %v2540 = vpack.c.b16 %v2528, %v2526
      %v2541 = vpack.c.b16 %v2531, %v2529
      %v2542 = vpack.c.b16 %v2532, %v2530
      %v2543 = vpack.c.b16 %v2535, %v2533
      %v2544 = vpack.c.b16 %v2536, %v2534
      %v2554 = vsel %vm328, %v2509, 0
      %v2557 = vsel %vm328, %v2510, 0
      %v2560 = vsel %vm328, %v2511, 0
      %v2563 = vsel %vm328, %v2512, 0
      %2565 = vmatprep.subr.bf16.mxu0 0
      %2566 = vmatpush1.bf16.msra.mxu0 0
      %2567 = vmatprep.subr.bf16.mxu0 0
      %2568 = vmatpush1.bf16.msra.mxu0 0
      %2569 = vmatprep.subr.bf16.mxu0 0
      %2570 = vmatpush1.bf16.msra.mxu0 0
      %2571 = vmatprep.subr.bf16.mxu0 0
      %2572 = vmatpush1.bf16.msra.mxu0 0
      %2573 = vmatprep.subr.bf16.mxu0 %v2544
      %2574 = vmatpush1.bf16.msra.mxu0 %v2543
      %2575 = vmatprep.subr.bf16.mxu0 %v2542
      %2576 = vmatpush1.bf16.msra.mxu0 %v2541
      %2577 = vmatprep.subr.bf16.mxu0 %v2540
      %2578 = vmatpush1.bf16.msra.mxu0 %v2539
      %2579 = vmatprep.subr.bf16.mxu0 %v2538
      %2580 = vmatpush1.bf16.msra.mxu0 %v2537
      %2581 = vmatprep.subr.bf16.mxu0 0
      %2582 = vmatpush2.bf16.msra.mxu0 0
      %2583 = vmatprep.subr.bf16.mxu0 0
      %2584 = vmatpush2.bf16.msra.mxu0 0
      %2585 = vmatprep.subr.bf16.mxu0 0
      %2586 = vmatpush2.bf16.msra.mxu0 0
      %2587 = vmatprep.subr.bf16.mxu0 0
      %2588 = vmatpush2.bf16.msra.mxu0 0
      %2589 = vmatprep.subr.bf16.mxu0 0
      %2590 = vmatpush2.bf16.msra.mxu0 0
      %2591 = vmatprep.subr.bf16.mxu0 0
      %2592 = vmatpush2.bf16.msra.mxu0 0
      %2593 = vmatprep.subr.bf16.mxu0 0
      %2594 = vmatpush2.bf16.msra.mxu0 0
      %2595 = vmatprep.subr.bf16.mxu0 0
      %2596 = vmatpush2.bf16.msra.mxu0 0
      %2597 = vmatprep.mubr.bf16.mxu0 0
      %2598 = vmatmul.mubr.bf16.gmra.mxu0 %v2554
      %v2599 = vpop.f32.mrf.mxu0
      %v2600 = vadd.f32 0.0, %v2599
      %v2601 = vpop.f32.mrf.mxu0
      %v2602 = vadd.f32 0.0, %v2601
      %v2603 = vpop.f32.mrf.mxu0
      %v2604 = vadd.f32 0.0, %v2603
      %v2605 = vpop.f32.mrf.mxu0
      %v2606 = vadd.f32 0.0, %v2605
      %2607 = vmatprep.mubr.bf16.mxu0 0
      %2608 = vmatmul.mubr.bf16.gmra.mxu0 %v2557
      %v2609 = vpop.f32.mrf.mxu0
      %v2610 = vadd.f32 0.0, %v2609
      %v2611 = vpop.f32.mrf.mxu0
      %v2612 = vadd.f32 0.0, %v2611
      %v2613 = vpop.f32.mrf.mxu0
      %v2614 = vadd.f32 0.0, %v2613
      %v2615 = vpop.f32.mrf.mxu0
      %v2616 = vadd.f32 0.0, %v2615
      %2617 = vmatprep.mubr.bf16.mxu0 0
      %2618 = vmatmul.mubr.bf16.gmra.mxu0 %v2560
      %v2619 = vpop.f32.mrf.mxu0
      %v2620 = vadd.f32 0.0, %v2619
      %v2621 = vpop.f32.mrf.mxu0
      %v2622 = vadd.f32 0.0, %v2621
      %v2623 = vpop.f32.mrf.mxu0
      %v2624 = vadd.f32 0.0, %v2623
      %v2625 = vpop.f32.mrf.mxu0
      %v2626 = vadd.f32 0.0, %v2625
      %2627 = vmatprep.mubr.bf16.mxu0 0
      %2628 = vmatmul.mubr.bf16.gmra.mxu0 %v2563
      %v2629 = vpop.f32.mrf.mxu0
      %v2630 = vadd.f32 0.0, %v2629
      %v2631 = vpop.f32.mrf.mxu0
      %v2632 = vadd.f32 0.0, %v2631
      %v2633 = vpop.f32.mrf.mxu0
      %v2634 = vadd.f32 0.0, %v2633
      %v2635 = vpop.f32.mrf.mxu0
      %v2636 = vadd.f32 0.0, %v2635
      %2637 = vdwg.mxu0
      %v2638 = vadd.f32 %v2456, %v2600
      %v2639 = vadd.f32 %v2457, %v2602
      %v2640 = vadd.f32 %v2458, %v2604
      %v2641 = vadd.f32 %v2459, %v2606
      %v2642 = vadd.f32 %v2460, %v2610
      %v2643 = vadd.f32 %v2461, %v2612
      %v2644 = vadd.f32 %v2462, %v2614
      %v2645 = vadd.f32 %v2463, %v2616
      %v2646 = vadd.f32 %v2464, %v2620
      %v2647 = vadd.f32 %v2465, %v2622
      %v2648 = vadd.f32 %v2466, %v2624
      %v2649 = vadd.f32 %v2467, %v2626
      %v2650 = vadd.f32 %v2468, %v2630
      %v2651 = vadd.f32 %v2469, %v2632
      %v2652 = vadd.f32 %v2470, %v2634
      %v2653 = vadd.f32 %v2471, %v2636
      %s2654 = sadd.s32 %s2473, 54
      %s2655 = smul.addr %s2654, 4
      %s2656 = scalar_lea.vmem %s212, %s2655
      %v2657 = vld [vmem:[%s2656] sm:$0xf]
      %v2658 = vld [vmem:[%s2656 + $0x4] sm:$0xf]
      %v2659 = vld [vmem:[%s2656 + $0x8] sm:$0xf]
      %v2660 = vld [vmem:[%s2656 + $0xc] sm:$0xf]
      %v2661 = vld [vmem:[%s2656 + $0x10] sm:$0xf]
      %v2662 = vld [vmem:[%s2656 + $0x14] sm:$0xf]
      %v2663 = vld [vmem:[%s2656 + $0x18] sm:$0xf]
      %v2664 = vld [vmem:[%s2656 + $0x1c] sm:$0xf]
      %v2665 = vld [vmem:[%s934] sm:$0xff]
      %v2666 = vld [vmem:[%s934 + $0x8] sm:$0xff]
      %v2667 = vld [vmem:[%s934 + $0x10] sm:$0xff]
      %v2668 = vld [vmem:[%s934 + $0x18] sm:$0xff]
      %v2669 = vld [vmem:[%s934 + $0x20] sm:$0xff]
      %v2670 = vld [vmem:[%s934 + $0x28] sm:$0xff]
      %v2671 = vld [vmem:[%s934 + $0x30] sm:$0xff]
      %v2672 = vld [vmem:[%s934 + $0x38] sm:$0xff]
      %v2681 = vunpack.c.l.b16 %v2657
      %v2682 = vunpack.c.l.b16 %v2658
      %v2683 = vunpack.c.l.b16 %v2659
      %v2684 = vunpack.c.l.b16 %v2660
      %v2685 = vunpack.c.l.b16 %v2661
      %v2686 = vunpack.c.l.b16 %v2662
      %v2687 = vunpack.c.l.b16 %v2663
      %v2688 = vunpack.c.l.b16 %v2664
      %v2689 = vpack.c.b16 %v2682, %v2681
      %v2690 = vpack.c.b16 %v2684, %v2683
      %v2691 = vpack.c.b16 %v2686, %v2685
      %v2692 = vpack.c.b16 %v2688, %v2687
      %v2701 = vunpack.c.l.b16 %v2665
      %v2702 = vunpack.c.h.b16 %v2665
      %v2703 = vunpack.c.l.b16 %v2666
      %v2704 = vunpack.c.h.b16 %v2666
      %v2705 = vunpack.c.l.b16 %v2667
      %v2706 = vunpack.c.h.b16 %v2667
      %v2707 = vunpack.c.l.b16 %v2668
      %v2708 = vunpack.c.h.b16 %v2668
      %v2709 = vunpack.c.l.b16 %v2669
      %v2710 = vunpack.c.h.b16 %v2669
      %v2711 = vunpack.c.l.b16 %v2670
      %v2712 = vunpack.c.h.b16 %v2670
      %v2713 = vunpack.c.l.b16 %v2671
      %v2714 = vunpack.c.h.b16 %v2671
      %v2715 = vunpack.c.l.b16 %v2672
      %v2716 = vunpack.c.h.b16 %v2672
      %v2717 = vpack.c.b16 %v2703, %v2701
      %v2718 = vpack.c.b16 %v2704, %v2702
      %v2719 = vpack.c.b16 %v2707, %v2705
      %v2720 = vpack.c.b16 %v2708, %v2706
      %v2721 = vpack.c.b16 %v2711, %v2709
      %v2722 = vpack.c.b16 %v2712, %v2710
      %v2723 = vpack.c.b16 %v2715, %v2713
      %v2724 = vpack.c.b16 %v2716, %v2714
      %v2734 = vsel %vm328, %v2689, 0
      %v2737 = vsel %vm328, %v2690, 0
      %v2740 = vsel %vm328, %v2691, 0
      %v2743 = vsel %vm328, %v2692, 0
      %2745 = vmatprep.subr.bf16.mxu0 0
      %2746 = vmatpush1.bf16.msra.mxu0 0
      %2747 = vmatprep.subr.bf16.mxu0 0
      %2748 = vmatpush1.bf16.msra.mxu0 0
      %2749 = vmatprep.subr.bf16.mxu0 0
      %2750 = vmatpush1.bf16.msra.mxu0 0
      %2751 = vmatprep.subr.bf16.mxu0 0
      %2752 = vmatpush1.bf16.msra.mxu0 0
      %2753 = vmatprep.subr.bf16.mxu0 %v2724
      %2754 = vmatpush1.bf16.msra.mxu0 %v2723
      %2755 = vmatprep.subr.bf16.mxu0 %v2722
      %2756 = vmatpush1.bf16.msra.mxu0 %v2721
      %2757 = vmatprep.subr.bf16.mxu0 %v2720
      %2758 = vmatpush1.bf16.msra.mxu0 %v2719
      %2759 = vmatprep.subr.bf16.mxu0 %v2718
      %2760 = vmatpush1.bf16.msra.mxu0 %v2717
      %2761 = vmatprep.subr.bf16.mxu0 0
      %2762 = vmatpush2.bf16.msra.mxu0 0
      %2763 = vmatprep.subr.bf16.mxu0 0
      %2764 = vmatpush2.bf16.msra.mxu0 0
      %2765 = vmatprep.subr.bf16.mxu0 0
      %2766 = vmatpush2.bf16.msra.mxu0 0
      %2767 = vmatprep.subr.bf16.mxu0 0
      %2768 = vmatpush2.bf16.msra.mxu0 0
      %2769 = vmatprep.subr.bf16.mxu0 0
      %2770 = vmatpush2.bf16.msra.mxu0 0
      %2771 = vmatprep.subr.bf16.mxu0 0
      %2772 = vmatpush2.bf16.msra.mxu0 0
      %2773 = vmatprep.subr.bf16.mxu0 0
      %2774 = vmatpush2.bf16.msra.mxu0 0
      %2775 = vmatprep.subr.bf16.mxu0 0
      %2776 = vmatpush2.bf16.msra.mxu0 0
      %2777 = vmatprep.mubr.bf16.mxu0 0
      %2778 = vmatmul.mubr.bf16.gmra.mxu0 %v2734
      %v2779 = vpop.f32.mrf.mxu0
      %v2780 = vadd.f32 0.0, %v2779
      %v2781 = vpop.f32.mrf.mxu0
      %v2782 = vadd.f32 0.0, %v2781
      %v2783 = vpop.f32.mrf.mxu0
      %v2784 = vadd.f32 0.0, %v2783
      %v2785 = vpop.f32.mrf.mxu0
      %v2786 = vadd.f32 0.0, %v2785
      %2787 = vmatprep.mubr.bf16.mxu0 0
      %2788 = vmatmul.mubr.bf16.gmra.mxu0 %v2737
      %v2789 = vpop.f32.mrf.mxu0
      %v2790 = vadd.f32 0.0, %v2789
      %v2791 = vpop.f32.mrf.mxu0
      %v2792 = vadd.f32 0.0, %v2791
      %v2793 = vpop.f32.mrf.mxu0
      %v2794 = vadd.f32 0.0, %v2793
      %v2795 = vpop.f32.mrf.mxu0
      %v2796 = vadd.f32 0.0, %v2795
      %2797 = vmatprep.mubr.bf16.mxu0 0
      %2798 = vmatmul.mubr.bf16.gmra.mxu0 %v2740
      %v2799 = vpop.f32.mrf.mxu0
      %v2800 = vadd.f32 0.0, %v2799
      %v2801 = vpop.f32.mrf.mxu0
      %v2802 = vadd.f32 0.0, %v2801
      %v2803 = vpop.f32.mrf.mxu0
      %v2804 = vadd.f32 0.0, %v2803
      %v2805 = vpop.f32.mrf.mxu0
      %v2806 = vadd.f32 0.0, %v2805
      %2807 = vmatprep.mubr.bf16.mxu0 0
      %2808 = vmatmul.mubr.bf16.gmra.mxu0 %v2743
      %v2809 = vpop.f32.mrf.mxu0
      %v2810 = vadd.f32 0.0, %v2809
      %v2811 = vpop.f32.mrf.mxu0
      %v2812 = vadd.f32 0.0, %v2811
      %v2813 = vpop.f32.mrf.mxu0
      %v2814 = vadd.f32 0.0, %v2813
      %v2815 = vpop.f32.mrf.mxu0
      %v2816 = vadd.f32 0.0, %v2815
      %2817 = vdwg.mxu0
      %v2818 = vadd.f32 %v2638, %v2780
      %v2819 = vadd.f32 %v2639, %v2782
      %v2820 = vadd.f32 %v2640, %v2784
      %v2821 = vadd.f32 %v2641, %v2786
      %v2822 = vadd.f32 %v2642, %v2790
      %v2823 = vadd.f32 %v2643, %v2792
      %v2824 = vadd.f32 %v2644, %v2794
      %v2825 = vadd.f32 %v2645, %v2796
      %v2826 = vadd.f32 %v2646, %v2800
      %v2827 = vadd.f32 %v2647, %v2802
      %v2828 = vadd.f32 %v2648, %v2804
      %v2829 = vadd.f32 %v2649, %v2806
      %v2830 = vadd.f32 %v2650, %v2810
      %v2831 = vadd.f32 %v2651, %v2812
      %v2832 = vadd.f32 %v2652, %v2814
      %v2833 = vadd.f32 %v2653, %v2816
      %s2834 = sadd.s32 %s2473, 108
      %s2835 = smul.addr %s2834, 4
      %s2836 = scalar_lea.vmem %s212, %s2835
      %v2837 = vld [vmem:[%s2836] sm:$0xf]
      %v2838 = vld [vmem:[%s2836 + $0x4] sm:$0xf]
      %v2839 = vld [vmem:[%s2836 + $0x8] sm:$0xf]
      %v2840 = vld [vmem:[%s2836 + $0xc] sm:$0xf]
      %v2841 = vld [vmem:[%s2836 + $0x10] sm:$0xf]
      %v2842 = vld [vmem:[%s2836 + $0x14] sm:$0xf]
      %v2843 = vld [vmem:[%s2836 + $0x18] sm:$0xf]
      %v2844 = vld [vmem:[%s2836 + $0x1c] sm:$0xf]
      %v2845 = vld [vmem:[%s1115] sm:$0xff]
      %v2846 = vld [vmem:[%s1115 + $0x8] sm:$0xff]
      %v2847 = vld [vmem:[%s1115 + $0x10] sm:$0xff]
      %v2848 = vld [vmem:[%s1115 + $0x18] sm:$0xff]
      %v2849 = vld [vmem:[%s1115 + $0x20] sm:$0xff]
      %v2850 = vld [vmem:[%s1115 + $0x28] sm:$0xff]
      %v2851 = vld [vmem:[%s1115 + $0x30] sm:$0xff]
      %v2852 = vld [vmem:[%s1115 + $0x38] sm:$0xff]
      %v2861 = vunpack.c.l.b16 %v2837
      %v2862 = vunpack.c.l.b16 %v2838
      %v2863 = vunpack.c.l.b16 %v2839
      %v2864 = vunpack.c.l.b16 %v2840
      %v2865 = vunpack.c.l.b16 %v2841
      %v2866 = vunpack.c.l.b16 %v2842
      %v2867 = vunpack.c.l.b16 %v2843
      %v2868 = vunpack.c.l.b16 %v2844
      %v2869 = vpack.c.b16 %v2862, %v2861
      %v2870 = vpack.c.b16 %v2864, %v2863
      %v2871 = vpack.c.b16 %v2866, %v2865
      %v2872 = vpack.c.b16 %v2868, %v2867
      %v2881 = vunpack.c.l.b16 %v2845
      %v2882 = vunpack.c.h.b16 %v2845
      %v2883 = vunpack.c.l.b16 %v2846
      %v2884 = vunpack.c.h.b16 %v2846
      %v2885 = vunpack.c.l.b16 %v2847
      %v2886 = vunpack.c.h.b16 %v2847
      %v2887 = vunpack.c.l.b16 %v2848
      %v2888 = vunpack.c.h.b16 %v2848
      %v2889 = vunpack.c.l.b16 %v2849
      %v2890 = vunpack.c.h.b16 %v2849
      %v2891 = vunpack.c.l.b16 %v2850
      %v2892 = vunpack.c.h.b16 %v2850
      %v2893 = vunpack.c.l.b16 %v2851
      %v2894 = vunpack.c.h.b16 %v2851
      %v2895 = vunpack.c.l.b16 %v2852
      %v2896 = vunpack.c.h.b16 %v2852
      %v2897 = vpack.c.b16 %v2883, %v2881
      %v2898 = vpack.c.b16 %v2884, %v2882
      %v2899 = vpack.c.b16 %v2887, %v2885
      %v2900 = vpack.c.b16 %v2888, %v2886
      %v2901 = vpack.c.b16 %v2891, %v2889
      %v2902 = vpack.c.b16 %v2892, %v2890
      %v2903 = vpack.c.b16 %v2895, %v2893
      %v2904 = vpack.c.b16 %v2896, %v2894
      %v2914 = vsel %vm328, %v2869, 0
      %v2917 = vsel %vm328, %v2870, 0
      %v2920 = vsel %vm328, %v2871, 0
      %v2923 = vsel %vm328, %v2872, 0
      %2925 = vmatprep.subr.bf16.mxu0 0
      %2926 = vmatpush1.bf16.msra.mxu0 0
      %2927 = vmatprep.subr.bf16.mxu0 0
      %2928 = vmatpush1.bf16.msra.mxu0 0
      %2929 = vmatprep.subr.bf16.mxu0 0
      %2930 = vmatpush1.bf16.msra.mxu0 0
      %2931 = vmatprep.subr.bf16.mxu0 0
      %2932 = vmatpush1.bf16.msra.mxu0 0
      %2933 = vmatprep.subr.bf16.mxu0 %v2904
      %2934 = vmatpush1.bf16.msra.mxu0 %v2903
      %2935 = vmatprep.subr.bf16.mxu0 %v2902
      %2936 = vmatpush1.bf16.msra.mxu0 %v2901
      %2937 = vmatprep.subr.bf16.mxu0 %v2900
      %2938 = vmatpush1.bf16.msra.mxu0 %v2899
      %2939 = vmatprep.subr.bf16.mxu0 %v2898
      %2940 = vmatpush1.bf16.msra.mxu0 %v2897
      %2941 = vmatprep.subr.bf16.mxu0 0
      %2942 = vmatpush2.bf16.msra.mxu0 0
      %2943 = vmatprep.subr.bf16.mxu0 0
      %2944 = vmatpush2.bf16.msra.mxu0 0
      %2945 = vmatprep.subr.bf16.mxu0 0
      %2946 = vmatpush2.bf16.msra.mxu0 0
      %2947 = vmatprep.subr.bf16.mxu0 0
      %2948 = vmatpush2.bf16.msra.mxu0 0
      %2949 = vmatprep.subr.bf16.mxu0 0
      %2950 = vmatpush2.bf16.msra.mxu0 0
      %2951 = vmatprep.subr.bf16.mxu0 0
      %2952 = vmatpush2.bf16.msra.mxu0 0
      %2953 = vmatprep.subr.bf16.mxu0 0
      %2954 = vmatpush2.bf16.msra.mxu0 0
      %2955 = vmatprep.subr.bf16.mxu0 0
      %2956 = vmatpush2.bf16.msra.mxu0 0
      %2957 = vmatprep.mubr.bf16.mxu0 0
      %2958 = vmatmul.mubr.bf16.gmra.mxu0 %v2914
      %v2959 = vpop.f32.mrf.mxu0
      %v2960 = vadd.f32 0.0, %v2959
      %v2961 = vpop.f32.mrf.mxu0
      %v2962 = vadd.f32 0.0, %v2961
      %v2963 = vpop.f32.mrf.mxu0
      %v2964 = vadd.f32 0.0, %v2963
      %v2965 = vpop.f32.mrf.mxu0
      %v2966 = vadd.f32 0.0, %v2965
      %2967 = vmatprep.mubr.bf16.mxu0 0
      %2968 = vmatmul.mubr.bf16.gmra.mxu0 %v2917
      %v2969 = vpop.f32.mrf.mxu0
      %v2970 = vadd.f32 0.0, %v2969
      %v2971 = vpop.f32.mrf.mxu0
      %v2972 = vadd.f32 0.0, %v2971
      %v2973 = vpop.f32.mrf.mxu0
      %v2974 = vadd.f32 0.0, %v2973
      %v2975 = vpop.f32.mrf.mxu0
      %v2976 = vadd.f32 0.0, %v2975
      %2977 = vmatprep.mubr.bf16.mxu0 0
      %2978 = vmatmul.mubr.bf16.gmra.mxu0 %v2920
      %v2979 = vpop.f32.mrf.mxu0
      %v2980 = vadd.f32 0.0, %v2979
      %v2981 = vpop.f32.mrf.mxu0
      %v2982 = vadd.f32 0.0, %v2981
      %v2983 = vpop.f32.mrf.mxu0
      %v2984 = vadd.f32 0.0, %v2983
      %v2985 = vpop.f32.mrf.mxu0
      %v2986 = vadd.f32 0.0, %v2985
      %2987 = vmatprep.mubr.bf16.mxu0 0
      %2988 = vmatmul.mubr.bf16.gmra.mxu0 %v2923
      %v2989 = vpop.f32.mrf.mxu0
      %v2990 = vadd.f32 0.0, %v2989
      %v2991 = vpop.f32.mrf.mxu0
      %v2992 = vadd.f32 0.0, %v2991
      %v2993 = vpop.f32.mrf.mxu0
      %v2994 = vadd.f32 0.0, %v2993
      %v2995 = vpop.f32.mrf.mxu0
      %v2996 = vadd.f32 0.0, %v2995
      %2997 = vdwg.mxu0
      %v2998 = vadd.f32 %v2818, %v2960
      %v2999 = vadd.f32 %v2819, %v2962
      %v3000 = vadd.f32 %v2820, %v2964
      %v3001 = vadd.f32 %v2821, %v2966
      %v3002 = vadd.f32 %v2822, %v2970
      %v3003 = vadd.f32 %v2823, %v2972
      %v3004 = vadd.f32 %v2824, %v2974
      %v3005 = vadd.f32 %v2825, %v2976
      %v3006 = vadd.f32 %v2826, %v2980
      %v3007 = vadd.f32 %v2827, %v2982
      %v3008 = vadd.f32 %v2828, %v2984
      %v3009 = vadd.f32 %v2829, %v2986
      %v3010 = vadd.f32 %v2830, %v2990
      %v3011 = vadd.f32 %v2831, %v2992
      %v3012 = vadd.f32 %v2832, %v2994
      %v3013 = vadd.f32 %v2833, %v2996
      %s3014 = sadd.s32 %s225, 112
      %s3015 = sshra.s32 %s3014, 3
      %s3016 = sand.u32 %s3014, 7
      %s3017 = smul.addr %s3015, 4
      %s3018 = scalar_lea.vmem %s212, %s3017
      %v3019 = vld [vmem:[%s3018] sm:$0xf]
      %v3020 = vld [vmem:[%s3018 + $0x4] sm:$0xf]
      %v3021 = vld [vmem:[%s3018 + $0x8] sm:$0xf]
      %v3022 = vld [vmem:[%s3018 + $0xc] sm:$0xf]
      %v3023 = vld [vmem:[%s3018 + $0x10] sm:$0xf]
      %v3024 = vld [vmem:[%s3018 + $0x14] sm:$0xf]
      %v3025 = vld [vmem:[%s3018 + $0x18] sm:$0xf]
      %v3026 = vld [vmem:[%s3018 + $0x1c] sm:$0xf]
      %v3027 = vld [vmem:[%s1298] sm:$0xff]
      %v3028 = vld [vmem:[%s1298 + $0x8] sm:$0xff]
      %v3029 = vld [vmem:[%s1298 + $0x10] sm:$0xff]
      %v3030 = vld [vmem:[%s1298 + $0x18] sm:$0xff]
      %v3031 = vld [vmem:[%s1298 + $0x20] sm:$0xff]
      %v3032 = vld [vmem:[%s1298 + $0x28] sm:$0xff]
      %v3033 = vld [vmem:[%s1298 + $0x30] sm:$0xff]
      %v3034 = vld [vmem:[%s1298 + $0x38] sm:$0xff]
      %v3043 = vunpack.c.l.b16 %v3019
      %v3044 = vunpack.c.l.b16 %v3020
      %v3045 = vunpack.c.l.b16 %v3021
      %v3046 = vunpack.c.l.b16 %v3022
      %v3047 = vunpack.c.l.b16 %v3023
      %v3048 = vunpack.c.l.b16 %v3024
      %v3049 = vunpack.c.l.b16 %v3025
      %v3050 = vunpack.c.l.b16 %v3026
      %v3051 = vpack.c.b16 %v3044, %v3043
      %v3052 = vpack.c.b16 %v3046, %v3045
      %v3053 = vpack.c.b16 %v3048, %v3047
      %v3054 = vpack.c.b16 %v3050, %v3049
      %v3063 = vunpack.c.l.b16 %v3027
      %v3064 = vunpack.c.h.b16 %v3027
      %v3065 = vunpack.c.l.b16 %v3028
      %v3066 = vunpack.c.h.b16 %v3028
      %v3067 = vunpack.c.l.b16 %v3029
      %v3068 = vunpack.c.h.b16 %v3029
      %v3069 = vunpack.c.l.b16 %v3030
      %v3070 = vunpack.c.h.b16 %v3030
      %v3071 = vunpack.c.l.b16 %v3031
      %v3072 = vunpack.c.h.b16 %v3031
      %v3073 = vunpack.c.l.b16 %v3032
      %v3074 = vunpack.c.h.b16 %v3032
      %v3075 = vunpack.c.l.b16 %v3033
      %v3076 = vunpack.c.h.b16 %v3033
      %v3077 = vunpack.c.l.b16 %v3034
      %v3078 = vunpack.c.h.b16 %v3034
      %v3079 = vpack.c.b16 %v3065, %v3063
      %v3080 = vpack.c.b16 %v3066, %v3064
      %v3081 = vpack.c.b16 %v3069, %v3067
      %v3082 = vpack.c.b16 %v3070, %v3068
      %v3083 = vpack.c.b16 %v3073, %v3071
      %v3084 = vpack.c.b16 %v3074, %v3072
      %v3085 = vpack.c.b16 %v3077, %v3075
      %v3086 = vpack.c.b16 %v3078, %v3076
      %v3096 = vsel %vm328, %v3051, 0
      %v3099 = vsel %vm328, %v3052, 0
      %v3102 = vsel %vm328, %v3053, 0
      %v3105 = vsel %vm328, %v3054, 0
      %3107 = vmatprep.subr.bf16.mxu0 0
      %3108 = vmatpush1.bf16.msra.mxu0 0
      %3109 = vmatprep.subr.bf16.mxu0 0
      %3110 = vmatpush1.bf16.msra.mxu0 0
      %3111 = vmatprep.subr.bf16.mxu0 0
      %3112 = vmatpush1.bf16.msra.mxu0 0
      %3113 = vmatprep.subr.bf16.mxu0 0
      %3114 = vmatpush1.bf16.msra.mxu0 0
      %3115 = vmatprep.subr.bf16.mxu0 %v3086
      %3116 = vmatpush1.bf16.msra.mxu0 %v3085
      %3117 = vmatprep.subr.bf16.mxu0 %v3084
      %3118 = vmatpush1.bf16.msra.mxu0 %v3083
      %3119 = vmatprep.subr.bf16.mxu0 %v3082
      %3120 = vmatpush1.bf16.msra.mxu0 %v3081
      %3121 = vmatprep.subr.bf16.mxu0 %v3080
      %3122 = vmatpush1.bf16.msra.mxu0 %v3079
      %3123 = vmatprep.subr.bf16.mxu0 0
      %3124 = vmatpush2.bf16.msra.mxu0 0
      %3125 = vmatprep.subr.bf16.mxu0 0
      %3126 = vmatpush2.bf16.msra.mxu0 0
      %3127 = vmatprep.subr.bf16.mxu0 0
      %3128 = vmatpush2.bf16.msra.mxu0 0
      %3129 = vmatprep.subr.bf16.mxu0 0
      %3130 = vmatpush2.bf16.msra.mxu0 0
      %3131 = vmatprep.subr.bf16.mxu0 0
      %3132 = vmatpush2.bf16.msra.mxu0 0
      %3133 = vmatprep.subr.bf16.mxu0 0
      %3134 = vmatpush2.bf16.msra.mxu0 0
      %3135 = vmatprep.subr.bf16.mxu0 0
      %3136 = vmatpush2.bf16.msra.mxu0 0
      %3137 = vmatprep.subr.bf16.mxu0 0
      %3138 = vmatpush2.bf16.msra.mxu0 0
      %3139 = vmatprep.mubr.bf16.mxu0 0
      %3140 = vmatmul.mubr.bf16.gmra.mxu0 %v3096
      %v3141 = vpop.f32.mrf.mxu0
      %v3142 = vadd.f32 0.0, %v3141
      %v3143 = vpop.f32.mrf.mxu0
      %v3144 = vadd.f32 0.0, %v3143
      %v3145 = vpop.f32.mrf.mxu0
      %v3146 = vadd.f32 0.0, %v3145
      %v3147 = vpop.f32.mrf.mxu0
      %v3148 = vadd.f32 0.0, %v3147
      %3149 = vmatprep.mubr.bf16.mxu0 0
      %3150 = vmatmul.mubr.bf16.gmra.mxu0 %v3099
      %v3151 = vpop.f32.mrf.mxu0
      %v3152 = vadd.f32 0.0, %v3151
      %v3153 = vpop.f32.mrf.mxu0
      %v3154 = vadd.f32 0.0, %v3153
      %v3155 = vpop.f32.mrf.mxu0
      %v3156 = vadd.f32 0.0, %v3155
      %v3157 = vpop.f32.mrf.mxu0
      %v3158 = vadd.f32 0.0, %v3157
      %3159 = vmatprep.mubr.bf16.mxu0 0
      %3160 = vmatmul.mubr.bf16.gmra.mxu0 %v3102
      %v3161 = vpop.f32.mrf.mxu0
      %v3162 = vadd.f32 0.0, %v3161
      %v3163 = vpop.f32.mrf.mxu0
      %v3164 = vadd.f32 0.0, %v3163
      %v3165 = vpop.f32.mrf.mxu0
      %v3166 = vadd.f32 0.0, %v3165
      %v3167 = vpop.f32.mrf.mxu0
      %v3168 = vadd.f32 0.0, %v3167
      %3169 = vmatprep.mubr.bf16.mxu0 0
      %3170 = vmatmul.mubr.bf16.gmra.mxu0 %v3105
      %v3171 = vpop.f32.mrf.mxu0
      %v3172 = vadd.f32 0.0, %v3171
      %v3173 = vpop.f32.mrf.mxu0
      %v3174 = vadd.f32 0.0, %v3173
      %v3175 = vpop.f32.mrf.mxu0
      %v3176 = vadd.f32 0.0, %v3175
      %v3177 = vpop.f32.mrf.mxu0
      %v3178 = vadd.f32 0.0, %v3177
      %3179 = vdwg.mxu0
      %v3180 = vadd.f32 %v2998, %v3142
      %v3181 = vadd.f32 %v2999, %v3144
      %v3182 = vadd.f32 %v3000, %v3146
      %v3183 = vadd.f32 %v3001, %v3148
      %v3184 = vadd.f32 %v3002, %v3152
      %v3185 = vadd.f32 %v3003, %v3154
      %v3186 = vadd.f32 %v3004, %v3156
      %v3187 = vadd.f32 %v3005, %v3158
      %v3188 = vadd.f32 %v3006, %v3162
      %v3189 = vadd.f32 %v3007, %v3164
      %v3190 = vadd.f32 %v3008, %v3166
      %v3191 = vadd.f32 %v3009, %v3168
      %v3192 = vadd.f32 %v3010, %v3172
      %v3193 = vadd.f32 %v3011, %v3174
      %v3194 = vadd.f32 %v3012, %v3176
      %v3195 = vadd.f32 %v3013, %v3178
      %s3196 = sadd.s32 %s3015, 54
      %s3197 = smul.addr %s3196, 4
      %s3198 = scalar_lea.vmem %s212, %s3197
      %v3199 = vld [vmem:[%s3198] sm:$0xf]
      %v3200 = vld [vmem:[%s3198 + $0x4] sm:$0xf]
      %v3201 = vld [vmem:[%s3198 + $0x8] sm:$0xf]
      %v3202 = vld [vmem:[%s3198 + $0xc] sm:$0xf]
      %v3203 = vld [vmem:[%s3198 + $0x10] sm:$0xf]
      %v3204 = vld [vmem:[%s3198 + $0x14] sm:$0xf]
      %v3205 = vld [vmem:[%s3198 + $0x18] sm:$0xf]
      %v3206 = vld [vmem:[%s3198 + $0x1c] sm:$0xf]
      %v3207 = vld [vmem:[%s1479] sm:$0xff]
      %v3208 = vld [vmem:[%s1479 + $0x8] sm:$0xff]
      %v3209 = vld [vmem:[%s1479 + $0x10] sm:$0xff]
      %v3210 = vld [vmem:[%s1479 + $0x18] sm:$0xff]
      %v3211 = vld [vmem:[%s1479 + $0x20] sm:$0xff]
      %v3212 = vld [vmem:[%s1479 + $0x28] sm:$0xff]
      %v3213 = vld [vmem:[%s1479 + $0x30] sm:$0xff]
      %v3214 = vld [vmem:[%s1479 + $0x38] sm:$0xff]
      %v3223 = vunpack.c.l.b16 %v3199
      %v3224 = vunpack.c.l.b16 %v3200
      %v3225 = vunpack.c.l.b16 %v3201
      %v3226 = vunpack.c.l.b16 %v3202
      %v3227 = vunpack.c.l.b16 %v3203
      %v3228 = vunpack.c.l.b16 %v3204
      %v3229 = vunpack.c.l.b16 %v3205
      %v3230 = vunpack.c.l.b16 %v3206
      %v3231 = vpack.c.b16 %v3224, %v3223
      %v3232 = vpack.c.b16 %v3226, %v3225
      %v3233 = vpack.c.b16 %v3228, %v3227
      %v3234 = vpack.c.b16 %v3230, %v3229
      %v3243 = vunpack.c.l.b16 %v3207
      %v3244 = vunpack.c.h.b16 %v3207
      %v3245 = vunpack.c.l.b16 %v3208
      %v3246 = vunpack.c.h.b16 %v3208
      %v3247 = vunpack.c.l.b16 %v3209
      %v3248 = vunpack.c.h.b16 %v3209
      %v3249 = vunpack.c.l.b16 %v3210
      %v3250 = vunpack.c.h.b16 %v3210
      %v3251 = vunpack.c.l.b16 %v3211
      %v3252 = vunpack.c.h.b16 %v3211
      %v3253 = vunpack.c.l.b16 %v3212
      %v3254 = vunpack.c.h.b16 %v3212
      %v3255 = vunpack.c.l.b16 %v3213
      %v3256 = vunpack.c.h.b16 %v3213
      %v3257 = vunpack.c.l.b16 %v3214
      %v3258 = vunpack.c.h.b16 %v3214
      %v3259 = vpack.c.b16 %v3245, %v3243
      %v3260 = vpack.c.b16 %v3246, %v3244
      %v3261 = vpack.c.b16 %v3249, %v3247
      %v3262 = vpack.c.b16 %v3250, %v3248
      %v3263 = vpack.c.b16 %v3253, %v3251
      %v3264 = vpack.c.b16 %v3254, %v3252
      %v3265 = vpack.c.b16 %v3257, %v3255
      %v3266 = vpack.c.b16 %v3258, %v3256
      %v3276 = vsel %vm328, %v3231, 0
      %v3279 = vsel %vm328, %v3232, 0
      %v3282 = vsel %vm328, %v3233, 0
      %v3285 = vsel %vm328, %v3234, 0
      %3287 = vmatprep.subr.bf16.mxu0 0
      %3288 = vmatpush1.bf16.msra.mxu0 0
      %3289 = vmatprep.subr.bf16.mxu0 0
      %3290 = vmatpush1.bf16.msra.mxu0 0
      %3291 = vmatprep.subr.bf16.mxu0 0
      %3292 = vmatpush1.bf16.msra.mxu0 0
      %3293 = vmatprep.subr.bf16.mxu0 0
      %3294 = vmatpush1.bf16.msra.mxu0 0
      %3295 = vmatprep.subr.bf16.mxu0 %v3266
      %3296 = vmatpush1.bf16.msra.mxu0 %v3265
      %3297 = vmatprep.subr.bf16.mxu0 %v3264
      %3298 = vmatpush1.bf16.msra.mxu0 %v3263
      %3299 = vmatprep.subr.bf16.mxu0 %v3262
      %3300 = vmatpush1.bf16.msra.mxu0 %v3261
      %3301 = vmatprep.subr.bf16.mxu0 %v3260
      %3302 = vmatpush1.bf16.msra.mxu0 %v3259
      %3303 = vmatprep.subr.bf16.mxu0 0
      %3304 = vmatpush2.bf16.msra.mxu0 0
      %3305 = vmatprep.subr.bf16.mxu0 0
      %3306 = vmatpush2.bf16.msra.mxu0 0
      %3307 = vmatprep.subr.bf16.mxu0 0
      %3308 = vmatpush2.bf16.msra.mxu0 0
      %3309 = vmatprep.subr.bf16.mxu0 0
      %3310 = vmatpush2.bf16.msra.mxu0 0
      %3311 = vmatprep.subr.bf16.mxu0 0
      %3312 = vmatpush2.bf16.msra.mxu0 0
      %3313 = vmatprep.subr.bf16.mxu0 0
      %3314 = vmatpush2.bf16.msra.mxu0 0
      %3315 = vmatprep.subr.bf16.mxu0 0
      %3316 = vmatpush2.bf16.msra.mxu0 0
      %3317 = vmatprep.subr.bf16.mxu0 0
      %3318 = vmatpush2.bf16.msra.mxu0 0
      %3319 = vmatprep.mubr.bf16.mxu0 0
      %3320 = vmatmul.mubr.bf16.gmra.mxu0 %v3276
      %v3321 = vpop.f32.mrf.mxu0
      %v3322 = vadd.f32 0.0, %v3321
      %v3323 = vpop.f32.mrf.mxu0
      %v3324 = vadd.f32 0.0, %v3323
      %v3325 = vpop.f32.mrf.mxu0
      %v3326 = vadd.f32 0.0, %v3325
      %v3327 = vpop.f32.mrf.mxu0
      %v3328 = vadd.f32 0.0, %v3327
      %3329 = vmatprep.mubr.bf16.mxu0 0
      %3330 = vmatmul.mubr.bf16.gmra.mxu0 %v3279
      %v3331 = vpop.f32.mrf.mxu0
      %v3332 = vadd.f32 0.0, %v3331
      %v3333 = vpop.f32.mrf.mxu0
      %v3334 = vadd.f32 0.0, %v3333
      %v3335 = vpop.f32.mrf.mxu0
      %v3336 = vadd.f32 0.0, %v3335
      %v3337 = vpop.f32.mrf.mxu0
      %v3338 = vadd.f32 0.0, %v3337
      %3339 = vmatprep.mubr.bf16.mxu0 0
      %3340 = vmatmul.mubr.bf16.gmra.mxu0 %v3282
      %v3341 = vpop.f32.mrf.mxu0
      %v3342 = vadd.f32 0.0, %v3341
      %v3343 = vpop.f32.mrf.mxu0
      %v3344 = vadd.f32 0.0, %v3343
      %v3345 = vpop.f32.mrf.mxu0
      %v3346 = vadd.f32 0.0, %v3345
      %v3347 = vpop.f32.mrf.mxu0
      %v3348 = vadd.f32 0.0, %v3347
      %3349 = vmatprep.mubr.bf16.mxu0 0
      %3350 = vmatmul.mubr.bf16.gmra.mxu0 %v3285
      %v3351 = vpop.f32.mrf.mxu0
      %v3352 = vadd.f32 0.0, %v3351
      %v3353 = vpop.f32.mrf.mxu0
      %v3354 = vadd.f32 0.0, %v3353
      %v3355 = vpop.f32.mrf.mxu0
      %v3356 = vadd.f32 0.0, %v3355
      %v3357 = vpop.f32.mrf.mxu0
      %v3358 = vadd.f32 0.0, %v3357
      %3359 = vdwg.mxu0
      %v3360 = vadd.f32 %v3180, %v3322
      %v3361 = vadd.f32 %v3181, %v3324
      %v3362 = vadd.f32 %v3182, %v3326
      %v3363 = vadd.f32 %v3183, %v3328
      %v3364 = vadd.f32 %v3184, %v3332
      %v3365 = vadd.f32 %v3185, %v3334
      %v3366 = vadd.f32 %v3186, %v3336
      %v3367 = vadd.f32 %v3187, %v3338
      %v3368 = vadd.f32 %v3188, %v3342
      %v3369 = vadd.f32 %v3189, %v3344
      %v3370 = vadd.f32 %v3190, %v3346
      %v3371 = vadd.f32 %v3191, %v3348
      %v3372 = vadd.f32 %v3192, %v3352
      %v3373 = vadd.f32 %v3193, %v3354
      %v3374 = vadd.f32 %v3194, %v3356
      %v3375 = vadd.f32 %v3195, %v3358
      %s3376 = sadd.s32 %s3015, 108
      %s3377 = smul.addr %s3376, 4
      %s3378 = scalar_lea.vmem %s212, %s3377
      %v3379 = vld [vmem:[%s3378] sm:$0xf]
      %v3380 = vld [vmem:[%s3378 + $0x4] sm:$0xf]
      %v3381 = vld [vmem:[%s3378 + $0x8] sm:$0xf]
      %v3382 = vld [vmem:[%s3378 + $0xc] sm:$0xf]
      %v3383 = vld [vmem:[%s3378 + $0x10] sm:$0xf]
      %v3384 = vld [vmem:[%s3378 + $0x14] sm:$0xf]
      %v3385 = vld [vmem:[%s3378 + $0x18] sm:$0xf]
      %v3386 = vld [vmem:[%s3378 + $0x1c] sm:$0xf]
      %v3387 = vld [vmem:[%s1660] sm:$0xff]
      %v3388 = vld [vmem:[%s1660 + $0x8] sm:$0xff]
      %v3389 = vld [vmem:[%s1660 + $0x10] sm:$0xff]
      %v3390 = vld [vmem:[%s1660 + $0x18] sm:$0xff]
      %v3391 = vld [vmem:[%s1660 + $0x20] sm:$0xff]
      %v3392 = vld [vmem:[%s1660 + $0x28] sm:$0xff]
      %v3393 = vld [vmem:[%s1660 + $0x30] sm:$0xff]
      %v3394 = vld [vmem:[%s1660 + $0x38] sm:$0xff]
      %v3403 = vunpack.c.l.b16 %v3379
      %v3404 = vunpack.c.l.b16 %v3380
      %v3405 = vunpack.c.l.b16 %v3381
      %v3406 = vunpack.c.l.b16 %v3382
      %v3407 = vunpack.c.l.b16 %v3383
      %v3408 = vunpack.c.l.b16 %v3384
      %v3409 = vunpack.c.l.b16 %v3385
      %v3410 = vunpack.c.l.b16 %v3386
      %v3411 = vpack.c.b16 %v3404, %v3403
      %v3412 = vpack.c.b16 %v3406, %v3405
      %v3413 = vpack.c.b16 %v3408, %v3407
      %v3414 = vpack.c.b16 %v3410, %v3409
      %v3423 = vunpack.c.l.b16 %v3387
      %v3424 = vunpack.c.h.b16 %v3387
      %v3425 = vunpack.c.l.b16 %v3388
      %v3426 = vunpack.c.h.b16 %v3388
      %v3427 = vunpack.c.l.b16 %v3389
      %v3428 = vunpack.c.h.b16 %v3389
      %v3429 = vunpack.c.l.b16 %v3390
      %v3430 = vunpack.c.h.b16 %v3390
      %v3431 = vunpack.c.l.b16 %v3391
      %v3432 = vunpack.c.h.b16 %v3391
      %v3433 = vunpack.c.l.b16 %v3392
      %v3434 = vunpack.c.h.b16 %v3392
      %v3435 = vunpack.c.l.b16 %v3393
      %v3436 = vunpack.c.h.b16 %v3393
      %v3437 = vunpack.c.l.b16 %v3394
      %v3438 = vunpack.c.h.b16 %v3394
      %v3439 = vpack.c.b16 %v3425, %v3423
      %v3440 = vpack.c.b16 %v3426, %v3424
      %v3441 = vpack.c.b16 %v3429, %v3427
      %v3442 = vpack.c.b16 %v3430, %v3428
      %v3443 = vpack.c.b16 %v3433, %v3431
      %v3444 = vpack.c.b16 %v3434, %v3432
      %v3445 = vpack.c.b16 %v3437, %v3435
      %v3446 = vpack.c.b16 %v3438, %v3436
      %v3456 = vsel %vm328, %v3411, 0
      %v3459 = vsel %vm328, %v3412, 0
      %v3462 = vsel %vm328, %v3413, 0
      %v3465 = vsel %vm328, %v3414, 0
      %3467 = vmatprep.subr.bf16.mxu0 0
      %3468 = vmatpush1.bf16.msra.mxu0 0
      %3469 = vmatprep.subr.bf16.mxu0 0
      %3470 = vmatpush1.bf16.msra.mxu0 0
      %3471 = vmatprep.subr.bf16.mxu0 0
      %3472 = vmatpush1.bf16.msra.mxu0 0
      %3473 = vmatprep.subr.bf16.mxu0 0
      %3474 = vmatpush1.bf16.msra.mxu0 0
      %3475 = vmatprep.subr.bf16.mxu0 %v3446
      %3476 = vmatpush1.bf16.msra.mxu0 %v3445
      %3477 = vmatprep.subr.bf16.mxu0 %v3444
      %3478 = vmatpush1.bf16.msra.mxu0 %v3443
      %3479 = vmatprep.subr.bf16.mxu0 %v3442
      %3480 = vmatpush1.bf16.msra.mxu0 %v3441
      %3481 = vmatprep.subr.bf16.mxu0 %v3440
      %3482 = vmatpush1.bf16.msra.mxu0 %v3439
      %3483 = vmatprep.subr.bf16.mxu0 0
      %3484 = vmatpush2.bf16.msra.mxu0 0
      %3485 = vmatprep.subr.bf16.mxu0 0
      %3486 = vmatpush2.bf16.msra.mxu0 0
      %3487 = vmatprep.subr.bf16.mxu0 0
      %3488 = vmatpush2.bf16.msra.mxu0 0
      %3489 = vmatprep.subr.bf16.mxu0 0
      %3490 = vmatpush2.bf16.msra.mxu0 0
      %3491 = vmatprep.subr.bf16.mxu0 0
      %3492 = vmatpush2.bf16.msra.mxu0 0
      %3493 = vmatprep.subr.bf16.mxu0 0
      %3494 = vmatpush2.bf16.msra.mxu0 0
      %3495 = vmatprep.subr.bf16.mxu0 0
      %3496 = vmatpush2.bf16.msra.mxu0 0
      %3497 = vmatprep.subr.bf16.mxu0 0
      %3498 = vmatpush2.bf16.msra.mxu0 0
      %3499 = vmatprep.mubr.bf16.mxu0 0
      %3500 = vmatmul.mubr.bf16.gmra.mxu0 %v3456
      %v3501 = vpop.f32.mrf.mxu0
      %v3502 = vadd.f32 0.0, %v3501
      %v3503 = vpop.f32.mrf.mxu0
      %v3504 = vadd.f32 0.0, %v3503
      %v3505 = vpop.f32.mrf.mxu0
      %v3506 = vadd.f32 0.0, %v3505
      %v3507 = vpop.f32.mrf.mxu0
      %v3508 = vadd.f32 0.0, %v3507
      %3509 = vmatprep.mubr.bf16.mxu0 0
      %3510 = vmatmul.mubr.bf16.gmra.mxu0 %v3459
      %v3511 = vpop.f32.mrf.mxu0
      %v3512 = vadd.f32 0.0, %v3511
      %v3513 = vpop.f32.mrf.mxu0
      %v3514 = vadd.f32 0.0, %v3513
      %v3515 = vpop.f32.mrf.mxu0
      %v3516 = vadd.f32 0.0, %v3515
      %v3517 = vpop.f32.mrf.mxu0
      %v3518 = vadd.f32 0.0, %v3517
      %3519 = vmatprep.mubr.bf16.mxu0 0
      %3520 = vmatmul.mubr.bf16.gmra.mxu0 %v3462
      %v3521 = vpop.f32.mrf.mxu0
      %v3522 = vadd.f32 0.0, %v3521
      %v3523 = vpop.f32.mrf.mxu0
      %v3524 = vadd.f32 0.0, %v3523
      %v3525 = vpop.f32.mrf.mxu0
      %v3526 = vadd.f32 0.0, %v3525
      %v3527 = vpop.f32.mrf.mxu0
      %v3528 = vadd.f32 0.0, %v3527
      %3529 = vmatprep.mubr.bf16.mxu0 0
      %3530 = vmatmul.mubr.bf16.gmra.mxu0 %v3465
      %v3531 = vpop.f32.mrf.mxu0
      %v3532 = vadd.f32 0.0, %v3531
      %v3533 = vpop.f32.mrf.mxu0
      %v3534 = vadd.f32 0.0, %v3533
      %v3535 = vpop.f32.mrf.mxu0
      %v3536 = vadd.f32 0.0, %v3535
      %v3537 = vpop.f32.mrf.mxu0
      %v3538 = vadd.f32 0.0, %v3537
      %3539 = vdwg.mxu0
      %v3540 = vadd.f32 %v3360, %v3502
      %v3541 = vadd.f32 %v3361, %v3504
      %v3542 = vadd.f32 %v3362, %v3506
      %v3543 = vadd.f32 %v3363, %v3508
      %v3544 = vadd.f32 %v3364, %v3512
      %v3545 = vadd.f32 %v3365, %v3514
      %v3546 = vadd.f32 %v3366, %v3516
      %v3547 = vadd.f32 %v3367, %v3518
      %v3548 = vadd.f32 %v3368, %v3522
      %v3549 = vadd.f32 %v3369, %v3524
      %v3550 = vadd.f32 %v3370, %v3526
      %v3551 = vadd.f32 %v3371, %v3528
      %v3552 = vadd.f32 %v3372, %v3532
      %v3553 = vadd.f32 %v3373, %v3534
      %v3554 = vadd.f32 %v3374, %v3536
      %v3555 = vadd.f32 %v3375, %v3538
      %v3556 = vadd.f32 %v3540, %v1834
      %v3557 = vadd.f32 %v3541, %v1838
      %v3558 = vadd.f32 %v3542, %v1834
      %v3559 = vadd.f32 %v3543, %v1838
      %v3560 = vadd.f32 %v3544, %v1834
      %v3561 = vadd.f32 %v3545, %v1838
      %v3562 = vadd.f32 %v3546, %v1834
      %v3563 = vadd.f32 %v3547, %v1838
      %v3564 = vadd.f32 %v3548, %v1834
      %v3565 = vadd.f32 %v3549, %v1838
      %v3566 = vadd.f32 %v3550, %v1834
      %v3567 = vadd.f32 %v3551, %v1838
      %v3568 = vadd.f32 %v3552, %v1834
      %v3569 = vadd.f32 %v3553, %v1838
      %v3570 = vadd.f32 %v3554, %v1834
      %v3571 = vadd.f32 %v3555, %v1838
      %vm3572 = vcmp.gt.f32.partialorder %v3556, 0.0
      %vm3573 = vcmp.gt.f32.partialorder %v3557, 0.0
      %vm3574 = vcmp.gt.f32.partialorder %v3558, 0.0
      %vm3575 = vcmp.gt.f32.partialorder %v3559, 0.0
      %vm3576 = vcmp.gt.f32.partialorder %v3560, 0.0
      %vm3577 = vcmp.gt.f32.partialorder %v3561, 0.0
      %vm3578 = vcmp.gt.f32.partialorder %v3562, 0.0
      %vm3579 = vcmp.gt.f32.partialorder %v3563, 0.0
      %vm3580 = vcmp.gt.f32.partialorder %v3564, 0.0
      %vm3581 = vcmp.gt.f32.partialorder %v3565, 0.0
      %vm3582 = vcmp.gt.f32.partialorder %v3566, 0.0
      %vm3583 = vcmp.gt.f32.partialorder %v3567, 0.0
      %vm3584 = vcmp.gt.f32.partialorder %v3568, 0.0
      %vm3585 = vcmp.gt.f32.partialorder %v3569, 0.0
      %vm3586 = vcmp.gt.f32.partialorder %v3570, 0.0
      %vm3587 = vcmp.gt.f32.partialorder %v3571, 0.0
      %v3588 = vmul.f32 %v1873, %v3556
      %v3589 = vmul.f32 %v1873, %v3557
      %v3590 = vmul.f32 %v1873, %v3558
      %v3591 = vmul.f32 %v1873, %v3559
      %v3592 = vmul.f32 %v1873, %v3560
      %v3593 = vmul.f32 %v1873, %v3561
      %v3594 = vmul.f32 %v1873, %v3562
      %v3595 = vmul.f32 %v1873, %v3563
      %v3596 = vmul.f32 %v1873, %v3564
      %v3597 = vmul.f32 %v1873, %v3565
      %v3598 = vmul.f32 %v1873, %v3566
      %v3599 = vmul.f32 %v1873, %v3567
      %v3600 = vmul.f32 %v1873, %v3568
      %v3601 = vmul.f32 %v1873, %v3569
      %v3602 = vmul.f32 %v1873, %v3570
      %v3603 = vmul.f32 %v1873, %v3571
      %v3604 = vsel %vm3572, %v3556, %v3588
      %v3605 = vsel %vm3573, %v3557, %v3589
      %v3606 = vsel %vm3574, %v3558, %v3590
      %v3607 = vsel %vm3575, %v3559, %v3591
      %v3608 = vsel %vm3576, %v3560, %v3592
      %v3609 = vsel %vm3577, %v3561, %v3593
      %v3610 = vsel %vm3578, %v3562, %v3594
      %v3611 = vsel %vm3579, %v3563, %v3595
      %v3612 = vsel %vm3580, %v3564, %v3596
      %v3613 = vsel %vm3581, %v3565, %v3597
      %v3614 = vsel %vm3582, %v3566, %v3598
      %v3615 = vsel %vm3583, %v3567, %v3599
      %v3616 = vsel %vm3584, %v3568, %v3600
      %v3617 = vsel %vm3585, %v3569, %v3601
      %v3618 = vsel %vm3586, %v3570, %v3602
      %v3619 = vsel %vm3587, %v3571, %v3603
      %v3620 = vpack.c.bf16 %v3606, %v3604
      %v3621 = vpack.c.bf16 %v3607, %v3605
      %v3622 = vpack.c.bf16 %v3610, %v3608
      %v3623 = vpack.c.bf16 %v3611, %v3609
      %v3624 = vpack.c.bf16 %v3614, %v3612
      %v3625 = vpack.c.bf16 %v3615, %v3613
      %v3626 = vpack.c.bf16 %v3618, %v3616
      %v3627 = vpack.c.bf16 %v3619, %v3617
      %v3636 = vunpack.c.l.b16 %v3620
      %v3637 = vunpack.c.l.b16 %v3621
      %v3638 = vunpack.c.h.b16 %v3620
      %v3639 = vunpack.c.h.b16 %v3621
      %v3640 = vunpack.c.l.b16 %v3622
      %v3641 = vunpack.c.l.b16 %v3623
      %v3642 = vunpack.c.h.b16 %v3622
      %v3643 = vunpack.c.h.b16 %v3623
      %v3644 = vunpack.c.l.b16 %v3624
      %v3645 = vunpack.c.l.b16 %v3625
      %v3646 = vunpack.c.h.b16 %v3624
      %v3647 = vunpack.c.h.b16 %v3625
      %v3648 = vunpack.c.l.b16 %v3626
      %v3649 = vunpack.c.l.b16 %v3627
      %v3650 = vunpack.c.h.b16 %v3626
      %v3651 = vunpack.c.h.b16 %v3627
      %v3652 = vpack.c.b16 %v3637, %v3636
      %v3653 = vpack.c.b16 %v3639, %v3638
      %v3654 = vpack.c.b16 %v3641, %v3640
      %v3655 = vpack.c.b16 %v3643, %v3642
      %v3656 = vpack.c.b16 %v3645, %v3644
      %v3657 = vpack.c.b16 %v3647, %v3646
      %v3658 = vpack.c.b16 %v3649, %v3648
      %v3659 = vpack.c.b16 %v3651, %v3650
      %3668 = vst [vmem:[%s222 + $0x40] sm:$0xff] %v3652
      %3669 = vst [vmem:[%s222 + $0x48] sm:$0xff] %v3653
      %3670 = vst [vmem:[%s222 + $0x50] sm:$0xff] %v3654
      %3671 = vst [vmem:[%s222 + $0x58] sm:$0xff] %v3655
      %3672 = vst [vmem:[%s222 + $0x60] sm:$0xff] %v3656
      %3673 = vst [vmem:[%s222 + $0x68] sm:$0xff] %v3657
      %3674 = vst [vmem:[%s222 + $0x70] sm:$0xff] %v3658
      %3675 = vst [vmem:[%s222 + $0x78] sm:$0xff] %v3659
      %s3676 = sadd.s32 %s225, 128
      %s3677 = sshra.s32 %s3676, 3
      %s3678 = sand.u32 %s3676, 7
      %s3679 = smul.addr %s3677, 4
      %s3680 = scalar_lea.vmem %s212, %s3679
      %v3681 = vld [vmem:[%s3680] sm:$0xf]
      %v3682 = vld [vmem:[%s3680 + $0x4] sm:$0xf]
      %v3683 = vld [vmem:[%s3680 + $0x8] sm:$0xf]
      %v3684 = vld [vmem:[%s3680 + $0xc] sm:$0xf]
      %v3685 = vld [vmem:[%s3680 + $0x10] sm:$0xf]
      %v3686 = vld [vmem:[%s3680 + $0x14] sm:$0xf]
      %v3687 = vld [vmem:[%s3680 + $0x18] sm:$0xf]
      %v3688 = vld [vmem:[%s3680 + $0x1c] sm:$0xf]
      %v3689 = vld [vmem:[%s1] sm:$0xff]
      %v3690 = vld [vmem:[%s1 + $0x8] sm:$0xff]
      %v3691 = vld [vmem:[%s1 + $0x10] sm:$0xff]
      %v3692 = vld [vmem:[%s1 + $0x18] sm:$0xff]
      %v3693 = vld [vmem:[%s1 + $0x20] sm:$0xff]
      %v3694 = vld [vmem:[%s1 + $0x28] sm:$0xff]
      %v3695 = vld [vmem:[%s1 + $0x30] sm:$0xff]
      %v3696 = vld [vmem:[%s1 + $0x38] sm:$0xff]
      %s3697 = sadd.s32 %s3677, 54
      %s3698 = smul.addr %s3697, 4
      %s3699 = scalar_lea.vmem %s212, %s3698
      %v3700 = vld [vmem:[%s3699] sm:$0xf]
      %v3701 = vld [vmem:[%s3699 + $0x4] sm:$0xf]
      %v3702 = vld [vmem:[%s3699 + $0x8] sm:$0xf]
      %v3703 = vld [vmem:[%s3699 + $0xc] sm:$0xf]
      %v3704 = vld [vmem:[%s3699 + $0x10] sm:$0xf]
      %v3705 = vld [vmem:[%s3699 + $0x14] sm:$0xf]
      %v3706 = vld [vmem:[%s3699 + $0x18] sm:$0xf]
      %v3707 = vld [vmem:[%s3699 + $0x1c] sm:$0xf]
      %v3708 = vld [vmem:[%s259] sm:$0xff]
      %v3709 = vld [vmem:[%s259 + $0x8] sm:$0xff]
      %v3710 = vld [vmem:[%s259 + $0x10] sm:$0xff]
      %v3711 = vld [vmem:[%s259 + $0x18] sm:$0xff]
      %v3712 = vld [vmem:[%s259 + $0x20] sm:$0xff]
      %v3713 = vld [vmem:[%s259 + $0x28] sm:$0xff]
      %v3714 = vld [vmem:[%s259 + $0x30] sm:$0xff]
      %v3715 = vld [vmem:[%s259 + $0x38] sm:$0xff]
      %v3724 = vunpack.c.l.b16 %v3700
      %v3725 = vunpack.c.l.b16 %v3701
      %v3726 = vunpack.c.l.b16 %v3702
      %v3727 = vunpack.c.l.b16 %v3703
      %v3728 = vunpack.c.l.b16 %v3704
      %v3729 = vunpack.c.l.b16 %v3705
      %v3730 = vunpack.c.l.b16 %v3706
      %v3731 = vunpack.c.l.b16 %v3707
      %v3732 = vpack.c.b16 %v3725, %v3724
      %v3733 = vpack.c.b16 %v3727, %v3726
      %v3734 = vpack.c.b16 %v3729, %v3728
      %v3735 = vpack.c.b16 %v3731, %v3730
      %v3744 = vunpack.c.l.b16 %v3708
      %v3745 = vunpack.c.h.b16 %v3708
      %v3746 = vunpack.c.l.b16 %v3709
      %v3747 = vunpack.c.h.b16 %v3709
      %v3748 = vunpack.c.l.b16 %v3710
      %v3749 = vunpack.c.h.b16 %v3710
      %v3750 = vunpack.c.l.b16 %v3711
      %v3751 = vunpack.c.h.b16 %v3711
      %v3752 = vunpack.c.l.b16 %v3712
      %v3753 = vunpack.c.h.b16 %v3712
      %v3754 = vunpack.c.l.b16 %v3713
      %v3755 = vunpack.c.h.b16 %v3713
      %v3756 = vunpack.c.l.b16 %v3714
      %v3757 = vunpack.c.h.b16 %v3714
      %v3758 = vunpack.c.l.b16 %v3715
      %v3759 = vunpack.c.h.b16 %v3715
      %v3760 = vpack.c.b16 %v3746, %v3744
      %v3761 = vpack.c.b16 %v3747, %v3745
      %v3762 = vpack.c.b16 %v3750, %v3748
      %v3763 = vpack.c.b16 %v3751, %v3749
      %v3764 = vpack.c.b16 %v3754, %v3752
      %v3765 = vpack.c.b16 %v3755, %v3753
      %v3766 = vpack.c.b16 %v3758, %v3756
      %v3767 = vpack.c.b16 %v3759, %v3757
      %v3777 = vsel %vm328, %v3732, 0
      %v3780 = vsel %vm328, %v3733, 0
      %v3783 = vsel %vm328, %v3734, 0
      %v3786 = vsel %vm328, %v3735, 0
      %3788 = vmatprep.subr.bf16.mxu0 0
      %3789 = vmatpush1.bf16.msra.mxu0 0
      %3790 = vmatprep.subr.bf16.mxu0 0
      %3791 = vmatpush1.bf16.msra.mxu0 0
      %3792 = vmatprep.subr.bf16.mxu0 0
      %3793 = vmatpush1.bf16.msra.mxu0 0
      %3794 = vmatprep.subr.bf16.mxu0 0
      %3795 = vmatpush1.bf16.msra.mxu0 0
      %3796 = vmatprep.subr.bf16.mxu0 %v3767
      %3797 = vmatpush1.bf16.msra.mxu0 %v3766
      %3798 = vmatprep.subr.bf16.mxu0 %v3765
      %3799 = vmatpush1.bf16.msra.mxu0 %v3764
      %3800 = vmatprep.subr.bf16.mxu0 %v3763
      %3801 = vmatpush1.bf16.msra.mxu0 %v3762
      %3802 = vmatprep.subr.bf16.mxu0 %v3761
      %3803 = vmatpush1.bf16.msra.mxu0 %v3760
      %3804 = vmatprep.subr.bf16.mxu0 0
      %3805 = vmatpush2.bf16.msra.mxu0 0
      %3806 = vmatprep.subr.bf16.mxu0 0
      %3807 = vmatpush2.bf16.msra.mxu0 0
      %3808 = vmatprep.subr.bf16.mxu0 0
      %3809 = vmatpush2.bf16.msra.mxu0 0
      %3810 = vmatprep.subr.bf16.mxu0 0
      %3811 = vmatpush2.bf16.msra.mxu0 0
      %3812 = vmatprep.subr.bf16.mxu0 0
      %3813 = vmatpush2.bf16.msra.mxu0 0
      %3814 = vmatprep.subr.bf16.mxu0 0
      %3815 = vmatpush2.bf16.msra.mxu0 0
      %3816 = vmatprep.subr.bf16.mxu0 0
      %3817 = vmatpush2.bf16.msra.mxu0 0
      %3818 = vmatprep.subr.bf16.mxu0 0
      %3819 = vmatpush2.bf16.msra.mxu0 0
      %3820 = vmatprep.mubr.bf16.mxu0 0
      %3821 = vmatmul.mubr.bf16.gmra.mxu0 %v3777
      %v3822 = vpop.f32.mrf.mxu0
      %v3823 = vadd.f32 0.0, %v3822
      %v3824 = vpop.f32.mrf.mxu0
      %v3825 = vadd.f32 0.0, %v3824
      %v3826 = vpop.f32.mrf.mxu0
      %v3827 = vadd.f32 0.0, %v3826
      %v3828 = vpop.f32.mrf.mxu0
      %v3829 = vadd.f32 0.0, %v3828
      %3830 = vmatprep.mubr.bf16.mxu0 0
      %3831 = vmatmul.mubr.bf16.gmra.mxu0 %v3780
      %v3832 = vpop.f32.mrf.mxu0
      %v3833 = vadd.f32 0.0, %v3832
      %v3834 = vpop.f32.mrf.mxu0
      %v3835 = vadd.f32 0.0, %v3834
      %v3836 = vpop.f32.mrf.mxu0
      %v3837 = vadd.f32 0.0, %v3836
      %v3838 = vpop.f32.mrf.mxu0
      %v3839 = vadd.f32 0.0, %v3838
      %3840 = vmatprep.mubr.bf16.mxu0 0
      %3841 = vmatmul.mubr.bf16.gmra.mxu0 %v3783
      %v3842 = vpop.f32.mrf.mxu0
      %v3843 = vadd.f32 0.0, %v3842
      %v3844 = vpop.f32.mrf.mxu0
      %v3845 = vadd.f32 0.0, %v3844
      %v3846 = vpop.f32.mrf.mxu0
      %v3847 = vadd.f32 0.0, %v3846
      %v3848 = vpop.f32.mrf.mxu0
      %v3849 = vadd.f32 0.0, %v3848
      %3850 = vmatprep.mubr.bf16.mxu0 0
      %3851 = vmatmul.mubr.bf16.gmra.mxu0 %v3786
      %v3852 = vpop.f32.mrf.mxu0
      %v3853 = vadd.f32 0.0, %v3852
      %v3854 = vpop.f32.mrf.mxu0
      %v3855 = vadd.f32 0.0, %v3854
      %v3856 = vpop.f32.mrf.mxu0
      %v3857 = vadd.f32 0.0, %v3856
      %v3858 = vpop.f32.mrf.mxu0
      %v3859 = vadd.f32 0.0, %v3858
      %3860 = vdwg.mxu0
      %v3869 = vunpack.c.l.b16 %v3681
      %v3870 = vunpack.c.l.b16 %v3682
      %v3871 = vunpack.c.l.b16 %v3683
      %v3872 = vunpack.c.l.b16 %v3684
      %v3873 = vunpack.c.l.b16 %v3685
      %v3874 = vunpack.c.l.b16 %v3686
      %v3875 = vunpack.c.l.b16 %v3687
      %v3876 = vunpack.c.l.b16 %v3688
      %v3877 = vpack.c.b16 %v3870, %v3869
      %v3878 = vpack.c.b16 %v3872, %v3871
      %v3879 = vpack.c.b16 %v3874, %v3873
      %v3880 = vpack.c.b16 %v3876, %v3875
      %v3889 = vunpack.c.l.b16 %v3689
      %v3890 = vunpack.c.h.b16 %v3689
      %v3891 = vunpack.c.l.b16 %v3690
      %v3892 = vunpack.c.h.b16 %v3690
      %v3893 = vunpack.c.l.b16 %v3691
      %v3894 = vunpack.c.h.b16 %v3691
      %v3895 = vunpack.c.l.b16 %v3692
      %v3896 = vunpack.c.h.b16 %v3692
      %v3897 = vunpack.c.l.b16 %v3693
      %v3898 = vunpack.c.h.b16 %v3693
      %v3899 = vunpack.c.l.b16 %v3694
      %v3900 = vunpack.c.h.b16 %v3694
      %v3901 = vunpack.c.l.b16 %v3695
      %v3902 = vunpack.c.h.b16 %v3695
      %v3903 = vunpack.c.l.b16 %v3696
      %v3904 = vunpack.c.h.b16 %v3696
      %v3905 = vpack.c.b16 %v3891, %v3889
      %v3906 = vpack.c.b16 %v3892, %v3890
      %v3907 = vpack.c.b16 %v3895, %v3893
      %v3908 = vpack.c.b16 %v3896, %v3894
      %v3909 = vpack.c.b16 %v3899, %v3897
      %v3910 = vpack.c.b16 %v3900, %v3898
      %v3911 = vpack.c.b16 %v3903, %v3901
      %v3912 = vpack.c.b16 %v3904, %v3902
      %v3922 = vsel %vm328, %v3877, 0
      %v3925 = vsel %vm328, %v3878, 0
      %v3928 = vsel %vm328, %v3879, 0
      %v3931 = vsel %vm328, %v3880, 0
      %3933 = vmatprep.subr.bf16.mxu0 0
      %3934 = vmatpush1.bf16.msra.mxu0 0
      %3935 = vmatprep.subr.bf16.mxu0 0
      %3936 = vmatpush1.bf16.msra.mxu0 0
      %3937 = vmatprep.subr.bf16.mxu0 0
      %3938 = vmatpush1.bf16.msra.mxu0 0
      %3939 = vmatprep.subr.bf16.mxu0 0
      %3940 = vmatpush1.bf16.msra.mxu0 0
      %3941 = vmatprep.subr.bf16.mxu0 %v3912
      %3942 = vmatpush1.bf16.msra.mxu0 %v3911
      %3943 = vmatprep.subr.bf16.mxu0 %v3910
      %3944 = vmatpush1.bf16.msra.mxu0 %v3909
      %3945 = vmatprep.subr.bf16.mxu0 %v3908
      %3946 = vmatpush1.bf16.msra.mxu0 %v3907
      %3947 = vmatprep.subr.bf16.mxu0 %v3906
      %3948 = vmatpush1.bf16.msra.mxu0 %v3905
      %3949 = vmatprep.subr.bf16.mxu0 0
      %3950 = vmatpush2.bf16.msra.mxu0 0
      %3951 = vmatprep.subr.bf16.mxu0 0
      %3952 = vmatpush2.bf16.msra.mxu0 0
      %3953 = vmatprep.subr.bf16.mxu0 0
      %3954 = vmatpush2.bf16.msra.mxu0 0
      %3955 = vmatprep.subr.bf16.mxu0 0
      %3956 = vmatpush2.bf16.msra.mxu0 0
      %3957 = vmatprep.subr.bf16.mxu0 0
      %3958 = vmatpush2.bf16.msra.mxu0 0
      %3959 = vmatprep.subr.bf16.mxu0 0
      %3960 = vmatpush2.bf16.msra.mxu0 0
      %3961 = vmatprep.subr.bf16.mxu0 0
      %3962 = vmatpush2.bf16.msra.mxu0 0
      %3963 = vmatprep.subr.bf16.mxu0 0
      %3964 = vmatpush2.bf16.msra.mxu0 0
      %3965 = vmatprep.mubr.bf16.mxu0 0
      %3966 = vmatmul.mubr.bf16.gmra.mxu0 %v3922
      %v3967 = vpop.f32.mrf.mxu0
      %v3968 = vadd.f32 %v3823, %v3967
      %v3969 = vpop.f32.mrf.mxu0
      %v3970 = vadd.f32 %v3825, %v3969
      %v3971 = vpop.f32.mrf.mxu0
      %v3972 = vadd.f32 %v3827, %v3971
      %v3973 = vpop.f32.mrf.mxu0
      %v3974 = vadd.f32 %v3829, %v3973
      %3975 = vmatprep.mubr.bf16.mxu0 0
      %3976 = vmatmul.mubr.bf16.gmra.mxu0 %v3925
      %v3977 = vpop.f32.mrf.mxu0
      %v3978 = vadd.f32 %v3833, %v3977
      %v3979 = vpop.f32.mrf.mxu0
      %v3980 = vadd.f32 %v3835, %v3979
      %v3981 = vpop.f32.mrf.mxu0
      %v3982 = vadd.f32 %v3837, %v3981
      %v3983 = vpop.f32.mrf.mxu0
      %v3984 = vadd.f32 %v3839, %v3983
      %3985 = vmatprep.mubr.bf16.mxu0 0
      %3986 = vmatmul.mubr.bf16.gmra.mxu0 %v3928
      %v3987 = vpop.f32.mrf.mxu0
      %v3988 = vadd.f32 %v3843, %v3987
      %v3989 = vpop.f32.mrf.mxu0
      %v3990 = vadd.f32 %v3845, %v3989
      %v3991 = vpop.f32.mrf.mxu0
      %v3992 = vadd.f32 %v3847, %v3991
      %v3993 = vpop.f32.mrf.mxu0
      %v3994 = vadd.f32 %v3849, %v3993
      %3995 = vmatprep.mubr.bf16.mxu0 0
      %3996 = vmatmul.mubr.bf16.gmra.mxu0 %v3931
      %v3997 = vpop.f32.mrf.mxu0
      %v3998 = vadd.f32 %v3853, %v3997
      %v3999 = vpop.f32.mrf.mxu0
      %v4000 = vadd.f32 %v3855, %v3999
      %v4001 = vpop.f32.mrf.mxu0
      %v4002 = vadd.f32 %v3857, %v4001
      %v4003 = vpop.f32.mrf.mxu0
      %v4004 = vadd.f32 %v3859, %v4003
      %4005 = vdwg.mxu0
      %s4006 = sadd.s32 %s3677, 108
      %s4007 = smul.addr %s4006, 4
      %s4008 = scalar_lea.vmem %s212, %s4007
      %v4009 = vld [vmem:[%s4008] sm:$0xf]
      %v4010 = vld [vmem:[%s4008 + $0x4] sm:$0xf]
      %v4011 = vld [vmem:[%s4008 + $0x8] sm:$0xf]
      %v4012 = vld [vmem:[%s4008 + $0xc] sm:$0xf]
      %v4013 = vld [vmem:[%s4008 + $0x10] sm:$0xf]
      %v4014 = vld [vmem:[%s4008 + $0x14] sm:$0xf]
      %v4015 = vld [vmem:[%s4008 + $0x18] sm:$0xf]
      %v4016 = vld [vmem:[%s4008 + $0x1c] sm:$0xf]
      %v4017 = vld [vmem:[%s570] sm:$0xff]
      %v4018 = vld [vmem:[%s570 + $0x8] sm:$0xff]
      %v4019 = vld [vmem:[%s570 + $0x10] sm:$0xff]
      %v4020 = vld [vmem:[%s570 + $0x18] sm:$0xff]
      %v4021 = vld [vmem:[%s570 + $0x20] sm:$0xff]
      %v4022 = vld [vmem:[%s570 + $0x28] sm:$0xff]
      %v4023 = vld [vmem:[%s570 + $0x30] sm:$0xff]
      %v4024 = vld [vmem:[%s570 + $0x38] sm:$0xff]
      %v4033 = vunpack.c.l.b16 %v4009
      %v4034 = vunpack.c.l.b16 %v4010
      %v4035 = vunpack.c.l.b16 %v4011
      %v4036 = vunpack.c.l.b16 %v4012
      %v4037 = vunpack.c.l.b16 %v4013
      %v4038 = vunpack.c.l.b16 %v4014
      %v4039 = vunpack.c.l.b16 %v4015
      %v4040 = vunpack.c.l.b16 %v4016
      %v4041 = vpack.c.b16 %v4034, %v4033
      %v4042 = vpack.c.b16 %v4036, %v4035
      %v4043 = vpack.c.b16 %v4038, %v4037
      %v4044 = vpack.c.b16 %v4040, %v4039
      %v4053 = vunpack.c.l.b16 %v4017
      %v4054 = vunpack.c.h.b16 %v4017
      %v4055 = vunpack.c.l.b16 %v4018
      %v4056 = vunpack.c.h.b16 %v4018
      %v4057 = vunpack.c.l.b16 %v4019
      %v4058 = vunpack.c.h.b16 %v4019
      %v4059 = vunpack.c.l.b16 %v4020
      %v4060 = vunpack.c.h.b16 %v4020
      %v4061 = vunpack.c.l.b16 %v4021
      %v4062 = vunpack.c.h.b16 %v4021
      %v4063 = vunpack.c.l.b16 %v4022
      %v4064 = vunpack.c.h.b16 %v4022
      %v4065 = vunpack.c.l.b16 %v4023
      %v4066 = vunpack.c.h.b16 %v4023
      %v4067 = vunpack.c.l.b16 %v4024
      %v4068 = vunpack.c.h.b16 %v4024
      %v4069 = vpack.c.b16 %v4055, %v4053
      %v4070 = vpack.c.b16 %v4056, %v4054
      %v4071 = vpack.c.b16 %v4059, %v4057
      %v4072 = vpack.c.b16 %v4060, %v4058
      %v4073 = vpack.c.b16 %v4063, %v4061
      %v4074 = vpack.c.b16 %v4064, %v4062
      %v4075 = vpack.c.b16 %v4067, %v4065
      %v4076 = vpack.c.b16 %v4068, %v4066
      %v4086 = vsel %vm328, %v4041, 0
      %v4089 = vsel %vm328, %v4042, 0
      %v4092 = vsel %vm328, %v4043, 0
      %v4095 = vsel %vm328, %v4044, 0
      %4097 = vmatprep.subr.bf16.mxu0 0
      %4098 = vmatpush1.bf16.msra.mxu0 0
      %4099 = vmatprep.subr.bf16.mxu0 0
      %4100 = vmatpush1.bf16.msra.mxu0 0
      %4101 = vmatprep.subr.bf16.mxu0 0
      %4102 = vmatpush1.bf16.msra.mxu0 0
      %4103 = vmatprep.subr.bf16.mxu0 0
      %4104 = vmatpush1.bf16.msra.mxu0 0
      %4105 = vmatprep.subr.bf16.mxu0 %v4076
      %4106 = vmatpush1.bf16.msra.mxu0 %v4075
      %4107 = vmatprep.subr.bf16.mxu0 %v4074
      %4108 = vmatpush1.bf16.msra.mxu0 %v4073
      %4109 = vmatprep.subr.bf16.mxu0 %v4072
      %4110 = vmatpush1.bf16.msra.mxu0 %v4071
      %4111 = vmatprep.subr.bf16.mxu0 %v4070
      %4112 = vmatpush1.bf16.msra.mxu0 %v4069
      %4113 = vmatprep.subr.bf16.mxu0 0
      %4114 = vmatpush2.bf16.msra.mxu0 0
      %4115 = vmatprep.subr.bf16.mxu0 0
      %4116 = vmatpush2.bf16.msra.mxu0 0
      %4117 = vmatprep.subr.bf16.mxu0 0
      %4118 = vmatpush2.bf16.msra.mxu0 0
      %4119 = vmatprep.subr.bf16.mxu0 0
      %4120 = vmatpush2.bf16.msra.mxu0 0
      %4121 = vmatprep.subr.bf16.mxu0 0
      %4122 = vmatpush2.bf16.msra.mxu0 0
      %4123 = vmatprep.subr.bf16.mxu0 0
      %4124 = vmatpush2.bf16.msra.mxu0 0
      %4125 = vmatprep.subr.bf16.mxu0 0
      %4126 = vmatpush2.bf16.msra.mxu0 0
      %4127 = vmatprep.subr.bf16.mxu0 0
      %4128 = vmatpush2.bf16.msra.mxu0 0
      %4129 = vmatprep.mubr.bf16.mxu0 0
      %4130 = vmatmul.mubr.bf16.gmra.mxu0 %v4086
      %v4131 = vpop.f32.mrf.mxu0
      %v4132 = vadd.f32 0.0, %v4131
      %v4133 = vpop.f32.mrf.mxu0
      %v4134 = vadd.f32 0.0, %v4133
      %v4135 = vpop.f32.mrf.mxu0
      %v4136 = vadd.f32 0.0, %v4135
      %v4137 = vpop.f32.mrf.mxu0
      %v4138 = vadd.f32 0.0, %v4137
      %4139 = vmatprep.mubr.bf16.mxu0 0
      %4140 = vmatmul.mubr.bf16.gmra.mxu0 %v4089
      %v4141 = vpop.f32.mrf.mxu0
      %v4142 = vadd.f32 0.0, %v4141
      %v4143 = vpop.f32.mrf.mxu0
      %v4144 = vadd.f32 0.0, %v4143
      %v4145 = vpop.f32.mrf.mxu0
      %v4146 = vadd.f32 0.0, %v4145
      %v4147 = vpop.f32.mrf.mxu0
      %v4148 = vadd.f32 0.0, %v4147
      %4149 = vmatprep.mubr.bf16.mxu0 0
      %4150 = vmatmul.mubr.bf16.gmra.mxu0 %v4092
      %v4151 = vpop.f32.mrf.mxu0
      %v4152 = vadd.f32 0.0, %v4151
      %v4153 = vpop.f32.mrf.mxu0
      %v4154 = vadd.f32 0.0, %v4153
      %v4155 = vpop.f32.mrf.mxu0
      %v4156 = vadd.f32 0.0, %v4155
      %v4157 = vpop.f32.mrf.mxu0
      %v4158 = vadd.f32 0.0, %v4157
      %4159 = vmatprep.mubr.bf16.mxu0 0
      %4160 = vmatmul.mubr.bf16.gmra.mxu0 %v4095
      %v4161 = vpop.f32.mrf.mxu0
      %v4162 = vadd.f32 0.0, %v4161
      %v4163 = vpop.f32.mrf.mxu0
      %v4164 = vadd.f32 0.0, %v4163
      %v4165 = vpop.f32.mrf.mxu0
      %v4166 = vadd.f32 0.0, %v4165
      %v4167 = vpop.f32.mrf.mxu0
      %v4168 = vadd.f32 0.0, %v4167
      %4169 = vdwg.mxu0
      %v4170 = vadd.f32 %v3968, %v4132
      %v4171 = vadd.f32 %v3970, %v4134
      %v4172 = vadd.f32 %v3972, %v4136
      %v4173 = vadd.f32 %v3974, %v4138
      %v4174 = vadd.f32 %v3978, %v4142
      %v4175 = vadd.f32 %v3980, %v4144
      %v4176 = vadd.f32 %v3982, %v4146
      %v4177 = vadd.f32 %v3984, %v4148
      %v4178 = vadd.f32 %v3988, %v4152
      %v4179 = vadd.f32 %v3990, %v4154
      %v4180 = vadd.f32 %v3992, %v4156
      %v4181 = vadd.f32 %v3994, %v4158
      %v4182 = vadd.f32 %v3998, %v4162
      %v4183 = vadd.f32 %v4000, %v4164
      %v4184 = vadd.f32 %v4002, %v4166
      %v4185 = vadd.f32 %v4004, %v4168
      %s4186 = sadd.s32 %s225, 152
      %s4187 = sshra.s32 %s4186, 3
      %s4188 = sand.u32 %s4186, 7
      %s4189 = smul.addr %s4187, 4
      %s4190 = scalar_lea.vmem %s212, %s4189
      %v4191 = vld [vmem:[%s4190] sm:$0xf]
      %v4192 = vld [vmem:[%s4190 + $0x4] sm:$0xf]
      %v4193 = vld [vmem:[%s4190 + $0x8] sm:$0xf]
      %v4194 = vld [vmem:[%s4190 + $0xc] sm:$0xf]
      %v4195 = vld [vmem:[%s4190 + $0x10] sm:$0xf]
      %v4196 = vld [vmem:[%s4190 + $0x14] sm:$0xf]
      %v4197 = vld [vmem:[%s4190 + $0x18] sm:$0xf]
      %v4198 = vld [vmem:[%s4190 + $0x1c] sm:$0xf]
      %v4199 = vld [vmem:[%s753] sm:$0xff]
      %v4200 = vld [vmem:[%s753 + $0x8] sm:$0xff]
      %v4201 = vld [vmem:[%s753 + $0x10] sm:$0xff]
      %v4202 = vld [vmem:[%s753 + $0x18] sm:$0xff]
      %v4203 = vld [vmem:[%s753 + $0x20] sm:$0xff]
      %v4204 = vld [vmem:[%s753 + $0x28] sm:$0xff]
      %v4205 = vld [vmem:[%s753 + $0x30] sm:$0xff]
      %v4206 = vld [vmem:[%s753 + $0x38] sm:$0xff]
      %v4215 = vunpack.c.l.b16 %v4191
      %v4216 = vunpack.c.l.b16 %v4192
      %v4217 = vunpack.c.l.b16 %v4193
      %v4218 = vunpack.c.l.b16 %v4194
      %v4219 = vunpack.c.l.b16 %v4195
      %v4220 = vunpack.c.l.b16 %v4196
      %v4221 = vunpack.c.l.b16 %v4197
      %v4222 = vunpack.c.l.b16 %v4198
      %v4223 = vpack.c.b16 %v4216, %v4215
      %v4224 = vpack.c.b16 %v4218, %v4217
      %v4225 = vpack.c.b16 %v4220, %v4219
      %v4226 = vpack.c.b16 %v4222, %v4221
      %v4235 = vunpack.c.l.b16 %v4199
      %v4236 = vunpack.c.h.b16 %v4199
      %v4237 = vunpack.c.l.b16 %v4200
      %v4238 = vunpack.c.h.b16 %v4200
      %v4239 = vunpack.c.l.b16 %v4201
      %v4240 = vunpack.c.h.b16 %v4201
      %v4241 = vunpack.c.l.b16 %v4202
      %v4242 = vunpack.c.h.b16 %v4202
      %v4243 = vunpack.c.l.b16 %v4203
      %v4244 = vunpack.c.h.b16 %v4203
      %v4245 = vunpack.c.l.b16 %v4204
      %v4246 = vunpack.c.h.b16 %v4204
      %v4247 = vunpack.c.l.b16 %v4205
      %v4248 = vunpack.c.h.b16 %v4205
      %v4249 = vunpack.c.l.b16 %v4206
      %v4250 = vunpack.c.h.b16 %v4206
      %v4251 = vpack.c.b16 %v4237, %v4235
      %v4252 = vpack.c.b16 %v4238, %v4236
      %v4253 = vpack.c.b16 %v4241, %v4239
      %v4254 = vpack.c.b16 %v4242, %v4240
      %v4255 = vpack.c.b16 %v4245, %v4243
      %v4256 = vpack.c.b16 %v4246, %v4244
      %v4257 = vpack.c.b16 %v4249, %v4247
      %v4258 = vpack.c.b16 %v4250, %v4248
      %v4268 = vsel %vm328, %v4223, 0
      %v4271 = vsel %vm328, %v4224, 0
      %v4274 = vsel %vm328, %v4225, 0
      %v4277 = vsel %vm328, %v4226, 0
      %4279 = vmatprep.subr.bf16.mxu0 0
      %4280 = vmatpush1.bf16.msra.mxu0 0
      %4281 = vmatprep.subr.bf16.mxu0 0
      %4282 = vmatpush1.bf16.msra.mxu0 0
      %4283 = vmatprep.subr.bf16.mxu0 0
      %4284 = vmatpush1.bf16.msra.mxu0 0
      %4285 = vmatprep.subr.bf16.mxu0 0
      %4286 = vmatpush1.bf16.msra.mxu0 0
      %4287 = vmatprep.subr.bf16.mxu0 %v4258
      %4288 = vmatpush1.bf16.msra.mxu0 %v4257
      %4289 = vmatprep.subr.bf16.mxu0 %v4256
      %4290 = vmatpush1.bf16.msra.mxu0 %v4255
      %4291 = vmatprep.subr.bf16.mxu0 %v4254
      %4292 = vmatpush1.bf16.msra.mxu0 %v4253
      %4293 = vmatprep.subr.bf16.mxu0 %v4252
      %4294 = vmatpush1.bf16.msra.mxu0 %v4251
      %4295 = vmatprep.subr.bf16.mxu0 0
      %4296 = vmatpush2.bf16.msra.mxu0 0
      %4297 = vmatprep.subr.bf16.mxu0 0
      %4298 = vmatpush2.bf16.msra.mxu0 0
      %4299 = vmatprep.subr.bf16.mxu0 0
      %4300 = vmatpush2.bf16.msra.mxu0 0
      %4301 = vmatprep.subr.bf16.mxu0 0
      %4302 = vmatpush2.bf16.msra.mxu0 0
      %4303 = vmatprep.subr.bf16.mxu0 0
      %4304 = vmatpush2.bf16.msra.mxu0 0
      %4305 = vmatprep.subr.bf16.mxu0 0
      %4306 = vmatpush2.bf16.msra.mxu0 0
      %4307 = vmatprep.subr.bf16.mxu0 0
      %4308 = vmatpush2.bf16.msra.mxu0 0
      %4309 = vmatprep.subr.bf16.mxu0 0
      %4310 = vmatpush2.bf16.msra.mxu0 0
      %4311 = vmatprep.mubr.bf16.mxu0 0
      %4312 = vmatmul.mubr.bf16.gmra.mxu0 %v4268
      %v4313 = vpop.f32.mrf.mxu0
      %v4314 = vadd.f32 0.0, %v4313
      %v4315 = vpop.f32.mrf.mxu0
      %v4316 = vadd.f32 0.0, %v4315
      %v4317 = vpop.f32.mrf.mxu0
      %v4318 = vadd.f32 0.0, %v4317
      %v4319 = vpop.f32.mrf.mxu0
      %v4320 = vadd.f32 0.0, %v4319
      %4321 = vmatprep.mubr.bf16.mxu0 0
      %4322 = vmatmul.mubr.bf16.gmra.mxu0 %v4271
      %v4323 = vpop.f32.mrf.mxu0
      %v4324 = vadd.f32 0.0, %v4323
      %v4325 = vpop.f32.mrf.mxu0
      %v4326 = vadd.f32 0.0, %v4325
      %v4327 = vpop.f32.mrf.mxu0
      %v4328 = vadd.f32 0.0, %v4327
      %v4329 = vpop.f32.mrf.mxu0
      %v4330 = vadd.f32 0.0, %v4329
      %4331 = vmatprep.mubr.bf16.mxu0 0
      %4332 = vmatmul.mubr.bf16.gmra.mxu0 %v4274
      %v4333 = vpop.f32.mrf.mxu0
      %v4334 = vadd.f32 0.0, %v4333
      %v4335 = vpop.f32.mrf.mxu0
      %v4336 = vadd.f32 0.0, %v4335
      %v4337 = vpop.f32.mrf.mxu0
      %v4338 = vadd.f32 0.0, %v4337
      %v4339 = vpop.f32.mrf.mxu0
      %v4340 = vadd.f32 0.0, %v4339
      %4341 = vmatprep.mubr.bf16.mxu0 0
      %4342 = vmatmul.mubr.bf16.gmra.mxu0 %v4277
      %v4343 = vpop.f32.mrf.mxu0
      %v4344 = vadd.f32 0.0, %v4343
      %v4345 = vpop.f32.mrf.mxu0
      %v4346 = vadd.f32 0.0, %v4345
      %v4347 = vpop.f32.mrf.mxu0
      %v4348 = vadd.f32 0.0, %v4347
      %v4349 = vpop.f32.mrf.mxu0
      %v4350 = vadd.f32 0.0, %v4349
      %4351 = vdwg.mxu0
      %v4352 = vadd.f32 %v4170, %v4314
      %v4353 = vadd.f32 %v4171, %v4316
      %v4354 = vadd.f32 %v4172, %v4318
      %v4355 = vadd.f32 %v4173, %v4320
      %v4356 = vadd.f32 %v4174, %v4324
      %v4357 = vadd.f32 %v4175, %v4326
      %v4358 = vadd.f32 %v4176, %v4328
      %v4359 = vadd.f32 %v4177, %v4330
      %v4360 = vadd.f32 %v4178, %v4334
      %v4361 = vadd.f32 %v4179, %v4336
      %v4362 = vadd.f32 %v4180, %v4338
      %v4363 = vadd.f32 %v4181, %v4340
      %v4364 = vadd.f32 %v4182, %v4344
      %v4365 = vadd.f32 %v4183, %v4346
      %v4366 = vadd.f32 %v4184, %v4348
      %v4367 = vadd.f32 %v4185, %v4350
      %s4368 = sadd.s32 %s4187, 54
      %s4369 = smul.addr %s4368, 4
      %s4370 = scalar_lea.vmem %s212, %s4369
      %v4371 = vld [vmem:[%s4370] sm:$0xf]
      %v4372 = vld [vmem:[%s4370 + $0x4] sm:$0xf]
      %v4373 = vld [vmem:[%s4370 + $0x8] sm:$0xf]
      %v4374 = vld [vmem:[%s4370 + $0xc] sm:$0xf]
      %v4375 = vld [vmem:[%s4370 + $0x10] sm:$0xf]
      %v4376 = vld [vmem:[%s4370 + $0x14] sm:$0xf]
      %v4377 = vld [vmem:[%s4370 + $0x18] sm:$0xf]
      %v4378 = vld [vmem:[%s4370 + $0x1c] sm:$0xf]
      %v4379 = vld [vmem:[%s934] sm:$0xff]
      %v4380 = vld [vmem:[%s934 + $0x8] sm:$0xff]
      %v4381 = vld [vmem:[%s934 + $0x10] sm:$0xff]
      %v4382 = vld [vmem:[%s934 + $0x18] sm:$0xff]
      %v4383 = vld [vmem:[%s934 + $0x20] sm:$0xff]
      %v4384 = vld [vmem:[%s934 + $0x28] sm:$0xff]
      %v4385 = vld [vmem:[%s934 + $0x30] sm:$0xff]
      %v4386 = vld [vmem:[%s934 + $0x38] sm:$0xff]
      %v4395 = vunpack.c.l.b16 %v4371
      %v4396 = vunpack.c.l.b16 %v4372
      %v4397 = vunpack.c.l.b16 %v4373
      %v4398 = vunpack.c.l.b16 %v4374
      %v4399 = vunpack.c.l.b16 %v4375
      %v4400 = vunpack.c.l.b16 %v4376
      %v4401 = vunpack.c.l.b16 %v4377
      %v4402 = vunpack.c.l.b16 %v4378
      %v4403 = vpack.c.b16 %v4396, %v4395
      %v4404 = vpack.c.b16 %v4398, %v4397
      %v4405 = vpack.c.b16 %v4400, %v4399
      %v4406 = vpack.c.b16 %v4402, %v4401
      %v4415 = vunpack.c.l.b16 %v4379
      %v4416 = vunpack.c.h.b16 %v4379
      %v4417 = vunpack.c.l.b16 %v4380
      %v4418 = vunpack.c.h.b16 %v4380
      %v4419 = vunpack.c.l.b16 %v4381
      %v4420 = vunpack.c.h.b16 %v4381
      %v4421 = vunpack.c.l.b16 %v4382
      %v4422 = vunpack.c.h.b16 %v4382
      %v4423 = vunpack.c.l.b16 %v4383
      %v4424 = vunpack.c.h.b16 %v4383
      %v4425 = vunpack.c.l.b16 %v4384
      %v4426 = vunpack.c.h.b16 %v4384
      %v4427 = vunpack.c.l.b16 %v4385
      %v4428 = vunpack.c.h.b16 %v4385
      %v4429 = vunpack.c.l.b16 %v4386
      %v4430 = vunpack.c.h.b16 %v4386
      %v4431 = vpack.c.b16 %v4417, %v4415
      %v4432 = vpack.c.b16 %v4418, %v4416
      %v4433 = vpack.c.b16 %v4421, %v4419
      %v4434 = vpack.c.b16 %v4422, %v4420
      %v4435 = vpack.c.b16 %v4425, %v4423
      %v4436 = vpack.c.b16 %v4426, %v4424
      %v4437 = vpack.c.b16 %v4429, %v4427
      %v4438 = vpack.c.b16 %v4430, %v4428
      %v4448 = vsel %vm328, %v4403, 0
      %v4451 = vsel %vm328, %v4404, 0
      %v4454 = vsel %vm328, %v4405, 0
      %v4457 = vsel %vm328, %v4406, 0
      %4459 = vmatprep.subr.bf16.mxu0 0
      %4460 = vmatpush1.bf16.msra.mxu0 0
      %4461 = vmatprep.subr.bf16.mxu0 0
      %4462 = vmatpush1.bf16.msra.mxu0 0
      %4463 = vmatprep.subr.bf16.mxu0 0
      %4464 = vmatpush1.bf16.msra.mxu0 0
      %4465 = vmatprep.subr.bf16.mxu0 0
      %4466 = vmatpush1.bf16.msra.mxu0 0
      %4467 = vmatprep.subr.bf16.mxu0 %v4438
      %4468 = vmatpush1.bf16.msra.mxu0 %v4437
      %4469 = vmatprep.subr.bf16.mxu0 %v4436
      %4470 = vmatpush1.bf16.msra.mxu0 %v4435
      %4471 = vmatprep.subr.bf16.mxu0 %v4434
      %4472 = vmatpush1.bf16.msra.mxu0 %v4433
      %4473 = vmatprep.subr.bf16.mxu0 %v4432
      %4474 = vmatpush1.bf16.msra.mxu0 %v4431
      %4475 = vmatprep.subr.bf16.mxu0 0
      %4476 = vmatpush2.bf16.msra.mxu0 0
      %4477 = vmatprep.subr.bf16.mxu0 0
      %4478 = vmatpush2.bf16.msra.mxu0 0
      %4479 = vmatprep.subr.bf16.mxu0 0
      %4480 = vmatpush2.bf16.msra.mxu0 0
      %4481 = vmatprep.subr.bf16.mxu0 0
      %4482 = vmatpush2.bf16.msra.mxu0 0
      %4483 = vmatprep.subr.bf16.mxu0 0
      %4484 = vmatpush2.bf16.msra.mxu0 0
      %4485 = vmatprep.subr.bf16.mxu0 0
      %4486 = vmatpush2.bf16.msra.mxu0 0
      %4487 = vmatprep.subr.bf16.mxu0 0
      %4488 = vmatpush2.bf16.msra.mxu0 0
      %4489 = vmatprep.subr.bf16.mxu0 0
      %4490 = vmatpush2.bf16.msra.mxu0 0
      %4491 = vmatprep.mubr.bf16.mxu0 0
      %4492 = vmatmul.mubr.bf16.gmra.mxu0 %v4448
      %v4493 = vpop.f32.mrf.mxu0
      %v4494 = vadd.f32 0.0, %v4493
      %v4495 = vpop.f32.mrf.mxu0
      %v4496 = vadd.f32 0.0, %v4495
      %v4497 = vpop.f32.mrf.mxu0
      %v4498 = vadd.f32 0.0, %v4497
      %v4499 = vpop.f32.mrf.mxu0
      %v4500 = vadd.f32 0.0, %v4499
      %4501 = vmatprep.mubr.bf16.mxu0 0
      %4502 = vmatmul.mubr.bf16.gmra.mxu0 %v4451
      %v4503 = vpop.f32.mrf.mxu0
      %v4504 = vadd.f32 0.0, %v4503
      %v4505 = vpop.f32.mrf.mxu0
      %v4506 = vadd.f32 0.0, %v4505
      %v4507 = vpop.f32.mrf.mxu0
      %v4508 = vadd.f32 0.0, %v4507
      %v4509 = vpop.f32.mrf.mxu0
      %v4510 = vadd.f32 0.0, %v4509
      %4511 = vmatprep.mubr.bf16.mxu0 0
      %4512 = vmatmul.mubr.bf16.gmra.mxu0 %v4454
      %v4513 = vpop.f32.mrf.mxu0
      %v4514 = vadd.f32 0.0, %v4513
      %v4515 = vpop.f32.mrf.mxu0
      %v4516 = vadd.f32 0.0, %v4515
      %v4517 = vpop.f32.mrf.mxu0
      %v4518 = vadd.f32 0.0, %v4517
      %v4519 = vpop.f32.mrf.mxu0
      %v4520 = vadd.f32 0.0, %v4519
      %4521 = vmatprep.mubr.bf16.mxu0 0
      %4522 = vmatmul.mubr.bf16.gmra.mxu0 %v4457
      %v4523 = vpop.f32.mrf.mxu0
      %v4524 = vadd.f32 0.0, %v4523
      %v4525 = vpop.f32.mrf.mxu0
      %v4526 = vadd.f32 0.0, %v4525
      %v4527 = vpop.f32.mrf.mxu0
      %v4528 = vadd.f32 0.0, %v4527
      %v4529 = vpop.f32.mrf.mxu0
      %v4530 = vadd.f32 0.0, %v4529
      %4531 = vdwg.mxu0
      %v4532 = vadd.f32 %v4352, %v4494
      %v4533 = vadd.f32 %v4353, %v4496
      %v4534 = vadd.f32 %v4354, %v4498
      %v4535 = vadd.f32 %v4355, %v4500
      %v4536 = vadd.f32 %v4356, %v4504
      %v4537 = vadd.f32 %v4357, %v4506
      %v4538 = vadd.f32 %v4358, %v4508
      %v4539 = vadd.f32 %v4359, %v4510
      %v4540 = vadd.f32 %v4360, %v4514
      %v4541 = vadd.f32 %v4361, %v4516
      %v4542 = vadd.f32 %v4362, %v4518
      %v4543 = vadd.f32 %v4363, %v4520
      %v4544 = vadd.f32 %v4364, %v4524
      %v4545 = vadd.f32 %v4365, %v4526
      %v4546 = vadd.f32 %v4366, %v4528
      %v4547 = vadd.f32 %v4367, %v4530
      %s4548 = sadd.s32 %s4187, 108
      %s4549 = smul.addr %s4548, 4
      %s4550 = scalar_lea.vmem %s212, %s4549
      %v4551 = vld [vmem:[%s4550] sm:$0xf]
      %v4552 = vld [vmem:[%s4550 + $0x4] sm:$0xf]
      %v4553 = vld [vmem:[%s4550 + $0x8] sm:$0xf]
      %v4554 = vld [vmem:[%s4550 + $0xc] sm:$0xf]
      %v4555 = vld [vmem:[%s4550 + $0x10] sm:$0xf]
      %v4556 = vld [vmem:[%s4550 + $0x14] sm:$0xf]
      %v4557 = vld [vmem:[%s4550 + $0x18] sm:$0xf]
      %v4558 = vld [vmem:[%s4550 + $0x1c] sm:$0xf]
      %v4559 = vld [vmem:[%s1115] sm:$0xff]
      %v4560 = vld [vmem:[%s1115 + $0x8] sm:$0xff]
      %v4561 = vld [vmem:[%s1115 + $0x10] sm:$0xff]
      %v4562 = vld [vmem:[%s1115 + $0x18] sm:$0xff]
      %v4563 = vld [vmem:[%s1115 + $0x20] sm:$0xff]
      %v4564 = vld [vmem:[%s1115 + $0x28] sm:$0xff]
      %v4565 = vld [vmem:[%s1115 + $0x30] sm:$0xff]
      %v4566 = vld [vmem:[%s1115 + $0x38] sm:$0xff]
      %v4575 = vunpack.c.l.b16 %v4551
      %v4576 = vunpack.c.l.b16 %v4552
      %v4577 = vunpack.c.l.b16 %v4553
      %v4578 = vunpack.c.l.b16 %v4554
      %v4579 = vunpack.c.l.b16 %v4555
      %v4580 = vunpack.c.l.b16 %v4556
      %v4581 = vunpack.c.l.b16 %v4557
      %v4582 = vunpack.c.l.b16 %v4558
      %v4583 = vpack.c.b16 %v4576, %v4575
      %v4584 = vpack.c.b16 %v4578, %v4577
      %v4585 = vpack.c.b16 %v4580, %v4579
      %v4586 = vpack.c.b16 %v4582, %v4581
      %v4595 = vunpack.c.l.b16 %v4559
      %v4596 = vunpack.c.h.b16 %v4559
      %v4597 = vunpack.c.l.b16 %v4560
      %v4598 = vunpack.c.h.b16 %v4560
      %v4599 = vunpack.c.l.b16 %v4561
      %v4600 = vunpack.c.h.b16 %v4561
      %v4601 = vunpack.c.l.b16 %v4562
      %v4602 = vunpack.c.h.b16 %v4562
      %v4603 = vunpack.c.l.b16 %v4563
      %v4604 = vunpack.c.h.b16 %v4563
      %v4605 = vunpack.c.l.b16 %v4564
      %v4606 = vunpack.c.h.b16 %v4564
      %v4607 = vunpack.c.l.b16 %v4565
      %v4608 = vunpack.c.h.b16 %v4565
      %v4609 = vunpack.c.l.b16 %v4566
      %v4610 = vunpack.c.h.b16 %v4566
      %v4611 = vpack.c.b16 %v4597, %v4595
      %v4612 = vpack.c.b16 %v4598, %v4596
      %v4613 = vpack.c.b16 %v4601, %v4599
      %v4614 = vpack.c.b16 %v4602, %v4600
      %v4615 = vpack.c.b16 %v4605, %v4603
      %v4616 = vpack.c.b16 %v4606, %v4604
      %v4617 = vpack.c.b16 %v4609, %v4607
      %v4618 = vpack.c.b16 %v4610, %v4608
      %v4628 = vsel %vm328, %v4583, 0
      %v4631 = vsel %vm328, %v4584, 0
      %v4634 = vsel %vm328, %v4585, 0
      %v4637 = vsel %vm328, %v4586, 0
      %4639 = vmatprep.subr.bf16.mxu0 0
      %4640 = vmatpush1.bf16.msra.mxu0 0
      %4641 = vmatprep.subr.bf16.mxu0 0
      %4642 = vmatpush1.bf16.msra.mxu0 0
      %4643 = vmatprep.subr.bf16.mxu0 0
      %4644 = vmatpush1.bf16.msra.mxu0 0
      %4645 = vmatprep.subr.bf16.mxu0 0
      %4646 = vmatpush1.bf16.msra.mxu0 0
      %4647 = vmatprep.subr.bf16.mxu0 %v4618
      %4648 = vmatpush1.bf16.msra.mxu0 %v4617
      %4649 = vmatprep.subr.bf16.mxu0 %v4616
      %4650 = vmatpush1.bf16.msra.mxu0 %v4615
      %4651 = vmatprep.subr.bf16.mxu0 %v4614
      %4652 = vmatpush1.bf16.msra.mxu0 %v4613
      %4653 = vmatprep.subr.bf16.mxu0 %v4612
      %4654 = vmatpush1.bf16.msra.mxu0 %v4611
      %4655 = vmatprep.subr.bf16.mxu0 0
      %4656 = vmatpush2.bf16.msra.mxu0 0
      %4657 = vmatprep.subr.bf16.mxu0 0
      %4658 = vmatpush2.bf16.msra.mxu0 0
      %4659 = vmatprep.subr.bf16.mxu0 0
      %4660 = vmatpush2.bf16.msra.mxu0 0
      %4661 = vmatprep.subr.bf16.mxu0 0
      %4662 = vmatpush2.bf16.msra.mxu0 0
      %4663 = vmatprep.subr.bf16.mxu0 0
      %4664 = vmatpush2.bf16.msra.mxu0 0
      %4665 = vmatprep.subr.bf16.mxu0 0
      %4666 = vmatpush2.bf16.msra.mxu0 0
      %4667 = vmatprep.subr.bf16.mxu0 0
      %4668 = vmatpush2.bf16.msra.mxu0 0
      %4669 = vmatprep.subr.bf16.mxu0 0
      %4670 = vmatpush2.bf16.msra.mxu0 0
      %4671 = vmatprep.mubr.bf16.mxu0 0
      %4672 = vmatmul.mubr.bf16.gmra.mxu0 %v4628
      %v4673 = vpop.f32.mrf.mxu0
      %v4674 = vadd.f32 0.0, %v4673
      %v4675 = vpop.f32.mrf.mxu0
      %v4676 = vadd.f32 0.0, %v4675
      %v4677 = vpop.f32.mrf.mxu0
      %v4678 = vadd.f32 0.0, %v4677
      %v4679 = vpop.f32.mrf.mxu0
      %v4680 = vadd.f32 0.0, %v4679
      %4681 = vmatprep.mubr.bf16.mxu0 0
      %4682 = vmatmul.mubr.bf16.gmra.mxu0 %v4631
      %v4683 = vpop.f32.mrf.mxu0
      %v4684 = vadd.f32 0.0, %v4683
      %v4685 = vpop.f32.mrf.mxu0
      %v4686 = vadd.f32 0.0, %v4685
      %v4687 = vpop.f32.mrf.mxu0
      %v4688 = vadd.f32 0.0, %v4687
      %v4689 = vpop.f32.mrf.mxu0
      %v4690 = vadd.f32 0.0, %v4689
      %4691 = vmatprep.mubr.bf16.mxu0 0
      %4692 = vmatmul.mubr.bf16.gmra.mxu0 %v4634
      %v4693 = vpop.f32.mrf.mxu0
      %v4694 = vadd.f32 0.0, %v4693
      %v4695 = vpop.f32.mrf.mxu0
      %v4696 = vadd.f32 0.0, %v4695
      %v4697 = vpop.f32.mrf.mxu0
      %v4698 = vadd.f32 0.0, %v4697
      %v4699 = vpop.f32.mrf.mxu0
      %v4700 = vadd.f32 0.0, %v4699
      %4701 = vmatprep.mubr.bf16.mxu0 0
      %4702 = vmatmul.mubr.bf16.gmra.mxu0 %v4637
      %v4703 = vpop.f32.mrf.mxu0
      %v4704 = vadd.f32 0.0, %v4703
      %v4705 = vpop.f32.mrf.mxu0
      %v4706 = vadd.f32 0.0, %v4705
      %v4707 = vpop.f32.mrf.mxu0
      %v4708 = vadd.f32 0.0, %v4707
      %v4709 = vpop.f32.mrf.mxu0
      %v4710 = vadd.f32 0.0, %v4709
      %4711 = vdwg.mxu0
      %v4712 = vadd.f32 %v4532, %v4674
      %v4713 = vadd.f32 %v4533, %v4676
      %v4714 = vadd.f32 %v4534, %v4678
      %v4715 = vadd.f32 %v4535, %v4680
      %v4716 = vadd.f32 %v4536, %v4684
      %v4717 = vadd.f32 %v4537, %v4686
      %v4718 = vadd.f32 %v4538, %v4688
      %v4719 = vadd.f32 %v4539, %v4690
      %v4720 = vadd.f32 %v4540, %v4694
      %v4721 = vadd.f32 %v4541, %v4696
      %v4722 = vadd.f32 %v4542, %v4698
      %v4723 = vadd.f32 %v4543, %v4700
      %v4724 = vadd.f32 %v4544, %v4704
      %v4725 = vadd.f32 %v4545, %v4706
      %v4726 = vadd.f32 %v4546, %v4708
      %v4727 = vadd.f32 %v4547, %v4710
      %s4728 = sadd.s32 %s225, 176
      %s4729 = sshra.s32 %s4728, 3
      %s4730 = sand.u32 %s4728, 7
      %s4731 = smul.addr %s4729, 4
      %s4732 = scalar_lea.vmem %s212, %s4731
      %v4733 = vld [vmem:[%s4732] sm:$0xf]
      %v4734 = vld [vmem:[%s4732 + $0x4] sm:$0xf]
      %v4735 = vld [vmem:[%s4732 + $0x8] sm:$0xf]
      %v4736 = vld [vmem:[%s4732 + $0xc] sm:$0xf]
      %v4737 = vld [vmem:[%s4732 + $0x10] sm:$0xf]
      %v4738 = vld [vmem:[%s4732 + $0x14] sm:$0xf]
      %v4739 = vld [vmem:[%s4732 + $0x18] sm:$0xf]
      %v4740 = vld [vmem:[%s4732 + $0x1c] sm:$0xf]
      %v4741 = vld [vmem:[%s1298] sm:$0xff]
      %v4742 = vld [vmem:[%s1298 + $0x8] sm:$0xff]
      %v4743 = vld [vmem:[%s1298 + $0x10] sm:$0xff]
      %v4744 = vld [vmem:[%s1298 + $0x18] sm:$0xff]
      %v4745 = vld [vmem:[%s1298 + $0x20] sm:$0xff]
      %v4746 = vld [vmem:[%s1298 + $0x28] sm:$0xff]
      %v4747 = vld [vmem:[%s1298 + $0x30] sm:$0xff]
      %v4748 = vld [vmem:[%s1298 + $0x38] sm:$0xff]
      %v4757 = vunpack.c.l.b16 %v4733
      %v4758 = vunpack.c.l.b16 %v4734
      %v4759 = vunpack.c.l.b16 %v4735
      %v4760 = vunpack.c.l.b16 %v4736
      %v4761 = vunpack.c.l.b16 %v4737
      %v4762 = vunpack.c.l.b16 %v4738
      %v4763 = vunpack.c.l.b16 %v4739
      %v4764 = vunpack.c.l.b16 %v4740
      %v4765 = vpack.c.b16 %v4758, %v4757
      %v4766 = vpack.c.b16 %v4760, %v4759
      %v4767 = vpack.c.b16 %v4762, %v4761
      %v4768 = vpack.c.b16 %v4764, %v4763
      %v4777 = vunpack.c.l.b16 %v4741
      %v4778 = vunpack.c.h.b16 %v4741
      %v4779 = vunpack.c.l.b16 %v4742
      %v4780 = vunpack.c.h.b16 %v4742
      %v4781 = vunpack.c.l.b16 %v4743
      %v4782 = vunpack.c.h.b16 %v4743
      %v4783 = vunpack.c.l.b16 %v4744
      %v4784 = vunpack.c.h.b16 %v4744
      %v4785 = vunpack.c.l.b16 %v4745
      %v4786 = vunpack.c.h.b16 %v4745
      %v4787 = vunpack.c.l.b16 %v4746
      %v4788 = vunpack.c.h.b16 %v4746
      %v4789 = vunpack.c.l.b16 %v4747
      %v4790 = vunpack.c.h.b16 %v4747
      %v4791 = vunpack.c.l.b16 %v4748
      %v4792 = vunpack.c.h.b16 %v4748
      %v4793 = vpack.c.b16 %v4779, %v4777
      %v4794 = vpack.c.b16 %v4780, %v4778
      %v4795 = vpack.c.b16 %v4783, %v4781
      %v4796 = vpack.c.b16 %v4784, %v4782
      %v4797 = vpack.c.b16 %v4787, %v4785
      %v4798 = vpack.c.b16 %v4788, %v4786
      %v4799 = vpack.c.b16 %v4791, %v4789
      %v4800 = vpack.c.b16 %v4792, %v4790
      %v4810 = vsel %vm328, %v4765, 0
      %v4813 = vsel %vm328, %v4766, 0
      %v4816 = vsel %vm328, %v4767, 0
      %v4819 = vsel %vm328, %v4768, 0
      %4821 = vmatprep.subr.bf16.mxu0 0
      %4822 = vmatpush1.bf16.msra.mxu0 0
      %4823 = vmatprep.subr.bf16.mxu0 0
      %4824 = vmatpush1.bf16.msra.mxu0 0
      %4825 = vmatprep.subr.bf16.mxu0 0
      %4826 = vmatpush1.bf16.msra.mxu0 0
      %4827 = vmatprep.subr.bf16.mxu0 0
      %4828 = vmatpush1.bf16.msra.mxu0 0
      %4829 = vmatprep.subr.bf16.mxu0 %v4800
      %4830 = vmatpush1.bf16.msra.mxu0 %v4799
      %4831 = vmatprep.subr.bf16.mxu0 %v4798
      %4832 = vmatpush1.bf16.msra.mxu0 %v4797
      %4833 = vmatprep.subr.bf16.mxu0 %v4796
      %4834 = vmatpush1.bf16.msra.mxu0 %v4795
      %4835 = vmatprep.subr.bf16.mxu0 %v4794
      %4836 = vmatpush1.bf16.msra.mxu0 %v4793
      %4837 = vmatprep.subr.bf16.mxu0 0
      %4838 = vmatpush2.bf16.msra.mxu0 0
      %4839 = vmatprep.subr.bf16.mxu0 0
      %4840 = vmatpush2.bf16.msra.mxu0 0
      %4841 = vmatprep.subr.bf16.mxu0 0
      %4842 = vmatpush2.bf16.msra.mxu0 0
      %4843 = vmatprep.subr.bf16.mxu0 0
      %4844 = vmatpush2.bf16.msra.mxu0 0
      %4845 = vmatprep.subr.bf16.mxu0 0
      %4846 = vmatpush2.bf16.msra.mxu0 0
      %4847 = vmatprep.subr.bf16.mxu0 0
      %4848 = vmatpush2.bf16.msra.mxu0 0
      %4849 = vmatprep.subr.bf16.mxu0 0
      %4850 = vmatpush2.bf16.msra.mxu0 0
      %4851 = vmatprep.subr.bf16.mxu0 0
      %4852 = vmatpush2.bf16.msra.mxu0 0
      %4853 = vmatprep.mubr.bf16.mxu0 0
      %4854 = vmatmul.mubr.bf16.gmra.mxu0 %v4810
      %v4855 = vpop.f32.mrf.mxu0
      %v4856 = vadd.f32 0.0, %v4855
      %v4857 = vpop.f32.mrf.mxu0
      %v4858 = vadd.f32 0.0, %v4857
      %v4859 = vpop.f32.mrf.mxu0
      %v4860 = vadd.f32 0.0, %v4859
      %v4861 = vpop.f32.mrf.mxu0
      %v4862 = vadd.f32 0.0, %v4861
      %4863 = vmatprep.mubr.bf16.mxu0 0
      %4864 = vmatmul.mubr.bf16.gmra.mxu0 %v4813
      %v4865 = vpop.f32.mrf.mxu0
      %v4866 = vadd.f32 0.0, %v4865
      %v4867 = vpop.f32.mrf.mxu0
      %v4868 = vadd.f32 0.0, %v4867
      %v4869 = vpop.f32.mrf.mxu0
      %v4870 = vadd.f32 0.0, %v4869
      %v4871 = vpop.f32.mrf.mxu0
      %v4872 = vadd.f32 0.0, %v4871
      %4873 = vmatprep.mubr.bf16.mxu0 0
      %4874 = vmatmul.mubr.bf16.gmra.mxu0 %v4816
      %v4875 = vpop.f32.mrf.mxu0
      %v4876 = vadd.f32 0.0, %v4875
      %v4877 = vpop.f32.mrf.mxu0
      %v4878 = vadd.f32 0.0, %v4877
      %v4879 = vpop.f32.mrf.mxu0
      %v4880 = vadd.f32 0.0, %v4879
      %v4881 = vpop.f32.mrf.mxu0
      %v4882 = vadd.f32 0.0, %v4881
      %4883 = vmatprep.mubr.bf16.mxu0 0
      %4884 = vmatmul.mubr.bf16.gmra.mxu0 %v4819
      %v4885 = vpop.f32.mrf.mxu0
      %v4886 = vadd.f32 0.0, %v4885
      %v4887 = vpop.f32.mrf.mxu0
      %v4888 = vadd.f32 0.0, %v4887
      %v4889 = vpop.f32.mrf.mxu0
      %v4890 = vadd.f32 0.0, %v4889
      %v4891 = vpop.f32.mrf.mxu0
      %v4892 = vadd.f32 0.0, %v4891
      %4893 = vdwg.mxu0
      %v4894 = vadd.f32 %v4712, %v4856
      %v4895 = vadd.f32 %v4713, %v4858
      %v4896 = vadd.f32 %v4714, %v4860
      %v4897 = vadd.f32 %v4715, %v4862
      %v4898 = vadd.f32 %v4716, %v4866
      %v4899 = vadd.f32 %v4717, %v4868
      %v4900 = vadd.f32 %v4718, %v4870
      %v4901 = vadd.f32 %v4719, %v4872
      %v4902 = vadd.f32 %v4720, %v4876
      %v4903 = vadd.f32 %v4721, %v4878
      %v4904 = vadd.f32 %v4722, %v4880
      %v4905 = vadd.f32 %v4723, %v4882
      %v4906 = vadd.f32 %v4724, %v4886
      %v4907 = vadd.f32 %v4725, %v4888
      %v4908 = vadd.f32 %v4726, %v4890
      %v4909 = vadd.f32 %v4727, %v4892
      %s4910 = sadd.s32 %s4729, 54
      %s4911 = smul.addr %s4910, 4
      %s4912 = scalar_lea.vmem %s212, %s4911
      %v4913 = vld [vmem:[%s4912] sm:$0xf]
      %v4914 = vld [vmem:[%s4912 + $0x4] sm:$0xf]
      %v4915 = vld [vmem:[%s4912 + $0x8] sm:$0xf]
      %v4916 = vld [vmem:[%s4912 + $0xc] sm:$0xf]
      %v4917 = vld [vmem:[%s4912 + $0x10] sm:$0xf]
      %v4918 = vld [vmem:[%s4912 + $0x14] sm:$0xf]
      %v4919 = vld [vmem:[%s4912 + $0x18] sm:$0xf]
      %v4920 = vld [vmem:[%s4912 + $0x1c] sm:$0xf]
      %v4921 = vld [vmem:[%s1479] sm:$0xff]
      %v4922 = vld [vmem:[%s1479 + $0x8] sm:$0xff]
      %v4923 = vld [vmem:[%s1479 + $0x10] sm:$0xff]
      %v4924 = vld [vmem:[%s1479 + $0x18] sm:$0xff]
      %v4925 = vld [vmem:[%s1479 + $0x20] sm:$0xff]
      %v4926 = vld [vmem:[%s1479 + $0x28] sm:$0xff]
      %v4927 = vld [vmem:[%s1479 + $0x30] sm:$0xff]
      %v4928 = vld [vmem:[%s1479 + $0x38] sm:$0xff]
      %v4937 = vunpack.c.l.b16 %v4913
      %v4938 = vunpack.c.l.b16 %v4914
      %v4939 = vunpack.c.l.b16 %v4915
      %v4940 = vunpack.c.l.b16 %v4916
      %v4941 = vunpack.c.l.b16 %v4917
      %v4942 = vunpack.c.l.b16 %v4918
      %v4943 = vunpack.c.l.b16 %v4919
      %v4944 = vunpack.c.l.b16 %v4920
      %v4945 = vpack.c.b16 %v4938, %v4937
      %v4946 = vpack.c.b16 %v4940, %v4939
      %v4947 = vpack.c.b16 %v4942, %v4941
      %v4948 = vpack.c.b16 %v4944, %v4943
      %v4957 = vunpack.c.l.b16 %v4921
      %v4958 = vunpack.c.h.b16 %v4921
      %v4959 = vunpack.c.l.b16 %v4922
      %v4960 = vunpack.c.h.b16 %v4922
      %v4961 = vunpack.c.l.b16 %v4923
      %v4962 = vunpack.c.h.b16 %v4923
      %v4963 = vunpack.c.l.b16 %v4924
      %v4964 = vunpack.c.h.b16 %v4924
      %v4965 = vunpack.c.l.b16 %v4925
      %v4966 = vunpack.c.h.b16 %v4925
      %v4967 = vunpack.c.l.b16 %v4926
      %v4968 = vunpack.c.h.b16 %v4926
      %v4969 = vunpack.c.l.b16 %v4927
      %v4970 = vunpack.c.h.b16 %v4927
      %v4971 = vunpack.c.l.b16 %v4928
      %v4972 = vunpack.c.h.b16 %v4928
      %v4973 = vpack.c.b16 %v4959, %v4957
      %v4974 = vpack.c.b16 %v4960, %v4958
      %v4975 = vpack.c.b16 %v4963, %v4961
      %v4976 = vpack.c.b16 %v4964, %v4962
      %v4977 = vpack.c.b16 %v4967, %v4965
      %v4978 = vpack.c.b16 %v4968, %v4966
      %v4979 = vpack.c.b16 %v4971, %v4969
      %v4980 = vpack.c.b16 %v4972, %v4970
      %v4990 = vsel %vm328, %v4945, 0
      %v4993 = vsel %vm328, %v4946, 0
      %v4996 = vsel %vm328, %v4947, 0
      %v4999 = vsel %vm328, %v4948, 0
      %5001 = vmatprep.subr.bf16.mxu0 0
      %5002 = vmatpush1.bf16.msra.mxu0 0
      %5003 = vmatprep.subr.bf16.mxu0 0
      %5004 = vmatpush1.bf16.msra.mxu0 0
      %5005 = vmatprep.subr.bf16.mxu0 0
      %5006 = vmatpush1.bf16.msra.mxu0 0
      %5007 = vmatprep.subr.bf16.mxu0 0
      %5008 = vmatpush1.bf16.msra.mxu0 0
      %5009 = vmatprep.subr.bf16.mxu0 %v4980
      %5010 = vmatpush1.bf16.msra.mxu0 %v4979
      %5011 = vmatprep.subr.bf16.mxu0 %v4978
      %5012 = vmatpush1.bf16.msra.mxu0 %v4977
      %5013 = vmatprep.subr.bf16.mxu0 %v4976
      %5014 = vmatpush1.bf16.msra.mxu0 %v4975
      %5015 = vmatprep.subr.bf16.mxu0 %v4974
      %5016 = vmatpush1.bf16.msra.mxu0 %v4973
      %5017 = vmatprep.subr.bf16.mxu0 0
      %5018 = vmatpush2.bf16.msra.mxu0 0
      %5019 = vmatprep.subr.bf16.mxu0 0
      %5020 = vmatpush2.bf16.msra.mxu0 0
      %5021 = vmatprep.subr.bf16.mxu0 0
      %5022 = vmatpush2.bf16.msra.mxu0 0
      %5023 = vmatprep.subr.bf16.mxu0 0
      %5024 = vmatpush2.bf16.msra.mxu0 0
      %5025 = vmatprep.subr.bf16.mxu0 0
      %5026 = vmatpush2.bf16.msra.mxu0 0
      %5027 = vmatprep.subr.bf16.mxu0 0
      %5028 = vmatpush2.bf16.msra.mxu0 0
      %5029 = vmatprep.subr.bf16.mxu0 0
      %5030 = vmatpush2.bf16.msra.mxu0 0
      %5031 = vmatprep.subr.bf16.mxu0 0
      %5032 = vmatpush2.bf16.msra.mxu0 0
      %5033 = vmatprep.mubr.bf16.mxu0 0
      %5034 = vmatmul.mubr.bf16.gmra.mxu0 %v4990
      %v5035 = vpop.f32.mrf.mxu0
      %v5036 = vadd.f32 0.0, %v5035
      %v5037 = vpop.f32.mrf.mxu0
      %v5038 = vadd.f32 0.0, %v5037
      %v5039 = vpop.f32.mrf.mxu0
      %v5040 = vadd.f32 0.0, %v5039
      %v5041 = vpop.f32.mrf.mxu0
      %v5042 = vadd.f32 0.0, %v5041
      %5043 = vmatprep.mubr.bf16.mxu0 0
      %5044 = vmatmul.mubr.bf16.gmra.mxu0 %v4993
      %v5045 = vpop.f32.mrf.mxu0
      %v5046 = vadd.f32 0.0, %v5045
      %v5047 = vpop.f32.mrf.mxu0
      %v5048 = vadd.f32 0.0, %v5047
      %v5049 = vpop.f32.mrf.mxu0
      %v5050 = vadd.f32 0.0, %v5049
      %v5051 = vpop.f32.mrf.mxu0
      %v5052 = vadd.f32 0.0, %v5051
      %5053 = vmatprep.mubr.bf16.mxu0 0
      %5054 = vmatmul.mubr.bf16.gmra.mxu0 %v4996
      %v5055 = vpop.f32.mrf.mxu0
      %v5056 = vadd.f32 0.0, %v5055
      %v5057 = vpop.f32.mrf.mxu0
      %v5058 = vadd.f32 0.0, %v5057
      %v5059 = vpop.f32.mrf.mxu0
      %v5060 = vadd.f32 0.0, %v5059
      %v5061 = vpop.f32.mrf.mxu0
      %v5062 = vadd.f32 0.0, %v5061
      %5063 = vmatprep.mubr.bf16.mxu0 0
      %5064 = vmatmul.mubr.bf16.gmra.mxu0 %v4999
      %v5065 = vpop.f32.mrf.mxu0
      %v5066 = vadd.f32 0.0, %v5065
      %v5067 = vpop.f32.mrf.mxu0
      %v5068 = vadd.f32 0.0, %v5067
      %v5069 = vpop.f32.mrf.mxu0
      %v5070 = vadd.f32 0.0, %v5069
      %v5071 = vpop.f32.mrf.mxu0
      %v5072 = vadd.f32 0.0, %v5071
      %5073 = vdwg.mxu0
      %v5074 = vadd.f32 %v4894, %v5036
      %v5075 = vadd.f32 %v4895, %v5038
      %v5076 = vadd.f32 %v4896, %v5040
      %v5077 = vadd.f32 %v4897, %v5042
      %v5078 = vadd.f32 %v4898, %v5046
      %v5079 = vadd.f32 %v4899, %v5048
      %v5080 = vadd.f32 %v4900, %v5050
      %v5081 = vadd.f32 %v4901, %v5052
      %v5082 = vadd.f32 %v4902, %v5056
      %v5083 = vadd.f32 %v4903, %v5058
      %v5084 = vadd.f32 %v4904, %v5060
      %v5085 = vadd.f32 %v4905, %v5062
      %v5086 = vadd.f32 %v4906, %v5066
      %v5087 = vadd.f32 %v4907, %v5068
      %v5088 = vadd.f32 %v4908, %v5070
      %v5089 = vadd.f32 %v4909, %v5072
      %s5090 = sadd.s32 %s4729, 108
      %s5091 = smul.addr %s5090, 4
      %s5092 = scalar_lea.vmem %s212, %s5091
      %v5093 = vld [vmem:[%s5092] sm:$0xf]
      %v5094 = vld [vmem:[%s5092 + $0x4] sm:$0xf]
      %v5095 = vld [vmem:[%s5092 + $0x8] sm:$0xf]
      %v5096 = vld [vmem:[%s5092 + $0xc] sm:$0xf]
      %v5097 = vld [vmem:[%s5092 + $0x10] sm:$0xf]
      %v5098 = vld [vmem:[%s5092 + $0x14] sm:$0xf]
      %v5099 = vld [vmem:[%s5092 + $0x18] sm:$0xf]
      %v5100 = vld [vmem:[%s5092 + $0x1c] sm:$0xf]
      %v5101 = vld [vmem:[%s1660] sm:$0xff]
      %v5102 = vld [vmem:[%s1660 + $0x8] sm:$0xff]
      %v5103 = vld [vmem:[%s1660 + $0x10] sm:$0xff]
      %v5104 = vld [vmem:[%s1660 + $0x18] sm:$0xff]
      %v5105 = vld [vmem:[%s1660 + $0x20] sm:$0xff]
      %v5106 = vld [vmem:[%s1660 + $0x28] sm:$0xff]
      %v5107 = vld [vmem:[%s1660 + $0x30] sm:$0xff]
      %v5108 = vld [vmem:[%s1660 + $0x38] sm:$0xff]
      %v5117 = vunpack.c.l.b16 %v5093
      %v5118 = vunpack.c.l.b16 %v5094
      %v5119 = vunpack.c.l.b16 %v5095
      %v5120 = vunpack.c.l.b16 %v5096
      %v5121 = vunpack.c.l.b16 %v5097
      %v5122 = vunpack.c.l.b16 %v5098
      %v5123 = vunpack.c.l.b16 %v5099
      %v5124 = vunpack.c.l.b16 %v5100
      %v5125 = vpack.c.b16 %v5118, %v5117
      %v5126 = vpack.c.b16 %v5120, %v5119
      %v5127 = vpack.c.b16 %v5122, %v5121
      %v5128 = vpack.c.b16 %v5124, %v5123
      %v5137 = vunpack.c.l.b16 %v5101
      %v5138 = vunpack.c.h.b16 %v5101
      %v5139 = vunpack.c.l.b16 %v5102
      %v5140 = vunpack.c.h.b16 %v5102
      %v5141 = vunpack.c.l.b16 %v5103
      %v5142 = vunpack.c.h.b16 %v5103
      %v5143 = vunpack.c.l.b16 %v5104
      %v5144 = vunpack.c.h.b16 %v5104
      %v5145 = vunpack.c.l.b16 %v5105
      %v5146 = vunpack.c.h.b16 %v5105
      %v5147 = vunpack.c.l.b16 %v5106
      %v5148 = vunpack.c.h.b16 %v5106
      %v5149 = vunpack.c.l.b16 %v5107
      %v5150 = vunpack.c.h.b16 %v5107
      %v5151 = vunpack.c.l.b16 %v5108
      %v5152 = vunpack.c.h.b16 %v5108
      %v5153 = vpack.c.b16 %v5139, %v5137
      %v5154 = vpack.c.b16 %v5140, %v5138
      %v5155 = vpack.c.b16 %v5143, %v5141
      %v5156 = vpack.c.b16 %v5144, %v5142
      %v5157 = vpack.c.b16 %v5147, %v5145
      %v5158 = vpack.c.b16 %v5148, %v5146
      %v5159 = vpack.c.b16 %v5151, %v5149
      %v5160 = vpack.c.b16 %v5152, %v5150
      %v5170 = vsel %vm328, %v5125, 0
      %v5173 = vsel %vm328, %v5126, 0
      %v5176 = vsel %vm328, %v5127, 0
      %v5179 = vsel %vm328, %v5128, 0
      %5181 = vmatprep.subr.bf16.mxu0 0
      %5182 = vmatpush1.bf16.msra.mxu0 0
      %5183 = vmatprep.subr.bf16.mxu0 0
      %5184 = vmatpush1.bf16.msra.mxu0 0
      %5185 = vmatprep.subr.bf16.mxu0 0
      %5186 = vmatpush1.bf16.msra.mxu0 0
      %5187 = vmatprep.subr.bf16.mxu0 0
      %5188 = vmatpush1.bf16.msra.mxu0 0
      %5189 = vmatprep.subr.bf16.mxu0 %v5160
      %5190 = vmatpush1.bf16.msra.mxu0 %v5159
      %5191 = vmatprep.subr.bf16.mxu0 %v5158
      %5192 = vmatpush1.bf16.msra.mxu0 %v5157
      %5193 = vmatprep.subr.bf16.mxu0 %v5156
      %5194 = vmatpush1.bf16.msra.mxu0 %v5155
      %5195 = vmatprep.subr.bf16.mxu0 %v5154
      %5196 = vmatpush1.bf16.msra.mxu0 %v5153
      %5197 = vmatprep.subr.bf16.mxu0 0
      %5198 = vmatpush2.bf16.msra.mxu0 0
      %5199 = vmatprep.subr.bf16.mxu0 0
      %5200 = vmatpush2.bf16.msra.mxu0 0
      %5201 = vmatprep.subr.bf16.mxu0 0
      %5202 = vmatpush2.bf16.msra.mxu0 0
      %5203 = vmatprep.subr.bf16.mxu0 0
      %5204 = vmatpush2.bf16.msra.mxu0 0
      %5205 = vmatprep.subr.bf16.mxu0 0
      %5206 = vmatpush2.bf16.msra.mxu0 0
      %5207 = vmatprep.subr.bf16.mxu0 0
      %5208 = vmatpush2.bf16.msra.mxu0 0
      %5209 = vmatprep.subr.bf16.mxu0 0
      %5210 = vmatpush2.bf16.msra.mxu0 0
      %5211 = vmatprep.subr.bf16.mxu0 0
      %5212 = vmatpush2.bf16.msra.mxu0 0
      %5213 = vmatprep.mubr.bf16.mxu0 0
      %5214 = vmatmul.mubr.bf16.gmra.mxu0 %v5170
      %v5215 = vpop.f32.mrf.mxu0
      %v5216 = vadd.f32 0.0, %v5215
      %v5217 = vpop.f32.mrf.mxu0
      %v5218 = vadd.f32 0.0, %v5217
      %v5219 = vpop.f32.mrf.mxu0
      %v5220 = vadd.f32 0.0, %v5219
      %v5221 = vpop.f32.mrf.mxu0
      %v5222 = vadd.f32 0.0, %v5221
      %5223 = vmatprep.mubr.bf16.mxu0 0
      %5224 = vmatmul.mubr.bf16.gmra.mxu0 %v5173
      %v5225 = vpop.f32.mrf.mxu0
      %v5226 = vadd.f32 0.0, %v5225
      %v5227 = vpop.f32.mrf.mxu0
      %v5228 = vadd.f32 0.0, %v5227
      %v5229 = vpop.f32.mrf.mxu0
      %v5230 = vadd.f32 0.0, %v5229
      %v5231 = vpop.f32.mrf.mxu0
      %v5232 = vadd.f32 0.0, %v5231
      %5233 = vmatprep.mubr.bf16.mxu0 0
      %5234 = vmatmul.mubr.bf16.gmra.mxu0 %v5176
      %v5235 = vpop.f32.mrf.mxu0
      %v5236 = vadd.f32 0.0, %v5235
      %v5237 = vpop.f32.mrf.mxu0
      %v5238 = vadd.f32 0.0, %v5237
      %v5239 = vpop.f32.mrf.mxu0
      %v5240 = vadd.f32 0.0, %v5239
      %v5241 = vpop.f32.mrf.mxu0
      %v5242 = vadd.f32 0.0, %v5241
      %5243 = vmatprep.mubr.bf16.mxu0 0
      %5244 = vmatmul.mubr.bf16.gmra.mxu0 %v5179
      %v5245 = vpop.f32.mrf.mxu0
      %v5246 = vadd.f32 0.0, %v5245
      %v5247 = vpop.f32.mrf.mxu0
      %v5248 = vadd.f32 0.0, %v5247
      %v5249 = vpop.f32.mrf.mxu0
      %v5250 = vadd.f32 0.0, %v5249
      %v5251 = vpop.f32.mrf.mxu0
      %v5252 = vadd.f32 0.0, %v5251
      %5253 = vdwg.mxu0
      %v5254 = vadd.f32 %v5074, %v5216
      %v5255 = vadd.f32 %v5075, %v5218
      %v5256 = vadd.f32 %v5076, %v5220
      %v5257 = vadd.f32 %v5077, %v5222
      %v5258 = vadd.f32 %v5078, %v5226
      %v5259 = vadd.f32 %v5079, %v5228
      %v5260 = vadd.f32 %v5080, %v5230
      %v5261 = vadd.f32 %v5081, %v5232
      %v5262 = vadd.f32 %v5082, %v5236
      %v5263 = vadd.f32 %v5083, %v5238
      %v5264 = vadd.f32 %v5084, %v5240
      %v5265 = vadd.f32 %v5085, %v5242
      %v5266 = vadd.f32 %v5086, %v5246
      %v5267 = vadd.f32 %v5087, %v5248
      %v5268 = vadd.f32 %v5088, %v5250
      %v5269 = vadd.f32 %v5089, %v5252
      %v5270 = vadd.f32 %v5254, %v1834
      %v5271 = vadd.f32 %v5255, %v1838
      %v5272 = vadd.f32 %v5256, %v1834
      %v5273 = vadd.f32 %v5257, %v1838
      %v5274 = vadd.f32 %v5258, %v1834
      %v5275 = vadd.f32 %v5259, %v1838
      %v5276 = vadd.f32 %v5260, %v1834
      %v5277 = vadd.f32 %v5261, %v1838
      %v5278 = vadd.f32 %v5262, %v1834
      %v5279 = vadd.f32 %v5263, %v1838
      %v5280 = vadd.f32 %v5264, %v1834
      %v5281 = vadd.f32 %v5265, %v1838
      %v5282 = vadd.f32 %v5266, %v1834
      %v5283 = vadd.f32 %v5267, %v1838
      %v5284 = vadd.f32 %v5268, %v1834
      %v5285 = vadd.f32 %v5269, %v1838
      %vm5286 = vcmp.gt.f32.partialorder %v5270, 0.0
      %vm5287 = vcmp.gt.f32.partialorder %v5271, 0.0
      %vm5288 = vcmp.gt.f32.partialorder %v5272, 0.0
      %vm5289 = vcmp.gt.f32.partialorder %v5273, 0.0
      %vm5290 = vcmp.gt.f32.partialorder %v5274, 0.0
      %vm5291 = vcmp.gt.f32.partialorder %v5275, 0.0
      %vm5292 = vcmp.gt.f32.partialorder %v5276, 0.0
      %vm5293 = vcmp.gt.f32.partialorder %v5277, 0.0
      %vm5294 = vcmp.gt.f32.partialorder %v5278, 0.0
      %vm5295 = vcmp.gt.f32.partialorder %v5279, 0.0
      %vm5296 = vcmp.gt.f32.partialorder %v5280, 0.0
      %vm5297 = vcmp.gt.f32.partialorder %v5281, 0.0
      %vm5298 = vcmp.gt.f32.partialorder %v5282, 0.0
      %vm5299 = vcmp.gt.f32.partialorder %v5283, 0.0
      %vm5300 = vcmp.gt.f32.partialorder %v5284, 0.0
      %vm5301 = vcmp.gt.f32.partialorder %v5285, 0.0
      %v5302 = vmul.f32 %v1873, %v5270
      %v5303 = vmul.f32 %v1873, %v5271
      %v5304 = vmul.f32 %v1873, %v5272
      %v5305 = vmul.f32 %v1873, %v5273
      %v5306 = vmul.f32 %v1873, %v5274
      %v5307 = vmul.f32 %v1873, %v5275
      %v5308 = vmul.f32 %v1873, %v5276
      %v5309 = vmul.f32 %v1873, %v5277
      %v5310 = vmul.f32 %v1873, %v5278
      %v5311 = vmul.f32 %v1873, %v5279
      %v5312 = vmul.f32 %v1873, %v5280
      %v5313 = vmul.f32 %v1873, %v5281
      %v5314 = vmul.f32 %v1873, %v5282
      %v5315 = vmul.f32 %v1873, %v5283
      %v5316 = vmul.f32 %v1873, %v5284
      %v5317 = vmul.f32 %v1873, %v5285
      %v5318 = vsel %vm5286, %v5270, %v5302
      %v5319 = vsel %vm5287, %v5271, %v5303
      %v5320 = vsel %vm5288, %v5272, %v5304
      %v5321 = vsel %vm5289, %v5273, %v5305
      %v5322 = vsel %vm5290, %v5274, %v5306
      %v5323 = vsel %vm5291, %v5275, %v5307
      %v5324 = vsel %vm5292, %v5276, %v5308
      %v5325 = vsel %vm5293, %v5277, %v5309
      %v5326 = vsel %vm5294, %v5278, %v5310
      %v5327 = vsel %vm5295, %v5279, %v5311
      %v5328 = vsel %vm5296, %v5280, %v5312
      %v5329 = vsel %vm5297, %v5281, %v5313
      %v5330 = vsel %vm5298, %v5282, %v5314
      %v5331 = vsel %vm5299, %v5283, %v5315
      %v5332 = vsel %vm5300, %v5284, %v5316
      %v5333 = vsel %vm5301, %v5285, %v5317
      %v5334 = vpack.c.bf16 %v5320, %v5318
      %v5335 = vpack.c.bf16 %v5321, %v5319
      %v5336 = vpack.c.bf16 %v5324, %v5322
      %v5337 = vpack.c.bf16 %v5325, %v5323
      %v5338 = vpack.c.bf16 %v5328, %v5326
      %v5339 = vpack.c.bf16 %v5329, %v5327
      %v5340 = vpack.c.bf16 %v5332, %v5330
      %v5341 = vpack.c.bf16 %v5333, %v5331
      %v5350 = vunpack.c.l.b16 %v5334
      %v5351 = vunpack.c.l.b16 %v5335
      %v5352 = vunpack.c.h.b16 %v5334
      %v5353 = vunpack.c.h.b16 %v5335
      %v5354 = vunpack.c.l.b16 %v5336
      %v5355 = vunpack.c.l.b16 %v5337
      %v5356 = vunpack.c.h.b16 %v5336
      %v5357 = vunpack.c.h.b16 %v5337
      %v5358 = vunpack.c.l.b16 %v5338
      %v5359 = vunpack.c.l.b16 %v5339
      %v5360 = vunpack.c.h.b16 %v5338
      %v5361 = vunpack.c.h.b16 %v5339
      %v5362 = vunpack.c.l.b16 %v5340
      %v5363 = vunpack.c.l.b16 %v5341
      %v5364 = vunpack.c.h.b16 %v5340
      %v5365 = vunpack.c.h.b16 %v5341
      %v5366 = vpack.c.b16 %v5351, %v5350
      %v5367 = vpack.c.b16 %v5353, %v5352
      %v5368 = vpack.c.b16 %v5355, %v5354
      %v5369 = vpack.c.b16 %v5357, %v5356
      %v5370 = vpack.c.b16 %v5359, %v5358
      %v5371 = vpack.c.b16 %v5361, %v5360
      %v5372 = vpack.c.b16 %v5363, %v5362
      %v5373 = vpack.c.b16 %v5365, %v5364
      %5382 = vst [vmem:[%s222 + $0x80] sm:$0xff] %v5366
      %5383 = vst [vmem:[%s222 + $0x88] sm:$0xff] %v5367
      %5384 = vst [vmem:[%s222 + $0x90] sm:$0xff] %v5368
      %5385 = vst [vmem:[%s222 + $0x98] sm:$0xff] %v5369
      %5386 = vst [vmem:[%s222 + $0xa0] sm:$0xff] %v5370
      %5387 = vst [vmem:[%s222 + $0xa8] sm:$0xff] %v5371
      %5388 = vst [vmem:[%s222 + $0xb0] sm:$0xff] %v5372
      %5389 = vst [vmem:[%s222 + $0xb8] sm:$0xff] %v5373
      %s5390 = smul.u32 24, %s21
      %p5391 = scmp.lt.s32.totalorder %s20, 1
      %s5392 = scalar_select %p5391, %s20, 1
      %p5393 = scmp.lt.s32.totalorder %s5390, 47
      %s5394 = scalar_select %p5393, %s5390, 47
      %s5395 = smul.addr %s5394, 2
      %s5396 = smul.addr %s5392, 96
      %s5397 = sadd.s32 %s5395, %s5396
      %s5398 = smul.addr %s5397, 4
      %s5399 = scalar_lea.vmem %s4, %s5398
      // Predicated region
      $region37: #{upsample_forward.1} parent=35 // pred_check
        %p5400 = pneg %p137
      $region38: #{upsample_forward.1} parent=35 // pred_check_branch
        %5402 = sbr.rel (%p5400) target = $region40
      $region39: #{upsample_forward.1} parent=35 // pred_region
        %s5403 = smul.u32 24, %s21
      $region40: #{upsample_forward.1} parent=35 // pred_fallthru
        _
    $region36: #{upsample_forward.1} parent=5 // pred_fallthru
      _
    %p5404 = scmp.le.s32.totalorder 2, %s11
    // Predicated region
    $region41: #{upsample_forward.1} parent=5 // pred_check
      %p5405 = pneg %p5404
    $region42: #{upsample_forward.1} parent=5 // pred_check_branch
      %5407 = sbr.rel (%p5405) target = $region44
    $region43: #{upsample_forward.1} parent=5 // pred_region
      %s5408 = ssub.s32 %s11, 2
      // Predicated region
      $region45: #{upsample_forward.1} parent=43 // pred_check
        %p5409 = pneg %p143
      $region46: #{upsample_forward.1} parent=43 // pred_check_branch
        %5411 = sbr.rel (%p5409) target = $region48
      $region47: #{upsample_forward.1} parent=43 // pred_region
        %s5412 = smul.u32 24, %s23
        %p5413 = scmp.lt.s32.totalorder %s22, 1
        %s5414 = scalar_select %p5413, %s22, 1
        %p5415 = scmp.lt.s32.totalorder %s5412, 47
        %s5416 = scalar_select %p5415, %s5412, 47
        %s5417 = smul.addr %s5416, 2
        %s5418 = smul.addr %s5414, 96
        %s5419 = sadd.s32 %s5417, %s5418
        %s5420 = smul.addr %s5419, 4
        %s5421 = scalar_lea.vmem %s4, %s5420
      $region48: #{upsample_forward.1} parent=43 // pred_fallthru
        _
    $region44: #{upsample_forward.1} parent=5 // pred_fallthru
      _
  $region6: #{upsample_forward.1} parent=0 // loop_footer
    %s15 = sadd.s32 1, %s11
  $region7: #{upsample_forward.1} parent=0 // loop_footer_branch
    %10 = sbr.rel target = $region3
  $region8: #{upsample_forward.1} parent=0 // loop_exit
    _

</llo_original>
